<compile_context>
chip_gen: v5e
topology: v5e:2x2
jax: 0.10.0
libtpu: 0.0.40
codegen_flags: <defaults>
</compile_context>

<pallas_src>
import functools

import jax
import jax.numpy as jnp
from jax.experimental import pallas as pl
from jax.experimental.pallas import tpu as pltpu

LEAKY_SLOPE = 0.01  # PyTorch nn.LeakyReLU default negative_slope
_HAS_BUFFERED = hasattr(pl, "Buffered")


def _round_up(x, m):
    return ((x + m - 1) // m) * m


def _leaky_relu(x):
    return jnp.where(x > 0, x, LEAKY_SLOPE * x)


def actor_kernel(x_ref,
                 w1_ref, b1_ref,
                 w2_ref, b2_ref,
                 w3_ref, b3_ref,
                 w4_ref, b4_ref,
                 w5_ref, b5_ref,
                 o_ref):
    # x / weights are bf16; every matmul accumulates in f32 on the MXU.
    h = jnp.dot(x_ref[...], w1_ref[...], preferred_element_type=jnp.float32) + b1_ref[...]
    h = _leaky_relu(h)
    h = jnp.dot(h.astype(jnp.bfloat16), w2_ref[...],
                preferred_element_type=jnp.float32) + b2_ref[...]
    h = _leaky_relu(h)
    h = jnp.dot(h.astype(jnp.bfloat16), w3_ref[...],
                preferred_element_type=jnp.float32) + b3_ref[...]
    h = _leaky_relu(h)
    h = jnp.dot(h.astype(jnp.bfloat16), w4_ref[...],
                preferred_element_type=jnp.float32) + b4_ref[...]
    h = _leaky_relu(h)
    h = jnp.dot(h.astype(jnp.bfloat16), w5_ref[...],
                preferred_element_type=jnp.float32) + b5_ref[...]
    o_ref[...] = h.astype(o_ref.dtype)


def prepare_params(params):
    """One-time weight staging (call once, reuse across forwards).

    Pads output feature dims to lane multiples (128), keeps the layer-0 input dim
    unpadded (full-extent block is legal and cuts W1 DMA), casts weights to bf16
    and reshapes biases to (1, out) f32.
    """
    staged = []
    for li, (w, b) in enumerate(params):
        fin, fout = w.shape
        fin_p = fin if li == 0 else _round_up(fin, 128)
        fout_p = _round_up(fout, 128)
        w_p = jnp.zeros((fin_p, fout_p), jnp.bfloat16).at[:fin, :fout].set(
            w.astype(jnp.bfloat16))
        b_p = jnp.zeros((1, fout_p), jnp.float32).at[0, :fout].set(
            b.astype(jnp.float32))
        staged.append((w_p, b_p))
    return staged


def _choose_batch_tiling(B):
    """Pick (tile_rows, padded_batch).

    Large tiles amortize the per-grid-step overhead and fill the MXU; for large
    batches, halve the tile until the grid length is even so v7x's two
    TensorCores get balanced work (harmless on single-TC v5e/v6e).
    """
    TB_MAX = 1024   # largest live f32 intermediate at 1024 rows is ~4 MB -> fits VMEM
    TB_MIN = 256    # per-step-overhead amortization floor
    B8 = _round_up(B, 8)
    tb = min(TB_MAX, B8)
    n = pl.cdiv(B8, tb)
    while n % 2 == 1 and tb >= 2 * TB_MIN:
        tb = _round_up(pl.cdiv(tb, 2), 8)
        n = pl.cdiv(B8, tb)
    return tb, n * tb


@functools.partial(jax.jit, static_argnames=("action_dim", "single_buffer_weights"))
def actor_forward(state, staged, *, action_dim, single_buffer_weights=_HAS_BUFFERED):
    """state: (B, state_dim) f32; staged: output of prepare_params."""
    B, S = state.shape
    assert staged[0][0].shape[0] == S, "state_dim mismatch with staged params"
    A_pad = staged[-1][0].shape[1]

    tb, B_pad = _choose_batch_tiling(B)

    # Only batch-row padding remains per call (feature dims were staged once).
    x = state.astype(jnp.bfloat16)
    if B_pad != B:
        x = jnp.zeros((B_pad, S), jnp.bfloat16).at[:B].set(x)

    weight_mode = pl.Buffered(1) if single_buffer_weights else None

    flat_args = [x]
    in_specs = [pl.BlockSpec((tb, S), lambda i: (i, 0))]
    for w_p, b_p in staged:
        flat_args.extend((w_p, b_p))
        for a in (w_p, b_p):
            if weight_mode is not None:
                # Constant block index + single buffer: fetched once, one VMEM copy.
                spec = pl.BlockSpec(a.shape, lambda i: (0, 0), pipeline_mode=weight_mode)
            else:
                spec = pl.BlockSpec(a.shape, lambda i: (0, 0))
            in_specs.append(spec)

    flops = 2 * B_pad * sum(int(w.shape[0]) * int(w.shape[1]) for w, _ in staged)
    bytes_accessed = (x.size * x.dtype.itemsize
                      + sum(int(a.size) * a.dtype.itemsize for a in flat_args[1:])
                      + B_pad * A_pad * 4)

    out = pl.pallas_call(
        actor_kernel,
        out_shape=jax.ShapeDtypeStruct((B_pad, A_pad), jnp.float32),
        grid=(B_pad // tb,),
        in_specs=in_specs,
        out_specs=pl.BlockSpec((tb, A_pad), lambda i: (i, 0)),
        compiler_params=pltpu.CompilerParams(
            dimension_semantics=("parallel",),   # batch tiles shard across v7x's 2 TCs
            vmem_limit_bytes=32 << 20,           # fits v7x's 64 MiB physical VMEM
        ),
        cost_estimate=pl.CostEstimate(
            flops=flops, transcendentals=0, bytes_accessed=bytes_accessed),
    )(*flat_args)

    return out[:B, :action_dim]


def init_params(key, state_dim, action_dim):
    """Deterministic init mimicking nn.Linear's U(-1/sqrt(fan_in), 1/sqrt(fan_in))."""
    dims = [state_dim, 1024, 512, 256, 128, action_dim]
    params = []
    for i in range(len(dims) - 1):
        fan_in, fan_out = dims[i], dims[i + 1]
        key, kw, kb = jax.random.split(key, 3)
        bound = 1.0 / jnp.sqrt(jnp.float32(fan_in))
        # Stored as (in, out) == PyTorch weight.T
        w = jax.random.uniform(kw, (fan_in, fan_out), jnp.float32, -bound, bound)
        b = jax.random.uniform(kb, (fan_out,), jnp.float32, -bound, bound)
        params.append((w, b))
    return params


def reference_forward(state, params):
    """Pure-JAX reference with the same bf16-weight / f32-accumulate semantics."""
    h = state.astype(jnp.float32)
    for i, (w, b) in enumerate(params):
        h = jnp.dot(h.astype(jnp.bfloat16), w.astype(jnp.bfloat16),
                    preferred_element_type=jnp.float32) + b
        if i < len(params) - 1:
            h = jnp.where(h > 0, h, LEAKY_SLOPE * h)
    return h


if __name__ == "__main__":
    key = jax.random.PRNGKey(0)
    state_dim = 32
    action_dim = 8
    batch = 2

    k_in, k_p = jax.random.split(key)
    state = jax.random.normal(k_in, (batch, state_dim), jnp.float32)
    params = init_params(k_p, state_dim, action_dim)

    staged = prepare_params(params)          # one-time staging; reused across calls
    staged = jax.block_until_ready(staged)

    try:
        out = actor_forward(state, staged, action_dim=action_dim)
    except Exception:
        # Fallback if single-buffered (pl.Buffered(1)) weight specs are unsupported.
        out = actor_forward(state, staged, action_dim=action_dim,
                            single_buffer_weights=False)
    out = jax.block_until_ready(out)

    ref = reference_forward(state, params)
    assert out.shape == (batch, action_dim)
    assert jnp.allclose(out, ref, atol=1e-2, rtol=1e-2), "mismatch vs reference"

    print("KERNEL_OK")
</pallas_src>

<mosaic_0001>
module attributes {stable_mosaic.version = 11 : i64} {
  func.func @actor_kernel(%arg0: i32, %arg1: memref<8x32xbf16, #tpu.memory_space<vmem>>, %arg2: memref<32x1024xbf16, #tpu.memory_space<vmem>>, %arg3: memref<1x1024xf32, #tpu.memory_space<vmem>>, %arg4: memref<1024x512xbf16, #tpu.memory_space<vmem>>, %arg5: memref<1x512xf32, #tpu.memory_space<vmem>>, %arg6: memref<512x256xbf16, #tpu.memory_space<vmem>>, %arg7: memref<1x256xf32, #tpu.memory_space<vmem>>, %arg8: memref<256x128xbf16, #tpu.memory_space<vmem>>, %arg9: memref<1x128xf32, #tpu.memory_space<vmem>>, %arg10: memref<128x128xbf16, #tpu.memory_space<vmem>>, %arg11: memref<1x128xf32, #tpu.memory_space<vmem>>, %arg12: memref<8x128xf32, #tpu.memory_space<vmem>>) attributes {dimension_semantics = [#tpu.dimension_semantics<parallel>], iteration_bounds = array<i64: 1>, scalar_prefetch = 0 : i64, scratch_operands = 0 : i64, tpu.core_type = #tpu.core_type<tc>, window_params = [{transform_indices = @transform_0, window_bounds = array<i64: 8, 32>}, {pipeline_mode = #tpu.pipeline_mode<synchronous>, transform_indices = @transform_1, window_bounds = array<i64: 32, 1024>}, {pipeline_mode = #tpu.pipeline_mode<synchronous>, transform_indices = @transform_2, window_bounds = array<i64: 1, 1024>}, {pipeline_mode = #tpu.pipeline_mode<synchronous>, transform_indices = @transform_3, window_bounds = array<i64: 1024, 512>}, {pipeline_mode = #tpu.pipeline_mode<synchronous>, transform_indices = @transform_4, window_bounds = array<i64: 1, 512>}, {pipeline_mode = #tpu.pipeline_mode<synchronous>, transform_indices = @transform_5, window_bounds = array<i64: 512, 256>}, {pipeline_mode = #tpu.pipeline_mode<synchronous>, transform_indices = @transform_6, window_bounds = array<i64: 1, 256>}, {pipeline_mode = #tpu.pipeline_mode<synchronous>, transform_indices = @transform_7, window_bounds = array<i64: 256, 128>}, {pipeline_mode = #tpu.pipeline_mode<synchronous>, transform_indices = @transform_8, window_bounds = array<i64: 1, 128>}, {pipeline_mode = #tpu.pipeline_mode<synchronous>, transform_indices = @transform_9, window_bounds = array<i64: 128, 128>}, {pipeline_mode = #tpu.pipeline_mode<synchronous>, transform_indices = @transform_10, window_bounds = array<i64: 1, 128>}, {transform_indices = @transform_11, window_bounds = array<i64: 8, 128>}]} {
    %c0 = arith.constant 0 : index
    %c0_0 = arith.constant 0 : index
    %0 = vector.load %arg1[%c0, %c0_0] : memref<8x32xbf16, #tpu.memory_space<vmem>>, vector<8x32xbf16>
    %c0_1 = arith.constant 0 : index
    %c0_2 = arith.constant 0 : index
    %1 = vector.load %arg2[%c0_1, %c0_2] : memref<32x1024xbf16, #tpu.memory_space<vmem>>, vector<32x1024xbf16>
    %cst = arith.constant dense<0.000000e+00> : vector<8x1024xf32>
    %2 = tpu.matmul %0, %1, %cst {dimension_numbers = #tpu.dot_dimension_numbers<[1], [0], [0], [1], [0, 0, 1, 1], [], []>} : vector<8x32xbf16>, vector<32x1024xbf16>, vector<8x1024xf32> -> vector<8x1024xf32>
    %c0_3 = arith.constant 0 : index
    %c0_4 = arith.constant 0 : index
    %3 = vector.load %arg3[%c0_3, %c0_4] : memref<1x1024xf32, #tpu.memory_space<vmem>>, vector<1x1024xf32>
    %4 = vector.broadcast %3 : vector<1x1024xf32> to vector<8x1024xf32>
    %5 = arith.addf %2, %4 : vector<8x1024xf32>
    %cst_5 = arith.constant 0.000000e+00 : f32
    %6 = vector.broadcast %cst_5 : f32 to vector<8x1024xf32>
    %7 = arith.cmpf ogt, %5, %6 : vector<8x1024xf32>
    %cst_6 = arith.constant 0.00999999977 : f32
    %8 = vector.broadcast %cst_6 : f32 to vector<8x1024xf32>
    %9 = arith.mulf %8, %5 : vector<8x1024xf32>
    %10 = arith.select %7, %5, %9 : vector<8x1024xi1>, vector<8x1024xf32>
    %11 = arith.truncf %10 : vector<8x1024xf32> to vector<8x1024xbf16>
    %c0_7 = arith.constant 0 : index
    %c0_8 = arith.constant 0 : index
    %12 = vector.load %arg4[%c0_7, %c0_8] : memref<1024x512xbf16, #tpu.memory_space<vmem>>, vector<1024x512xbf16>
    %cst_9 = arith.constant dense<0.000000e+00> : vector<8x512xf32>
    %13 = tpu.matmul %11, %12, %cst_9 {dimension_numbers = #tpu.dot_dimension_numbers<[1], [0], [0], [1], [0, 0, 1, 1], [], []>} : vector<8x1024xbf16>, vector<1024x512xbf16>, vector<8x512xf32> -> vector<8x512xf32>
    %c0_10 = arith.constant 0 : index
    %c0_11 = arith.constant 0 : index
    %14 = vector.load %arg5[%c0_10, %c0_11] : memref<1x512xf32, #tpu.memory_space<vmem>>, vector<1x512xf32>
    %15 = vector.broadcast %14 : vector<1x512xf32> to vector<8x512xf32>
    %16 = arith.addf %13, %15 : vector<8x512xf32>
    %cst_12 = arith.constant 0.000000e+00 : f32
    %17 = vector.broadcast %cst_12 : f32 to vector<8x512xf32>
    %18 = arith.cmpf ogt, %16, %17 : vector<8x512xf32>
    %cst_13 = arith.constant 0.00999999977 : f32
    %19 = vector.broadcast %cst_13 : f32 to vector<8x512xf32>
    %20 = arith.mulf %19, %16 : vector<8x512xf32>
    %21 = arith.select %18, %16, %20 : vector<8x512xi1>, vector<8x512xf32>
    %22 = arith.truncf %21 : vector<8x512xf32> to vector<8x512xbf16>
    %c0_14 = arith.constant 0 : index
    %c0_15 = arith.constant 0 : index
    %23 = vector.load %arg6[%c0_14, %c0_15] : memref<512x256xbf16, #tpu.memory_space<vmem>>, vector<512x256xbf16>
    %cst_16 = arith.constant dense<0.000000e+00> : vector<8x256xf32>
    %24 = tpu.matmul %22, %23, %cst_16 {dimension_numbers = #tpu.dot_dimension_numbers<[1], [0], [0], [1], [0, 0, 1, 1], [], []>} : vector<8x512xbf16>, vector<512x256xbf16>, vector<8x256xf32> -> vector<8x256xf32>
    %c0_17 = arith.constant 0 : index
    %c0_18 = arith.constant 0 : index
    %25 = vector.load %arg7[%c0_17, %c0_18] : memref<1x256xf32, #tpu.memory_space<vmem>>, vector<1x256xf32>
    %26 = vector.broadcast %25 : vector<1x256xf32> to vector<8x256xf32>
    %27 = arith.addf %24, %26 : vector<8x256xf32>
    %cst_19 = arith.constant 0.000000e+00 : f32
    %28 = vector.broadcast %cst_19 : f32 to vector<8x256xf32>
    %29 = arith.cmpf ogt, %27, %28 : vector<8x256xf32>
    %cst_20 = arith.constant 0.00999999977 : f32
    %30 = vector.broadcast %cst_20 : f32 to vector<8x256xf32>
    %31 = arith.mulf %30, %27 : vector<8x256xf32>
    %32 = arith.select %29, %27, %31 : vector<8x256xi1>, vector<8x256xf32>
    %33 = arith.truncf %32 : vector<8x256xf32> to vector<8x256xbf16>
    %c0_21 = arith.constant 0 : index
    %c0_22 = arith.constant 0 : index
    %34 = vector.load %arg8[%c0_21, %c0_22] : memref<256x128xbf16, #tpu.memory_space<vmem>>, vector<256x128xbf16>
    %cst_23 = arith.constant dense<0.000000e+00> : vector<8x128xf32>
    %35 = tpu.matmul %33, %34, %cst_23 {dimension_numbers = #tpu.dot_dimension_numbers<[1], [0], [0], [1], [0, 0, 1, 1], [], []>} : vector<8x256xbf16>, vector<256x128xbf16>, vector<8x128xf32> -> vector<8x128xf32>
    %c0_24 = arith.constant 0 : index
    %c0_25 = arith.constant 0 : index
    %36 = vector.load %arg9[%c0_24, %c0_25] : memref<1x128xf32, #tpu.memory_space<vmem>>, vector<1x128xf32>
    %37 = vector.broadcast %36 : vector<1x128xf32> to vector<8x128xf32>
    %38 = arith.addf %35, %37 : vector<8x128xf32>
    %cst_26 = arith.constant 0.000000e+00 : f32
    %39 = vector.broadcast %cst_26 : f32 to vector<8x128xf32>
    %40 = arith.cmpf ogt, %38, %39 : vector<8x128xf32>
    %cst_27 = arith.constant 0.00999999977 : f32
    %41 = vector.broadcast %cst_27 : f32 to vector<8x128xf32>
    %42 = arith.mulf %41, %38 : vector<8x128xf32>
    %43 = arith.select %40, %38, %42 : vector<8x128xi1>, vector<8x128xf32>
    %44 = arith.truncf %43 : vector<8x128xf32> to vector<8x128xbf16>
    %c0_28 = arith.constant 0 : index
    %c0_29 = arith.constant 0 : index
    %45 = vector.load %arg10[%c0_28, %c0_29] : memref<128x128xbf16, #tpu.memory_space<vmem>>, vector<128x128xbf16>
    %cst_30 = arith.constant dense<0.000000e+00> : vector<8x128xf32>
    %46 = tpu.matmul %44, %45, %cst_30 {dimension_numbers = #tpu.dot_dimension_numbers<[1], [0], [0], [1], [0, 0, 1, 1], [], []>} : vector<8x128xbf16>, vector<128x128xbf16>, vector<8x128xf32> -> vector<8x128xf32>
    %c0_31 = arith.constant 0 : index
    %c0_32 = arith.constant 0 : index
    %47 = vector.load %arg11[%c0_31, %c0_32] : memref<1x128xf32, #tpu.memory_space<vmem>>, vector<1x128xf32>
    %48 = vector.broadcast %47 : vector<1x128xf32> to vector<8x128xf32>
    %49 = arith.addf %46, %48 : vector<8x128xf32>
    %c0_33 = arith.constant 0 : index
    %c0_34 = arith.constant 0 : index
    %50 = vector.load %arg12[%c0_33, %c0_34] : memref<8x128xf32, #tpu.memory_space<vmem>>, vector<8x128xf32>
    tpu.vector_store %arg12[%c0_33, %c0_34], %49 {strides = array<i32>} : memref<8x128xf32, #tpu.memory_space<vmem>>, vector<8x128xf32>,
    return
  }
  func.func @transform_0(%arg0: i32) -> (i32, i32) {
    %c0_i32 = arith.constant 0 : i32
    %c0_i32_0 = arith.constant 0 : i32
    return %arg0, %c0_i32 : i32, i32
  }
  func.func @transform_1(%arg0: i32) -> (i32, i32) {
    %c0_i32 = arith.constant 0 : i32
    %c0_i32_0 = arith.constant 0 : i32
    %c0_i32_1 = arith.constant 0 : i32
    return %c0_i32, %c0_i32_0 : i32, i32
  }
  func.func @transform_2(%arg0: i32) -> (i32, i32) {
    %c0_i32 = arith.constant 0 : i32
    %c0_i32_0 = arith.constant 0 : i32
    %c0_i32_1 = arith.constant 0 : i32
    return %c0_i32, %c0_i32_0 : i32, i32
  }
  func.func @transform_3(%arg0: i32) -> (i32, i32) {
    %c0_i32 = arith.constant 0 : i32
    %c0_i32_0 = arith.constant 0 : i32
    %c0_i32_1 = arith.constant 0 : i32
    return %c0_i32, %c0_i32_0 : i32, i32
  }
  func.func @transform_4(%arg0: i32) -> (i32, i32) {
    %c0_i32 = arith.constant 0 : i32
    %c0_i32_0 = arith.constant 0 : i32
    %c0_i32_1 = arith.constant 0 : i32
    return %c0_i32, %c0_i32_0 : i32, i32
  }
  func.func @transform_5(%arg0: i32) -> (i32, i32) {
    %c0_i32 = arith.constant 0 : i32
    %c0_i32_0 = arith.constant 0 : i32
    %c0_i32_1 = arith.constant 0 : i32
    return %c0_i32, %c0_i32_0 : i32, i32
  }
  func.func @transform_6(%arg0: i32) -> (i32, i32) {
    %c0_i32 = arith.constant 0 : i32
    %c0_i32_0 = arith.constant 0 : i32
    %c0_i32_1 = arith.constant 0 : i32
    return %c0_i32, %c0_i32_0 : i32, i32
  }
  func.func @transform_7(%arg0: i32) -> (i32, i32) {
    %c0_i32 = arith.constant 0 : i32
    %c0_i32_0 = arith.constant 0 : i32
    %c0_i32_1 = arith.constant 0 : i32
    return %c0_i32, %c0_i32_0 : i32, i32
  }
  func.func @transform_8(%arg0: i32) -> (i32, i32) {
    %c0_i32 = arith.constant 0 : i32
    %c0_i32_0 = arith.constant 0 : i32
    %c0_i32_1 = arith.constant 0 : i32
    return %c0_i32, %c0_i32_0 : i32, i32
  }
  func.func @transform_9(%arg0: i32) -> (i32, i32) {
    %c0_i32 = arith.constant 0 : i32
    %c0_i32_0 = arith.constant 0 : i32
    %c0_i32_1 = arith.constant 0 : i32
    return %c0_i32, %c0_i32_0 : i32, i32
  }
  func.func @transform_10(%arg0: i32) -> (i32, i32) {
    %c0_i32 = arith.constant 0 : i32
    %c0_i32_0 = arith.constant 0 : i32
    %c0_i32_1 = arith.constant 0 : i32
    return %c0_i32, %c0_i32_0 : i32, i32
  }
  func.func @transform_11(%arg0: i32) -> (i32, i32) {
    %c0_i32 = arith.constant 0 : i32
    %c0_i32_0 = arith.constant 0 : i32
    return %arg0, %c0_i32 : i32, i32
  }
}

module attributes {stable_mosaic.version = 11 : i64} {
  func.func @actor_kernel(%arg0: i32, %arg1: memref<8x32xbf16, #tpu.memory_space<vmem>>, %arg2: memref<32x1024xbf16, #tpu.memory_space<vmem>>, %arg3: memref<1x1024xf32, #tpu.memory_space<vmem>>, %arg4: memref<1024x512xbf16, #tpu.memory_space<vmem>>, %arg5: memref<1x512xf32, #tpu.memory_space<vmem>>, %arg6: memref<512x256xbf16, #tpu.memory_space<vmem>>, %arg7: memref<1x256xf32, #tpu.memory_space<vmem>>, %arg8: memref<256x128xbf16, #tpu.memory_space<vmem>>, %arg9: memref<1x128xf32, #tpu.memory_space<vmem>>, %arg10: memref<128x128xbf16, #tpu.memory_space<vmem>>, %arg11: memref<1x128xf32, #tpu.memory_space<vmem>>, %arg12: memref<8x128xf32, #tpu.memory_space<vmem>>) attributes {dimension_semantics = [#tpu.dimension_semantics<parallel>], iteration_bounds = array<i64: 1>, scalar_prefetch = 0 : i64, scratch_operands = 0 : i64, tpu.core_type = #tpu.core_type<tc>, window_params = [{transform_indices = @transform_0, window_bounds = array<i64: 8, 32>}, {pipeline_mode = #tpu.pipeline_mode<synchronous>, transform_indices = @transform_1, window_bounds = array<i64: 32, 1024>}, {pipeline_mode = #tpu.pipeline_mode<synchronous>, transform_indices = @transform_2, window_bounds = array<i64: 1, 1024>}, {pipeline_mode = #tpu.pipeline_mode<synchronous>, transform_indices = @transform_3, window_bounds = array<i64: 1024, 512>}, {pipeline_mode = #tpu.pipeline_mode<synchronous>, transform_indices = @transform_4, window_bounds = array<i64: 1, 512>}, {pipeline_mode = #tpu.pipeline_mode<synchronous>, transform_indices = @transform_5, window_bounds = array<i64: 512, 256>}, {pipeline_mode = #tpu.pipeline_mode<synchronous>, transform_indices = @transform_6, window_bounds = array<i64: 1, 256>}, {pipeline_mode = #tpu.pipeline_mode<synchronous>, transform_indices = @transform_7, window_bounds = array<i64: 256, 128>}, {pipeline_mode = #tpu.pipeline_mode<synchronous>, transform_indices = @transform_8, window_bounds = array<i64: 1, 128>}, {pipeline_mode = #tpu.pipeline_mode<synchronous>, transform_indices = @transform_9, window_bounds = array<i64: 128, 128>}, {pipeline_mode = #tpu.pipeline_mode<synchronous>, transform_indices = @transform_10, window_bounds = array<i64: 1, 128>}, {transform_indices = @transform_11, window_bounds = array<i64: 8, 128>}]} {
    %c0 = arith.constant 0 : index
    %c0_0 = arith.constant 0 : index
    %0 = vector.load %arg1[%c0, %c0_0] : memref<8x32xbf16, #tpu.memory_space<vmem>>, vector<8x32xbf16>
    %c0_1 = arith.constant 0 : index
    %c0_2 = arith.constant 0 : index
    %1 = vector.load %arg2[%c0_1, %c0_2] : memref<32x1024xbf16, #tpu.memory_space<vmem>>, vector<32x1024xbf16>
    %cst = arith.constant dense<0.000000e+00> : vector<8x1024xf32>
    %2 = tpu.matmul %0, %1, %cst {dimension_numbers = #tpu.dot_dimension_numbers<[1], [0], [0], [1], [0, 0, 1, 1], [], []>} : vector<8x32xbf16>, vector<32x1024xbf16>, vector<8x1024xf32> -> vector<8x1024xf32>
    %c0_3 = arith.constant 0 : index
    %c0_4 = arith.constant 0 : index
    %3 = vector.load %arg3[%c0_3, %c0_4] : memref<1x1024xf32, #tpu.memory_space<vmem>>, vector<1x1024xf32>
    %4 = vector.broadcast %3 : vector<1x1024xf32> to vector<8x1024xf32>
    %5 = arith.addf %2, %4 : vector<8x1024xf32>
    %cst_5 = arith.constant 0.000000e+00 : f32
    %6 = vector.broadcast %cst_5 : f32 to vector<8x1024xf32>
    %7 = arith.cmpf ogt, %5, %6 : vector<8x1024xf32>
    %cst_6 = arith.constant 0.00999999977 : f32
    %8 = vector.broadcast %cst_6 : f32 to vector<8x1024xf32>
    %9 = arith.mulf %8, %5 : vector<8x1024xf32>
    %10 = arith.select %7, %5, %9 : vector<8x1024xi1>, vector<8x1024xf32>
    %11 = arith.truncf %10 : vector<8x1024xf32> to vector<8x1024xbf16>
    %c0_7 = arith.constant 0 : index
    %c0_8 = arith.constant 0 : index
    %12 = vector.load %arg4[%c0_7, %c0_8] : memref<1024x512xbf16, #tpu.memory_space<vmem>>, vector<1024x512xbf16>
    %cst_9 = arith.constant dense<0.000000e+00> : vector<8x512xf32>
    %13 = tpu.matmul %11, %12, %cst_9 {dimension_numbers = #tpu.dot_dimension_numbers<[1], [0], [0], [1], [0, 0, 1, 1], [], []>} : vector<8x1024xbf16>, vector<1024x512xbf16>, vector<8x512xf32> -> vector<8x512xf32>
    %c0_10 = arith.constant 0 : index
    %c0_11 = arith.constant 0 : index
    %14 = vector.load %arg5[%c0_10, %c0_11] : memref<1x512xf32, #tpu.memory_space<vmem>>, vector<1x512xf32>
    %15 = vector.broadcast %14 : vector<1x512xf32> to vector<8x512xf32>
    %16 = arith.addf %13, %15 : vector<8x512xf32>
    %cst_12 = arith.constant 0.000000e+00 : f32
    %17 = vector.broadcast %cst_12 : f32 to vector<8x512xf32>
    %18 = arith.cmpf ogt, %16, %17 : vector<8x512xf32>
    %cst_13 = arith.constant 0.00999999977 : f32
    %19 = vector.broadcast %cst_13 : f32 to vector<8x512xf32>
    %20 = arith.mulf %19, %16 : vector<8x512xf32>
    %21 = arith.select %18, %16, %20 : vector<8x512xi1>, vector<8x512xf32>
    %22 = arith.truncf %21 : vector<8x512xf32> to vector<8x512xbf16>
    %c0_14 = arith.constant 0 : index
    %c0_15 = arith.constant 0 : index
    %23 = vector.load %arg6[%c0_14, %c0_15] : memref<512x256xbf16, #tpu.memory_space<vmem>>, vector<512x256xbf16>
    %cst_16 = arith.constant dense<0.000000e+00> : vector<8x256xf32>
    %24 = tpu.matmul %22, %23, %cst_16 {dimension_numbers = #tpu.dot_dimension_numbers<[1], [0], [0], [1], [0, 0, 1, 1], [], []>} : vector<8x512xbf16>, vector<512x256xbf16>, vector<8x256xf32> -> vector<8x256xf32>
    %c0_17 = arith.constant 0 : index
    %c0_18 = arith.constant 0 : index
    %25 = vector.load %arg7[%c0_17, %c0_18] : memref<1x256xf32, #tpu.memory_space<vmem>>, vector<1x256xf32>
    %26 = vector.broadcast %25 : vector<1x256xf32> to vector<8x256xf32>
    %27 = arith.addf %24, %26 : vector<8x256xf32>
    %cst_19 = arith.constant 0.000000e+00 : f32
    %28 = vector.broadcast %cst_19 : f32 to vector<8x256xf32>
    %29 = arith.cmpf ogt, %27, %28 : vector<8x256xf32>
    %cst_20 = arith.constant 0.00999999977 : f32
    %30 = vector.broadcast %cst_20 : f32 to vector<8x256xf32>
    %31 = arith.mulf %30, %27 : vector<8x256xf32>
    %32 = arith.select %29, %27, %31 : vector<8x256xi1>, vector<8x256xf32>
    %33 = arith.truncf %32 : vector<8x256xf32> to vector<8x256xbf16>
    %c0_21 = arith.constant 0 : index
    %c0_22 = arith.constant 0 : index
    %34 = vector.load %arg8[%c0_21, %c0_22] : memref<256x128xbf16, #tpu.memory_space<vmem>>, vector<256x128xbf16>
    %cst_23 = arith.constant dense<0.000000e+00> : vector<8x128xf32>
    %35 = tpu.matmul %33, %34, %cst_23 {dimension_numbers = #tpu.dot_dimension_numbers<[1], [0], [0], [1], [0, 0, 1, 1], [], []>} : vector<8x256xbf16>, vector<256x128xbf16>, vector<8x128xf32> -> vector<8x128xf32>
    %c0_24 = arith.constant 0 : index
    %c0_25 = arith.constant 0 : index
    %36 = vector.load %arg9[%c0_24, %c0_25] : memref<1x128xf32, #tpu.memory_space<vmem>>, vector<1x128xf32>
    %37 = vector.broadcast %36 : vector<1x128xf32> to vector<8x128xf32>
    %38 = arith.addf %35, %37 : vector<8x128xf32>
    %cst_26 = arith.constant 0.000000e+00 : f32
    %39 = vector.broadcast %cst_26 : f32 to vector<8x128xf32>
    %40 = arith.cmpf ogt, %38, %39 : vector<8x128xf32>
    %cst_27 = arith.constant 0.00999999977 : f32
    %41 = vector.broadcast %cst_27 : f32 to vector<8x128xf32>
    %42 = arith.mulf %41, %38 : vector<8x128xf32>
    %43 = arith.select %40, %38, %42 : vector<8x128xi1>, vector<8x128xf32>
    %44 = arith.truncf %43 : vector<8x128xf32> to vector<8x128xbf16>
    %c0_28 = arith.constant 0 : index
    %c0_29 = arith.constant 0 : index
    %45 = vector.load %arg10[%c0_28, %c0_29] : memref<128x128xbf16, #tpu.memory_space<vmem>>, vector<128x128xbf16>
    %cst_30 = arith.constant dense<0.000000e+00> : vector<8x128xf32>
    %46 = tpu.matmul %44, %45, %cst_30 {dimension_numbers = #tpu.dot_dimension_numbers<[1], [0], [0], [1], [0, 0, 1, 1], [], []>} : vector<8x128xbf16>, vector<128x128xbf16>, vector<8x128xf32> -> vector<8x128xf32>
    %c0_31 = arith.constant 0 : index
    %c0_32 = arith.constant 0 : index
    %47 = vector.load %arg11[%c0_31, %c0_32] : memref<1x128xf32, #tpu.memory_space<vmem>>, vector<1x128xf32>
    %48 = vector.broadcast %47 : vector<1x128xf32> to vector<8x128xf32>
    %49 = arith.addf %46, %48 : vector<8x128xf32>
    %c0_33 = arith.constant 0 : index
    %c0_34 = arith.constant 0 : index
    %50 = vector.load %arg12[%c0_33, %c0_34] : memref<8x128xf32, #tpu.memory_space<vmem>>, vector<8x128xf32>
    tpu.vector_store %arg12[%c0_33, %c0_34], %49 {strides = array<i32>} : memref<8x128xf32, #tpu.memory_space<vmem>>, vector<8x128xf32>,
    return
  }
  func.func @transform_0(%arg0: i32) -> (i32, i32) {
    %c0_i32 = arith.constant 0 : i32
    %c0_i32_0 = arith.constant 0 : i32
    return %arg0, %c0_i32 : i32, i32
  }
  func.func @transform_1(%arg0: i32) -> (i32, i32) {
    %c0_i32 = arith.constant 0 : i32
    %c0_i32_0 = arith.constant 0 : i32
    %c0_i32_1 = arith.constant 0 : i32
    return %c0_i32, %c0_i32_0 : i32, i32
  }
  func.func @transform_2(%arg0: i32) -> (i32, i32) {
    %c0_i32 = arith.constant 0 : i32
    %c0_i32_0 = arith.constant 0 : i32
    %c0_i32_1 = arith.constant 0 : i32
    return %c0_i32, %c0_i32_0 : i32, i32
  }
  func.func @transform_3(%arg0: i32) -> (i32, i32) {
    %c0_i32 = arith.constant 0 : i32
    %c0_i32_0 = arith.constant 0 : i32
    %c0_i32_1 = arith.constant 0 : i32
    return %c0_i32, %c0_i32_0 : i32, i32
  }
  func.func @transform_4(%arg0: i32) -> (i32, i32) {
    %c0_i32 = arith.constant 0 : i32
    %c0_i32_0 = arith.constant 0 : i32
    %c0_i32_1 = arith.constant 0 : i32
    return %c0_i32, %c0_i32_0 : i32, i32
  }
  func.func @transform_5(%arg0: i32) -> (i32, i32) {
    %c0_i32 = arith.constant 0 : i32
    %c0_i32_0 = arith.constant 0 : i32
    %c0_i32_1 = arith.constant 0 : i32
    return %c0_i32, %c0_i32_0 : i32, i32
  }
  func.func @transform_6(%arg0: i32) -> (i32, i32) {
    %c0_i32 = arith.constant 0 : i32
    %c0_i32_0 = arith.constant 0 : i32
    %c0_i32_1 = arith.constant 0 : i32
    return %c0_i32, %c0_i32_0 : i32, i32
  }
  func.func @transform_7(%arg0: i32) -> (i32, i32) {
    %c0_i32 = arith.constant 0 : i32
    %c0_i32_0 = arith.constant 0 : i32
    %c0_i32_1 = arith.constant 0 : i32
    return %c0_i32, %c0_i32_0 : i32, i32
  }
  func.func @transform_8(%arg0: i32) -> (i32, i32) {
    %c0_i32 = arith.constant 0 : i32
    %c0_i32_0 = arith.constant 0 : i32
    %c0_i32_1 = arith.constant 0 : i32
    return %c0_i32, %c0_i32_0 : i32, i32
  }
  func.func @transform_9(%arg0: i32) -> (i32, i32) {
    %c0_i32 = arith.constant 0 : i32
    %c0_i32_0 = arith.constant 0 : i32
    %c0_i32_1 = arith.constant 0 : i32
    return %c0_i32, %c0_i32_0 : i32, i32
  }
  func.func @transform_10(%arg0: i32) -> (i32, i32) {
    %c0_i32 = arith.constant 0 : i32
    %c0_i32_0 = arith.constant 0 : i32
    %c0_i32_1 = arith.constant 0 : i32
    return %c0_i32, %c0_i32_0 : i32, i32
  }
  func.func @transform_11(%arg0: i32) -> (i32, i32) {
    %c0_i32 = arith.constant 0 : i32
    %c0_i32_0 = arith.constant 0 : i32
    return %arg0, %c0_i32 : i32, i32
  }
}

</mosaic_0001>

<llo_original>
// kernel: actor_forward.1
$region0: #{actor_forward.1}
  #allocation0 [shape = 'u32[]', space=smem, size = 0x4, offset = 0x4, fixed_abs, tag = 'smem constant byte address 0x4 - core index']
  #allocation1 [shape = 'u32[72,128]{1,0:T(1,128)}', space=vmem, size = 0x9000, scoped, tag = 'internal scratch']
  %s0 = inlined_call_operand.vmem [shape: bf16[8,32], index: 0, kind: input, shape index: {}]
  %s1 = inlined_call_operand.hbm [shape: bf16[32,1024], index: 1, kind: input, shape index: {}]
  %s2 = inlined_call_operand.vmem [shape: f32[1,1024], index: 2, kind: input, shape index: {}]
  %s3 = inlined_call_operand.hbm [shape: bf16[1024,512], index: 3, kind: input, shape index: {}]
  %s4 = inlined_call_operand.vmem [shape: f32[1,512], index: 4, kind: input, shape index: {}]
  %s5 = inlined_call_operand.hbm [shape: bf16[512,256], index: 5, kind: input, shape index: {}]
  %s6 = inlined_call_operand.vmem [shape: f32[1,256], index: 6, kind: input, shape index: {}]
  %s7 = inlined_call_operand.hbm [shape: bf16[256,128], index: 7, kind: input, shape index: {}]
  %s8 = inlined_call_operand.vmem [shape: f32[1,128], index: 8, kind: input, shape index: {}]
  %s9 = inlined_call_operand.hbm [shape: bf16[128,128], index: 9, kind: input, shape index: {}]
  %s10 = inlined_call_operand.vmem [shape: f32[1,128], index: 10, kind: input, shape index: {}]
  %s11 = inlined_call_operand.vmem [shape: f32[8,128], index: 11, kind: output, shape index: {}]
  %s12 = sld [smem:[#allocation0]]
  $region74: #{actor_forward.1} parent=0
    _
  %s14 = ssub.s32 1, %s12
  %s15 = scalar_select 0, %s14, %s12
  $region1: #{actor_forward.1} parent=0
    #allocation2 [shape = 'u8[65536]{0}', space=vmem, size = 0x10000, scoped, tag = 'input window, operand 1, single buffered']
    #allocation3 [shape = 's32[1]{0}', space=sflag, size = 0x4, scoped, tag = 'scoped memory for actor_forward.1']
    #allocation4 [shape = 'u8[1048576]{0}', space=vmem, size = 0x100000, scoped, tag = 'input window, operand 3, single buffered']
    #allocation5 [shape = 's32[1]{0}', space=sflag, size = 0x4, scoped, tag = 'scoped memory for actor_forward.1']
    #allocation6 [shape = 'u8[262144]{0}', space=vmem, size = 0x40000, scoped, tag = 'input window, operand 5, single buffered']
    #allocation7 [shape = 'u8[65536]{0}', space=vmem, size = 0x10000, scoped, tag = 'input window, operand 7, single buffered']
    #allocation8 [shape = 's32[1]{0}', space=sflag, size = 0x4, scoped, tag = 'scoped memory for actor_forward.1']
    #allocation9 [shape = 'u8[32768]{0}', space=vmem, size = 0x8000, scoped, tag = 'input window, operand 9, single buffered']
    %16 = vsyncpa [#allocation3], 0
    %17 = vsyncpa [#allocation5], 0
    %18 = vsyncpa [#allocation8], 0
    // Predicated region
    $region2: #{actor_forward.1} parent=1 // pred_check
      _
    $region3: #{actor_forward.1} parent=1 // pred_check_branch
      %20 = sbr.rel (0) target = $region5
    $region4: #{actor_forward.1} parent=1 // pred_region
      _
    $region5: #{actor_forward.1} parent=1 // pred_fallthru
      _
    // Predicated region
    $region6: #{actor_forward.1} parent=1 // pred_check
      _
    $region7: #{actor_forward.1} parent=1 // pred_check_branch
      %22 = sbr.rel (0) target = $region9
    $region8: #{actor_forward.1} parent=1 // pred_region
      %24 = vsyncadd [#allocation3], 0
      %s25 = sshll.u32 %s1, 4
      %s26 = int_to_ptr.hbm [resolvable:$true] %s25
      %s27 = sshll.u32 [#allocation2], 4
      %s28 = int_to_ptr.vmem [resolvable:$true] %s27
      %33 = dma.hbm_to_vmem [thread:$0]  %s26, 2048, %s28, [#allocation3], 512, 512, 32
    $region9: #{actor_forward.1} parent=1 // pred_fallthru
      _
    // Predicated region
    $region10: #{actor_forward.1} parent=1 // pred_check
      _
    $region11: #{actor_forward.1} parent=1 // pred_check_branch
      %35 = sbr.rel (0) target = $region13
    $region12: #{actor_forward.1} parent=1 // pred_region
      _
    $region13: #{actor_forward.1} parent=1 // pred_fallthru
      _
    // Predicated region
    $region14: #{actor_forward.1} parent=1 // pred_check
      _
    $region15: #{actor_forward.1} parent=1 // pred_check_branch
      %37 = sbr.rel (0) target = $region17
    $region16: #{actor_forward.1} parent=1 // pred_region
      %39 = vsyncadd [#allocation5], 0
      %s40 = sshll.u32 %s3, 4
      %s41 = int_to_ptr.hbm [resolvable:$true] %s40
      %s42 = sshll.u32 [#allocation4], 4
      %s43 = int_to_ptr.vmem [resolvable:$true] %s42
      %48 = dma.hbm_to_vmem [thread:$0]  %s41, 32768, %s43, [#allocation5], 256, 256, 16
    $region17: #{actor_forward.1} parent=1 // pred_fallthru
      _
    // Predicated region
    $region18: #{actor_forward.1} parent=1 // pred_check
      _
    $region19: #{actor_forward.1} parent=1 // pred_check_branch
      %50 = sbr.rel (0) target = $region21
    $region20: #{actor_forward.1} parent=1 // pred_region
      _
    $region21: #{actor_forward.1} parent=1 // pred_fallthru
      _
    // Predicated region
    $region22: #{actor_forward.1} parent=1 // pred_check
      _
    $region23: #{actor_forward.1} parent=1 // pred_check_branch
      %52 = sbr.rel (0) target = $region25
    $region24: #{actor_forward.1} parent=1 // pred_region
      %54 = vsyncadd [#allocation5], 0
      %s55 = sshll.u32 %s5, 4
      %s56 = int_to_ptr.hbm [resolvable:$true] %s55
      %s57 = sshll.u32 [#allocation6], 4
      %s58 = int_to_ptr.vmem [resolvable:$true] %s57
      %63 = dma.hbm_to_vmem [thread:$0]  %s56, 8192, %s58, [#allocation5], 128, 128, 8
    $region25: #{actor_forward.1} parent=1 // pred_fallthru
      _
    // Predicated region
    $region26: #{actor_forward.1} parent=1 // pred_check
      _
    $region27: #{actor_forward.1} parent=1 // pred_check_branch
      %65 = sbr.rel (0) target = $region29
    $region28: #{actor_forward.1} parent=1 // pred_region
      _
    $region29: #{actor_forward.1} parent=1 // pred_fallthru
      _
    // Predicated region
    $region30: #{actor_forward.1} parent=1 // pred_check
      _
    $region31: #{actor_forward.1} parent=1 // pred_check_branch
      %67 = sbr.rel (0) target = $region33
    $region32: #{actor_forward.1} parent=1 // pred_region
      %69 = vsyncadd [#allocation8], 0
      %s70 = sshll.u32 %s7, 4
      %s71 = int_to_ptr.hbm [resolvable:$true] %s70
      %s72 = sshll.u32 [#allocation7], 4
      %s73 = int_to_ptr.vmem [resolvable:$true] %s72
      %78 = dma.hbm_to_vmem [thread:$0]  %s71, 2048, %s73, [#allocation8], 64, 64, 4
    $region33: #{actor_forward.1} parent=1 // pred_fallthru
      _
    // Predicated region
    $region34: #{actor_forward.1} parent=1 // pred_check
      _
    $region35: #{actor_forward.1} parent=1 // pred_check_branch
      %80 = sbr.rel (0) target = $region37
    $region36: #{actor_forward.1} parent=1 // pred_region
      _
    $region37: #{actor_forward.1} parent=1 // pred_fallthru
      _
    // Predicated region
    $region38: #{actor_forward.1} parent=1 // pred_check
      _
    $region39: #{actor_forward.1} parent=1 // pred_check_branch
      %82 = sbr.rel (0) target = $region41
    $region40: #{actor_forward.1} parent=1 // pred_region
      %84 = vsyncadd [#allocation8], 0
      %s85 = sshll.u32 %s9, 4
      %s86 = int_to_ptr.hbm [resolvable:$true] %s85
      %s87 = sshll.u32 [#allocation9], 4
      %s88 = int_to_ptr.vmem [resolvable:$true] %s87
      %93 = dma.hbm_to_vmem [thread:$0]  %s86, 1024, %s88, [#allocation8], 64, 64, 4
    $region41: #{actor_forward.1} parent=1 // pred_fallthru
      _
    // Predicated region
    $region42: #{actor_forward.1} parent=1 // pred_check
      _
    $region43: #{actor_forward.1} parent=1 // pred_check_branch
      %95 = sbr.rel (0) target = $region45
    $region44: #{actor_forward.1} parent=1 // pred_region
      _
    $region45: #{actor_forward.1} parent=1 // pred_fallthru
      _
    // Predicated region
    $region46: #{actor_forward.1} parent=1 // pred_check
      _
    $region47: #{actor_forward.1} parent=1 // pred_check_branch
      %97 = sbr.rel (0) target = $region49
    $region48: #{actor_forward.1} parent=1 // pred_region
      %99 = dma.done [#allocation3], 2048
    $region49: #{actor_forward.1} parent=1 // pred_fallthru
      _
    // Predicated region
    $region50: #{actor_forward.1} parent=1 // pred_check
      _
    $region51: #{actor_forward.1} parent=1 // pred_check_branch
      %101 = sbr.rel (0) target = $region53
    $region52: #{actor_forward.1} parent=1 // pred_region
      %103 = dma.done [#allocation5], 32768
    $region53: #{actor_forward.1} parent=1 // pred_fallthru
      _
    // Predicated region
    $region54: #{actor_forward.1} parent=1 // pred_check
      _
    $region55: #{actor_forward.1} parent=1 // pred_check_branch
      %105 = sbr.rel (0) target = $region57
    $region56: #{actor_forward.1} parent=1 // pred_region
      %107 = dma.done [#allocation5], 8192
    $region57: #{actor_forward.1} parent=1 // pred_fallthru
      _
    // Predicated region
    $region58: #{actor_forward.1} parent=1 // pred_check
      _
    $region59: #{actor_forward.1} parent=1 // pred_check_branch
      %109 = sbr.rel (0) target = $region61
    $region60: #{actor_forward.1} parent=1 // pred_region
      %111 = dma.done [#allocation8], 2048
    $region61: #{actor_forward.1} parent=1 // pred_fallthru
      _
    // Predicated region
    $region62: #{actor_forward.1} parent=1 // pred_check
      _
    $region63: #{actor_forward.1} parent=1 // pred_check_branch
      %113 = sbr.rel (0) target = $region65
    $region64: #{actor_forward.1} parent=1 // pred_region
      %115 = dma.done [#allocation8], 1024
    $region65: #{actor_forward.1} parent=1 // pred_fallthru
      _
    %v117 = vld [vmem:[%s0] sm:$0xf]
    %v118 = vld [vmem:[#allocation2] sm:$0xff]
    %v119 = vld [vmem:[#allocation2 + $0x8] sm:$0xff]
    %v120 = vld [vmem:[#allocation2 + $0x10] sm:$0xff]
    %v121 = vld [vmem:[#allocation2 + $0x18] sm:$0xff]
    %v122 = vld [vmem:[#allocation2 + $0x20] sm:$0xff]
    %v123 = vld [vmem:[#allocation2 + $0x28] sm:$0xff]
    %v124 = vld [vmem:[#allocation2 + $0x30] sm:$0xff]
    %v125 = vld [vmem:[#allocation2 + $0x38] sm:$0xff]
    %v126 = vld [vmem:[#allocation2 + $0x40] sm:$0xff]
    %v127 = vld [vmem:[#allocation2 + $0x48] sm:$0xff]
    %v128 = vld [vmem:[#allocation2 + $0x50] sm:$0xff]
    %v129 = vld [vmem:[#allocation2 + $0x58] sm:$0xff]
    %v130 = vld [vmem:[#allocation2 + $0x60] sm:$0xff]
    %v131 = vld [vmem:[#allocation2 + $0x68] sm:$0xff]
    %v132 = vld [vmem:[#allocation2 + $0x70] sm:$0xff]
    %v133 = vld [vmem:[#allocation2 + $0x78] sm:$0xff]
    %v134 = vld [vmem:[%s2] sm:$0xff]
    %v136 = vperm.slane %v134, 0
    %v137 = vperm.slane %v134, 1
    %v138 = vperm.slane %v134, 2
    %v139 = vperm.slane %v134, 3
    %v140 = vperm.slane %v134, 4
    %v141 = vperm.slane %v134, 5
    %v142 = vperm.slane %v134, 6
    %v143 = vperm.slane %v134, 7
    %v168 = vunpack.c.l.b16 %v118
    %v169 = vunpack.c.h.b16 %v118
    %v170 = vunpack.c.l.b16 %v119
    %v171 = vunpack.c.h.b16 %v119
    %v172 = vunpack.c.l.b16 %v120
    %v173 = vunpack.c.h.b16 %v120
    %v174 = vunpack.c.l.b16 %v121
    %v175 = vunpack.c.h.b16 %v121
    %v176 = vunpack.c.l.b16 %v122
    %v177 = vunpack.c.h.b16 %v122
    %v178 = vunpack.c.l.b16 %v123
    %v179 = vunpack.c.h.b16 %v123
    %v180 = vunpack.c.l.b16 %v124
    %v181 = vunpack.c.h.b16 %v124
    %v182 = vunpack.c.l.b16 %v125
    %v183 = vunpack.c.h.b16 %v125
    %v184 = vunpack.c.l.b16 %v126
    %v185 = vunpack.c.h.b16 %v126
    %v186 = vunpack.c.l.b16 %v127
    %v187 = vunpack.c.h.b16 %v127
    %v188 = vunpack.c.l.b16 %v128
    %v189 = vunpack.c.h.b16 %v128
    %v190 = vunpack.c.l.b16 %v129
    %v191 = vunpack.c.h.b16 %v129
    %v192 = vunpack.c.l.b16 %v130
    %v193 = vunpack.c.h.b16 %v130
    %v194 = vunpack.c.l.b16 %v131
    %v195 = vunpack.c.h.b16 %v131
    %v196 = vunpack.c.l.b16 %v132
    %v197 = vunpack.c.h.b16 %v132
    %v198 = vunpack.c.l.b16 %v133
    %v199 = vunpack.c.h.b16 %v133
    %v200 = vpack.c.b16 %v176, %v168
    %v201 = vpack.c.b16 %v177, %v169
    %v202 = vpack.c.b16 %v178, %v170
    %v203 = vpack.c.b16 %v179, %v171
    %v204 = vpack.c.b16 %v180, %v172
    %v205 = vpack.c.b16 %v181, %v173
    %v206 = vpack.c.b16 %v182, %v174
    %v207 = vpack.c.b16 %v183, %v175
    %v208 = vpack.c.b16 %v192, %v184
    %v209 = vpack.c.b16 %v193, %v185
    %v210 = vpack.c.b16 %v194, %v186
    %v211 = vpack.c.b16 %v195, %v187
    %v212 = vpack.c.b16 %v196, %v188
    %v213 = vpack.c.b16 %v197, %v189
    %v214 = vpack.c.b16 %v198, %v190
    %v215 = vpack.c.b16 %v199, %v191
    %vm232 = vcmask 261120
    %v234 = vsel %vm232, %v117, 0
    %236 = vmatpush.bf16.msra.mxu0 0
    %237 = vmatpush.bf16.msra.mxu0 0
    %238 = vmatpush.bf16.msra.mxu0 0
    %239 = vmatpush.bf16.msra.mxu0 0
    %240 = vmatpush.bf16.msra.mxu0 0
    %241 = vmatpush.bf16.msra.mxu0 0
    %242 = vmatpush.bf16.msra.mxu0 %v208
    %243 = vmatpush.bf16.msra.mxu0 %v200
    %244 = vmatmul.bf16.gmra.mxu0 %v234
    %v245 = vpop.f32.mrf.mxu0
    %v246 = vadd.f32 %v136, %v245
    %v247 = vpop.f32.mrf.mxu0
    %248 = vdwg.mxu0
    %249 = vmatpush.bf16.msra.mxu0 0
    %250 = vmatpush.bf16.msra.mxu0 0
    %251 = vmatpush.bf16.msra.mxu0 0
    %252 = vmatpush.bf16.msra.mxu0 0
    %253 = vmatpush.bf16.msra.mxu0 0
    %254 = vmatpush.bf16.msra.mxu0 0
    %255 = vmatpush.bf16.msra.mxu0 %v209
    %256 = vmatpush.bf16.msra.mxu0 %v201
    %257 = vmatmul.bf16.gmra.mxu0 %v234
    %v258 = vpop.f32.mrf.mxu0
    %v259 = vadd.f32 %v137, %v258
    %v260 = vpop.f32.mrf.mxu0
    %261 = vdwg.mxu0
    %262 = vmatpush.bf16.msra.mxu0 0
    %263 = vmatpush.bf16.msra.mxu0 0
    %264 = vmatpush.bf16.msra.mxu0 0
    %265 = vmatpush.bf16.msra.mxu0 0
    %266 = vmatpush.bf16.msra.mxu0 0
    %267 = vmatpush.bf16.msra.mxu0 0
    %268 = vmatpush.bf16.msra.mxu0 %v210
    %269 = vmatpush.bf16.msra.mxu0 %v202
    %270 = vmatmul.bf16.gmra.mxu0 %v234
    %v271 = vpop.f32.mrf.mxu0
    %v272 = vadd.f32 %v138, %v271
    %v273 = vpop.f32.mrf.mxu0
    %274 = vdwg.mxu0
    %275 = vmatpush.bf16.msra.mxu0 0
    %276 = vmatpush.bf16.msra.mxu0 0
    %277 = vmatpush.bf16.msra.mxu0 0
    %278 = vmatpush.bf16.msra.mxu0 0
    %279 = vmatpush.bf16.msra.mxu0 0
    %280 = vmatpush.bf16.msra.mxu0 0
    %281 = vmatpush.bf16.msra.mxu0 %v211
    %282 = vmatpush.bf16.msra.mxu0 %v203
    %283 = vmatmul.bf16.gmra.mxu0 %v234
    %v284 = vpop.f32.mrf.mxu0
    %v285 = vadd.f32 %v139, %v284
    %v286 = vpop.f32.mrf.mxu0
    %287 = vdwg.mxu0
    %288 = vmatpush.bf16.msra.mxu0 0
    %289 = vmatpush.bf16.msra.mxu0 0
    %290 = vmatpush.bf16.msra.mxu0 0
    %291 = vmatpush.bf16.msra.mxu0 0
    %292 = vmatpush.bf16.msra.mxu0 0
    %293 = vmatpush.bf16.msra.mxu0 0
    %294 = vmatpush.bf16.msra.mxu0 %v212
    %295 = vmatpush.bf16.msra.mxu0 %v204
    %296 = vmatmul.bf16.gmra.mxu0 %v234
    %v297 = vpop.f32.mrf.mxu0
    %v298 = vadd.f32 %v140, %v297
    %v299 = vpop.f32.mrf.mxu0
    %300 = vdwg.mxu0
    %301 = vmatpush.bf16.msra.mxu0 0
    %302 = vmatpush.bf16.msra.mxu0 0
    %303 = vmatpush.bf16.msra.mxu0 0
    %304 = vmatpush.bf16.msra.mxu0 0
    %305 = vmatpush.bf16.msra.mxu0 0
    %306 = vmatpush.bf16.msra.mxu0 0
    %307 = vmatpush.bf16.msra.mxu0 %v213
    %308 = vmatpush.bf16.msra.mxu0 %v205
    %309 = vmatmul.bf16.gmra.mxu0 %v234
    %v310 = vpop.f32.mrf.mxu0
    %v311 = vadd.f32 %v141, %v310
    %v312 = vpop.f32.mrf.mxu0
    %313 = vdwg.mxu0
    %314 = vmatpush.bf16.msra.mxu0 0
    %315 = vmatpush.bf16.msra.mxu0 0
    %316 = vmatpush.bf16.msra.mxu0 0
    %317 = vmatpush.bf16.msra.mxu0 0
    %318 = vmatpush.bf16.msra.mxu0 0
    %319 = vmatpush.bf16.msra.mxu0 0
    %320 = vmatpush.bf16.msra.mxu0 %v214
    %321 = vmatpush.bf16.msra.mxu0 %v206
    %322 = vmatmul.bf16.gmra.mxu0 %v234
    %v323 = vpop.f32.mrf.mxu0
    %v324 = vadd.f32 %v142, %v323
    %v325 = vpop.f32.mrf.mxu0
    %326 = vdwg.mxu0
    %327 = vmatpush.bf16.msra.mxu0 0
    %328 = vmatpush.bf16.msra.mxu0 0
    %329 = vmatpush.bf16.msra.mxu0 0
    %330 = vmatpush.bf16.msra.mxu0 0
    %331 = vmatpush.bf16.msra.mxu0 0
    %332 = vmatpush.bf16.msra.mxu0 0
    %333 = vmatpush.bf16.msra.mxu0 %v215
    %334 = vmatpush.bf16.msra.mxu0 %v207
    %335 = vmatmul.bf16.gmra.mxu0 %v234
    %v336 = vpop.f32.mrf.mxu0
    %v337 = vadd.f32 %v143, %v336
    %v338 = vpop.f32.mrf.mxu0
    %339 = vdwg.mxu0
    %vm340 = vcmp.gt.f32.partialorder %v246, 0.0
    %vm341 = vcmp.gt.f32.partialorder %v259, 0.0
    %vm342 = vcmp.gt.f32.partialorder %v272, 0.0
    %vm343 = vcmp.gt.f32.partialorder %v285, 0.0
    %vm344 = vcmp.gt.f32.partialorder %v298, 0.0
    %vm345 = vcmp.gt.f32.partialorder %v311, 0.0
    %vm346 = vcmp.gt.f32.partialorder %v324, 0.0
    %vm347 = vcmp.gt.f32.partialorder %v337, 0.0
    %v348 = vmul.f32 %v246, 0.01
    %v349 = vmul.f32 %v259, 0.01
    %v350 = vmul.f32 %v272, 0.01
    %v351 = vmul.f32 %v285, 0.01
    %v352 = vmul.f32 %v298, 0.01
    %v353 = vmul.f32 %v311, 0.01
    %v354 = vmul.f32 %v324, 0.01
    %v355 = vmul.f32 %v337, 0.01
    %v356 = vsel %vm340, %v246, %v348
    %v357 = vsel %vm341, %v259, %v349
    %v358 = vsel %vm342, %v272, %v350
    %v359 = vsel %vm343, %v285, %v351
    %v360 = vsel %vm344, %v298, %v352
    %v361 = vsel %vm345, %v311, %v353
    %v362 = vsel %vm346, %v324, %v354
    %v363 = vsel %vm347, %v337, %v355
    %v364 = vpack.c.bf16 %v356, %v356
    %v365 = vpack.c.bf16 %v357, %v357
    %v366 = vpack.c.bf16 %v358, %v358
    %v367 = vpack.c.bf16 %v359, %v359
    %v368 = vpack.c.bf16 %v360, %v360
    %v369 = vpack.c.bf16 %v361, %v361
    %v370 = vpack.c.bf16 %v362, %v362
    %v371 = vpack.c.bf16 %v363, %v363
    %v372 = vld [vmem:[#allocation4] sm:$0xff]
    %v373 = vld [vmem:[#allocation4 + $0x8] sm:$0xff]
    %v374 = vld [vmem:[#allocation4 + $0x10] sm:$0xff]
    %v375 = vld [vmem:[#allocation4 + $0x18] sm:$0xff]
    %v376 = vld [vmem:[#allocation4 + $0x20] sm:$0xff]
    %v377 = vld [vmem:[#allocation4 + $0x28] sm:$0xff]
    %v378 = vld [vmem:[#allocation4 + $0x30] sm:$0xff]
    %v379 = vld [vmem:[#allocation4 + $0x38] sm:$0xff]
    %v380 = vld [vmem:[#allocation4 + $0x40] sm:$0xff]
    %v381 = vld [vmem:[#allocation4 + $0x48] sm:$0xff]
    %v382 = vld [vmem:[#allocation4 + $0x50] sm:$0xff]
    %v383 = vld [vmem:[#allocation4 + $0x58] sm:$0xff]
    %v384 = vld [vmem:[#allocation4 + $0x60] sm:$0xff]
    %v385 = vld [vmem:[#allocation4 + $0x68] sm:$0xff]
    %v386 = vld [vmem:[#allocation4 + $0x70] sm:$0xff]
    %v387 = vld [vmem:[#allocation4 + $0x78] sm:$0xff]
    %v388 = vld [vmem:[#allocation4 + $0x80] sm:$0xff]
    %v389 = vld [vmem:[#allocation4 + $0x88] sm:$0xff]
    %v390 = vld [vmem:[#allocation4 + $0x90] sm:$0xff]
    %v391 = vld [vmem:[#allocation4 + $0x98] sm:$0xff]
    %v392 = vld [vmem:[#allocation4 + $0xa0] sm:$0xff]
    %v393 = vld [vmem:[#allocation4 + $0xa8] sm:$0xff]
    %v394 = vld [vmem:[#allocation4 + $0xb0] sm:$0xff]
    %v395 = vld [vmem:[#allocation4 + $0xb8] sm:$0xff]
    %v396 = vld [vmem:[#allocation4 + $0xc0] sm:$0xff]
    %v397 = vld [vmem:[#allocation4 + $0xc8] sm:$0xff]
    %v398 = vld [vmem:[#allocation4 + $0xd0] sm:$0xff]
    %v399 = vld [vmem:[#allocation4 + $0xd8] sm:$0xff]
    %v400 = vld [vmem:[#allocation4 + $0xe0] sm:$0xff]
    %v401 = vld [vmem:[#allocation4 + $0xe8] sm:$0xff]
    %v402 = vld [vmem:[#allocation4 + $0xf0] sm:$0xff]
    %v403 = vld [vmem:[#allocation4 + $0xf8] sm:$0xff]
    %v404 = vld [vmem:[#allocation4 + $0x100] sm:$0xff]
    %v405 = vld [vmem:[#allocation4 + $0x108] sm:$0xff]
    %v406 = vld [vmem:[#allocation4 + $0x110] sm:$0xff]
    %v407 = vld [vmem:[#allocation4 + $0x118] sm:$0xff]
    %v408 = vld [vmem:[#allocation4 + $0x120] sm:$0xff]
    %v409 = vld [vmem:[#allocation4 + $0x128] sm:$0xff]
    %v410 = vld [vmem:[#allocation4 + $0x130] sm:$0xff]
    %v411 = vld [vmem:[#allocation4 + $0x138] sm:$0xff]
    %v412 = vld [vmem:[#allocation4 + $0x140] sm:$0xff]
    %v413 = vld [vmem:[#allocation4 + $0x148] sm:$0xff]
    %v414 = vld [vmem:[#allocation4 + $0x150] sm:$0xff]
    %v415 = vld [vmem:[#allocation4 + $0x158] sm:$0xff]
    %v416 = vld [vmem:[#allocation4 + $0x160] sm:$0xff]
    %v417 = vld [vmem:[#allocation4 + $0x168] sm:$0xff]
    %v418 = vld [vmem:[#allocation4 + $0x170] sm:$0xff]
    %v419 = vld [vmem:[#allocation4 + $0x178] sm:$0xff]
    %v420 = vld [vmem:[#allocation4 + $0x180] sm:$0xff]
    %v421 = vld [vmem:[#allocation4 + $0x188] sm:$0xff]
    %v422 = vld [vmem:[#allocation4 + $0x190] sm:$0xff]
    %v423 = vld [vmem:[#allocation4 + $0x198] sm:$0xff]
    %v424 = vld [vmem:[#allocation4 + $0x1a0] sm:$0xff]
    %v425 = vld [vmem:[#allocation4 + $0x1a8] sm:$0xff]
    %v426 = vld [vmem:[#allocation4 + $0x1b0] sm:$0xff]
    %v427 = vld [vmem:[#allocation4 + $0x1b8] sm:$0xff]
    %v428 = vld [vmem:[#allocation4 + $0x1c0] sm:$0xff]
    %v429 = vld [vmem:[#allocation4 + $0x1c8] sm:$0xff]
    %v430 = vld [vmem:[#allocation4 + $0x1d0] sm:$0xff]
    %v431 = vld [vmem:[#allocation4 + $0x1d8] sm:$0xff]
    %v432 = vld [vmem:[#allocation4 + $0x1e0] sm:$0xff]
    %v433 = vld [vmem:[#allocation4 + $0x1e8] sm:$0xff]
    %v434 = vld [vmem:[#allocation4 + $0x1f0] sm:$0xff]
    %v435 = vld [vmem:[#allocation4 + $0x1f8] sm:$0xff]
    %v436 = vld [vmem:[#allocation4 + $0x200] sm:$0xff]
    %v437 = vld [vmem:[#allocation4 + $0x208] sm:$0xff]
    %v438 = vld [vmem:[#allocation4 + $0x210] sm:$0xff]
    %v439 = vld [vmem:[#allocation4 + $0x218] sm:$0xff]
    %v440 = vld [vmem:[#allocation4 + $0x220] sm:$0xff]
    %v441 = vld [vmem:[#allocation4 + $0x228] sm:$0xff]
    %v442 = vld [vmem:[#allocation4 + $0x230] sm:$0xff]
    %v443 = vld [vmem:[#allocation4 + $0x238] sm:$0xff]
    %v444 = vld [vmem:[#allocation4 + $0x240] sm:$0xff]
    %v445 = vld [vmem:[#allocation4 + $0x248] sm:$0xff]
    %v446 = vld [vmem:[#allocation4 + $0x250] sm:$0xff]
    %v447 = vld [vmem:[#allocation4 + $0x258] sm:$0xff]
    %v448 = vld [vmem:[#allocation4 + $0x260] sm:$0xff]
    %v449 = vld [vmem:[#allocation4 + $0x268] sm:$0xff]
    %v450 = vld [vmem:[#allocation4 + $0x270] sm:$0xff]
    %v451 = vld [vmem:[#allocation4 + $0x278] sm:$0xff]
    %v452 = vld [vmem:[#allocation4 + $0x280] sm:$0xff]
    %v453 = vld [vmem:[#allocation4 + $0x288] sm:$0xff]
    %v454 = vld [vmem:[#allocation4 + $0x290] sm:$0xff]
    %v455 = vld [vmem:[#allocation4 + $0x298] sm:$0xff]
    %v456 = vld [vmem:[#allocation4 + $0x2a0] sm:$0xff]
    %v457 = vld [vmem:[#allocation4 + $0x2a8] sm:$0xff]
    %v458 = vld [vmem:[#allocation4 + $0x2b0] sm:$0xff]
    %v459 = vld [vmem:[#allocation4 + $0x2b8] sm:$0xff]
    %v460 = vld [vmem:[#allocation4 + $0x2c0] sm:$0xff]
    %v461 = vld [vmem:[#allocation4 + $0x2c8] sm:$0xff]
    %v462 = vld [vmem:[#allocation4 + $0x2d0] sm:$0xff]
    %v463 = vld [vmem:[#allocation4 + $0x2d8] sm:$0xff]
    %v464 = vld [vmem:[#allocation4 + $0x2e0] sm:$0xff]
    %v465 = vld [vmem:[#allocation4 + $0x2e8] sm:$0xff]
    %v466 = vld [vmem:[#allocation4 + $0x2f0] sm:$0xff]
    %v467 = vld [vmem:[#allocation4 + $0x2f8] sm:$0xff]
    %v468 = vld [vmem:[#allocation4 + $0x300] sm:$0xff]
    %v469 = vld [vmem:[#allocation4 + $0x308] sm:$0xff]
    %v470 = vld [vmem:[#allocation4 + $0x310] sm:$0xff]
    %v471 = vld [vmem:[#allocation4 + $0x318] sm:$0xff]
    %v472 = vld [vmem:[#allocation4 + $0x320] sm:$0xff]
    %v473 = vld [vmem:[#allocation4 + $0x328] sm:$0xff]
    %v474 = vld [vmem:[#allocation4 + $0x330] sm:$0xff]
    %v475 = vld [vmem:[#allocation4 + $0x338] sm:$0xff]
    %v476 = vld [vmem:[#allocation4 + $0x340] sm:$0xff]
    %v477 = vld [vmem:[#allocation4 + $0x348] sm:$0xff]
    %v478 = vld [vmem:[#allocation4 + $0x350] sm:$0xff]
    %v479 = vld [vmem:[#allocation4 + $0x358] sm:$0xff]
    %v480 = vld [vmem:[#allocation4 + $0x360] sm:$0xff]
    %v481 = vld [vmem:[#allocation4 + $0x368] sm:$0xff]
    %v482 = vld [vmem:[#allocation4 + $0x370] sm:$0xff]
    %v483 = vld [vmem:[#allocation4 + $0x378] sm:$0xff]
    %v484 = vld [vmem:[#allocation4 + $0x380] sm:$0xff]
    %v485 = vld [vmem:[#allocation4 + $0x388] sm:$0xff]
    %v486 = vld [vmem:[#allocation4 + $0x390] sm:$0xff]
    %v487 = vld [vmem:[#allocation4 + $0x398] sm:$0xff]
    %v488 = vld [vmem:[#allocation4 + $0x3a0] sm:$0xff]
    %v489 = vld [vmem:[#allocation4 + $0x3a8] sm:$0xff]
    %v490 = vld [vmem:[#allocation4 + $0x3b0] sm:$0xff]
    %v491 = vld [vmem:[#allocation4 + $0x3b8] sm:$0xff]
    %v492 = vld [vmem:[#allocation4 + $0x3c0] sm:$0xff]
    %v493 = vld [vmem:[#allocation4 + $0x3c8] sm:$0xff]
    %v494 = vld [vmem:[#allocation4 + $0x3d0] sm:$0xff]
    %v495 = vld [vmem:[#allocation4 + $0x3d8] sm:$0xff]
    %v496 = vld [vmem:[#allocation4 + $0x3e0] sm:$0xff]
    %v497 = vld [vmem:[#allocation4 + $0x3e8] sm:$0xff]
    %v498 = vld [vmem:[#allocation4 + $0x3f0] sm:$0xff]
    %v499 = vld [vmem:[#allocation4 + $0x3f8] sm:$0xff]
    %v500 = vld [vmem:[#allocation4 + $0x400] sm:$0xff]
    %v501 = vld [vmem:[#allocation4 + $0x408] sm:$0xff]
    %v502 = vld [vmem:[#allocation4 + $0x410] sm:$0xff]
    %v503 = vld [vmem:[#allocation4 + $0x418] sm:$0xff]
    %v504 = vld [vmem:[#allocation4 + $0x420] sm:$0xff]
    %v505 = vld [vmem:[#allocation4 + $0x428] sm:$0xff]
    %v506 = vld [vmem:[#allocation4 + $0x430] sm:$0xff]
    %v507 = vld [vmem:[#allocation4 + $0x438] sm:$0xff]
    %v508 = vld [vmem:[#allocation4 + $0x440] sm:$0xff]
    %v509 = vld [vmem:[#allocation4 + $0x448] sm:$0xff]
    %v510 = vld [vmem:[#allocation4 + $0x450] sm:$0xff]
    %v511 = vld [vmem:[#allocation4 + $0x458] sm:$0xff]
    %v512 = vld [vmem:[#allocation4 + $0x460] sm:$0xff]
    %v513 = vld [vmem:[#allocation4 + $0x468] sm:$0xff]
    %v514 = vld [vmem:[#allocation4 + $0x470] sm:$0xff]
    %v515 = vld [vmem:[#allocation4 + $0x478] sm:$0xff]
    %v516 = vld [vmem:[#allocation4 + $0x480] sm:$0xff]
    %v517 = vld [vmem:[#allocation4 + $0x488] sm:$0xff]
    %v518 = vld [vmem:[#allocation4 + $0x490] sm:$0xff]
    %v519 = vld [vmem:[#allocation4 + $0x498] sm:$0xff]
    %v520 = vld [vmem:[#allocation4 + $0x4a0] sm:$0xff]
    %v521 = vld [vmem:[#allocation4 + $0x4a8] sm:$0xff]
    %v522 = vld [vmem:[#allocation4 + $0x4b0] sm:$0xff]
    %v523 = vld [vmem:[#allocation4 + $0x4b8] sm:$0xff]
    %v524 = vld [vmem:[#allocation4 + $0x4c0] sm:$0xff]
    %v525 = vld [vmem:[#allocation4 + $0x4c8] sm:$0xff]
    %v526 = vld [vmem:[#allocation4 + $0x4d0] sm:$0xff]
    %v527 = vld [vmem:[#allocation4 + $0x4d8] sm:$0xff]
    %v528 = vld [vmem:[#allocation4 + $0x4e0] sm:$0xff]
    %v529 = vld [vmem:[#allocation4 + $0x4e8] sm:$0xff]
    %v530 = vld [vmem:[#allocation4 + $0x4f0] sm:$0xff]
    %v531 = vld [vmem:[#allocation4 + $0x4f8] sm:$0xff]
    %v532 = vld [vmem:[#allocation4 + $0x500] sm:$0xff]
    %v533 = vld [vmem:[#allocation4 + $0x508] sm:$0xff]
    %v534 = vld [vmem:[#allocation4 + $0x510] sm:$0xff]
    %v535 = vld [vmem:[#allocation4 + $0x518] sm:$0xff]
    %v536 = vld [vmem:[#allocation4 + $0x520] sm:$0xff]
    %v537 = vld [vmem:[#allocation4 + $0x528] sm:$0xff]
    %v538 = vld [vmem:[#allocation4 + $0x530] sm:$0xff]
    %v539 = vld [vmem:[#allocation4 + $0x538] sm:$0xff]
    %v540 = vld [vmem:[#allocation4 + $0x540] sm:$0xff]
    %v541 = vld [vmem:[#allocation4 + $0x548] sm:$0xff]
    %v542 = vld [vmem:[#allocation4 + $0x550] sm:$0xff]
    %v543 = vld [vmem:[#allocation4 + $0x558] sm:$0xff]
    %v544 = vld [vmem:[#allocation4 + $0x560] sm:$0xff]
    %v545 = vld [vmem:[#allocation4 + $0x568] sm:$0xff]
    %v546 = vld [vmem:[#allocation4 + $0x570] sm:$0xff]
    %v547 = vld [vmem:[#allocation4 + $0x578] sm:$0xff]
    %v548 = vld [vmem:[#allocation4 + $0x580] sm:$0xff]
    %v549 = vld [vmem:[#allocation4 + $0x588] sm:$0xff]
    %v550 = vld [vmem:[#allocation4 + $0x590] sm:$0xff]
    %v551 = vld [vmem:[#allocation4 + $0x598] sm:$0xff]
    %v552 = vld [vmem:[#allocation4 + $0x5a0] sm:$0xff]
    %v553 = vld [vmem:[#allocation4 + $0x5a8] sm:$0xff]
    %v554 = vld [vmem:[#allocation4 + $0x5b0] sm:$0xff]
    %v555 = vld [vmem:[#allocation4 + $0x5b8] sm:$0xff]
    %v556 = vld [vmem:[#allocation4 + $0x5c0] sm:$0xff]
    %v557 = vld [vmem:[#allocation4 + $0x5c8] sm:$0xff]
    %v558 = vld [vmem:[#allocation4 + $0x5d0] sm:$0xff]
    %v559 = vld [vmem:[#allocation4 + $0x5d8] sm:$0xff]
    %v560 = vld [vmem:[#allocation4 + $0x5e0] sm:$0xff]
    %v561 = vld [vmem:[#allocation4 + $0x5e8] sm:$0xff]
    %v562 = vld [vmem:[#allocation4 + $0x5f0] sm:$0xff]
    %v563 = vld [vmem:[#allocation4 + $0x5f8] sm:$0xff]
    %v564 = vld [vmem:[#allocation4 + $0x600] sm:$0xff]
    %v565 = vld [vmem:[#allocation4 + $0x608] sm:$0xff]
    %v566 = vld [vmem:[#allocation4 + $0x610] sm:$0xff]
    %v567 = vld [vmem:[#allocation4 + $0x618] sm:$0xff]
    %v568 = vld [vmem:[#allocation4 + $0x620] sm:$0xff]
    %v569 = vld [vmem:[#allocation4 + $0x628] sm:$0xff]
    %v570 = vld [vmem:[#allocation4 + $0x630] sm:$0xff]
    %v571 = vld [vmem:[#allocation4 + $0x638] sm:$0xff]
    %v572 = vld [vmem:[#allocation4 + $0x640] sm:$0xff]
    %v573 = vld [vmem:[#allocation4 + $0x648] sm:$0xff]
    %v574 = vld [vmem:[#allocation4 + $0x650] sm:$0xff]
    %v575 = vld [vmem:[#allocation4 + $0x658] sm:$0xff]
    %v576 = vld [vmem:[#allocation4 + $0x660] sm:$0xff]
    %v577 = vld [vmem:[#allocation4 + $0x668] sm:$0xff]
    %v578 = vld [vmem:[#allocation4 + $0x670] sm:$0xff]
    %v579 = vld [vmem:[#allocation4 + $0x678] sm:$0xff]
    %v580 = vld [vmem:[#allocation4 + $0x680] sm:$0xff]
    %v581 = vld [vmem:[#allocation4 + $0x688] sm:$0xff]
    %v582 = vld [vmem:[#allocation4 + $0x690] sm:$0xff]
    %v583 = vld [vmem:[#allocation4 + $0x698] sm:$0xff]
    %v584 = vld [vmem:[#allocation4 + $0x6a0] sm:$0xff]
    %v585 = vld [vmem:[#allocation4 + $0x6a8] sm:$0xff]
    %v586 = vld [vmem:[#allocation4 + $0x6b0] sm:$0xff]
    %v587 = vld [vmem:[#allocation4 + $0x6b8] sm:$0xff]
    %v588 = vld [vmem:[#allocation4 + $0x6c0] sm:$0xff]
    %v589 = vld [vmem:[#allocation4 + $0x6c8] sm:$0xff]
    %v590 = vld [vmem:[#allocation4 + $0x6d0] sm:$0xff]
    %v591 = vld [vmem:[#allocation4 + $0x6d8] sm:$0xff]
    %v592 = vld [vmem:[#allocation4 + $0x6e0] sm:$0xff]
    %v593 = vld [vmem:[#allocation4 + $0x6e8] sm:$0xff]
    %v594 = vld [vmem:[#allocation4 + $0x6f0] sm:$0xff]
    %v595 = vld [vmem:[#allocation4 + $0x6f8] sm:$0xff]
    %v596 = vld [vmem:[#allocation4 + $0x700] sm:$0xff]
    %v597 = vld [vmem:[#allocation4 + $0x708] sm:$0xff]
    %v598 = vld [vmem:[#allocation4 + $0x710] sm:$0xff]
    %v599 = vld [vmem:[#allocation4 + $0x718] sm:$0xff]
    %v600 = vld [vmem:[#allocation4 + $0x720] sm:$0xff]
    %v601 = vld [vmem:[#allocation4 + $0x728] sm:$0xff]
    %v602 = vld [vmem:[#allocation4 + $0x730] sm:$0xff]
    %v603 = vld [vmem:[#allocation4 + $0x738] sm:$0xff]
    %v604 = vld [vmem:[#allocation4 + $0x740] sm:$0xff]
    %v605 = vld [vmem:[#allocation4 + $0x748] sm:$0xff]
    %v606 = vld [vmem:[#allocation4 + $0x750] sm:$0xff]
    %v607 = vld [vmem:[#allocation4 + $0x758] sm:$0xff]
    %v608 = vld [vmem:[#allocation4 + $0x760] sm:$0xff]
    %v609 = vld [vmem:[#allocation4 + $0x768] sm:$0xff]
    %v610 = vld [vmem:[#allocation4 + $0x770] sm:$0xff]
    %v611 = vld [vmem:[#allocation4 + $0x778] sm:$0xff]
    %v612 = vld [vmem:[#allocation4 + $0x780] sm:$0xff]
    %v613 = vld [vmem:[#allocation4 + $0x788] sm:$0xff]
    %v614 = vld [vmem:[#allocation4 + $0x790] sm:$0xff]
    %v615 = vld [vmem:[#allocation4 + $0x798] sm:$0xff]
    %v616 = vld [vmem:[#allocation4 + $0x7a0] sm:$0xff]
    %v617 = vld [vmem:[#allocation4 + $0x7a8] sm:$0xff]
    %v618 = vld [vmem:[#allocation4 + $0x7b0] sm:$0xff]
    %v619 = vld [vmem:[#allocation4 + $0x7b8] sm:$0xff]
    %v620 = vld [vmem:[#allocation4 + $0x7c0] sm:$0xff]
    %v621 = vld [vmem:[#allocation4 + $0x7c8] sm:$0xff]
    %v622 = vld [vmem:[#allocation4 + $0x7d0] sm:$0xff]
    %v623 = vld [vmem:[#allocation4 + $0x7d8] sm:$0xff]
    %v624 = vld [vmem:[#allocation4 + $0x7e0] sm:$0xff]
    %v625 = vld [vmem:[#allocation4 + $0x7e8] sm:$0xff]
    %v626 = vld [vmem:[#allocation4 + $0x7f0] sm:$0xff]
    %v627 = vld [vmem:[#allocation4 + $0x7f8] sm:$0xff]
    %v628 = vld [vmem:[%s4] sm:$0xf]
    %v630 = vperm.slane %v628, 0
    %v631 = vperm.slane %v628, 1
    %v632 = vperm.slane %v628, 2
    %v633 = vperm.slane %v628, 3
    %v894 = vunpack.c.l.b16 %v372
    %v895 = vunpack.c.h.b16 %v372
    %v896 = vunpack.c.l.b16 %v373
    %v897 = vunpack.c.h.b16 %v373
    %v898 = vunpack.c.l.b16 %v374
    %v899 = vunpack.c.h.b16 %v374
    %v900 = vunpack.c.l.b16 %v375
    %v901 = vunpack.c.h.b16 %v375
    %v902 = vunpack.c.l.b16 %v376
    %v903 = vunpack.c.h.b16 %v376
    %v904 = vunpack.c.l.b16 %v377
    %v905 = vunpack.c.h.b16 %v377
    %v906 = vunpack.c.l.b16 %v378
    %v907 = vunpack.c.h.b16 %v378
    %v908 = vunpack.c.l.b16 %v379
    %v909 = vunpack.c.h.b16 %v379
    %v910 = vunpack.c.l.b16 %v380
    %v911 = vunpack.c.h.b16 %v380
    %v912 = vunpack.c.l.b16 %v381
    %v913 = vunpack.c.h.b16 %v381
    %v914 = vunpack.c.l.b16 %v382
    %v915 = vunpack.c.h.b16 %v382
    %v916 = vunpack.c.l.b16 %v383
    %v917 = vunpack.c.h.b16 %v383
    %v918 = vunpack.c.l.b16 %v384
    %v919 = vunpack.c.h.b16 %v384
    %v920 = vunpack.c.l.b16 %v385
    %v921 = vunpack.c.h.b16 %v385
    %v922 = vunpack.c.l.b16 %v386
    %v923 = vunpack.c.h.b16 %v386
    %v924 = vunpack.c.l.b16 %v387
    %v925 = vunpack.c.h.b16 %v387
    %v926 = vunpack.c.l.b16 %v388
    %v927 = vunpack.c.h.b16 %v388
    %v928 = vunpack.c.l.b16 %v389
    %v929 = vunpack.c.h.b16 %v389
    %v930 = vunpack.c.l.b16 %v390
    %v931 = vunpack.c.h.b16 %v390
    %v932 = vunpack.c.l.b16 %v391
    %v933 = vunpack.c.h.b16 %v391
    %v934 = vunpack.c.l.b16 %v392
    %v935 = vunpack.c.h.b16 %v392
    %v936 = vunpack.c.l.b16 %v393
    %v937 = vunpack.c.h.b16 %v393
    %v938 = vunpack.c.l.b16 %v394
    %v939 = vunpack.c.h.b16 %v394
    %v940 = vunpack.c.l.b16 %v395
    %v941 = vunpack.c.h.b16 %v395
    %v942 = vunpack.c.l.b16 %v396
    %v943 = vunpack.c.h.b16 %v396
    %v944 = vunpack.c.l.b16 %v397
    %v945 = vunpack.c.h.b16 %v397
    %v946 = vunpack.c.l.b16 %v398
    %v947 = vunpack.c.h.b16 %v398
    %v948 = vunpack.c.l.b16 %v399
    %v949 = vunpack.c.h.b16 %v399
    %v950 = vunpack.c.l.b16 %v400
    %v951 = vunpack.c.h.b16 %v400
    %v952 = vunpack.c.l.b16 %v401
    %v953 = vunpack.c.h.b16 %v401
    %v954 = vunpack.c.l.b16 %v402
    %v955 = vunpack.c.h.b16 %v402
    %v956 = vunpack.c.l.b16 %v403
    %v957 = vunpack.c.h.b16 %v403
    %v958 = vunpack.c.l.b16 %v404
    %v959 = vunpack.c.h.b16 %v404
    %v960 = vunpack.c.l.b16 %v405
    %v961 = vunpack.c.h.b16 %v405
    %v962 = vunpack.c.l.b16 %v406
    %v963 = vunpack.c.h.b16 %v406
    %v964 = vunpack.c.l.b16 %v407
    %v965 = vunpack.c.h.b16 %v407
    %v966 = vunpack.c.l.b16 %v408
    %v967 = vunpack.c.h.b16 %v408
    %v968 = vunpack.c.l.b16 %v409
    %v969 = vunpack.c.h.b16 %v409
    %v970 = vunpack.c.l.b16 %v410
    %v971 = vunpack.c.h.b16 %v410
    %v972 = vunpack.c.l.b16 %v411
    %v973 = vunpack.c.h.b16 %v411
    %v974 = vunpack.c.l.b16 %v412
    %v975 = vunpack.c.h.b16 %v412
    %v976 = vunpack.c.l.b16 %v413
    %v977 = vunpack.c.h.b16 %v413
    %v978 = vunpack.c.l.b16 %v414
    %v979 = vunpack.c.h.b16 %v414
    %v980 = vunpack.c.l.b16 %v415
    %v981 = vunpack.c.h.b16 %v415
    %v982 = vunpack.c.l.b16 %v416
    %v983 = vunpack.c.h.b16 %v416
    %v984 = vunpack.c.l.b16 %v417
    %v985 = vunpack.c.h.b16 %v417
    %v986 = vunpack.c.l.b16 %v418
    %v987 = vunpack.c.h.b16 %v418
    %v988 = vunpack.c.l.b16 %v419
    %v989 = vunpack.c.h.b16 %v419
    %v990 = vunpack.c.l.b16 %v420
    %v991 = vunpack.c.h.b16 %v420
    %v992 = vunpack.c.l.b16 %v421
    %v993 = vunpack.c.h.b16 %v421
    %v994 = vunpack.c.l.b16 %v422
    %v995 = vunpack.c.h.b16 %v422
    %v996 = vunpack.c.l.b16 %v423
    %v997 = vunpack.c.h.b16 %v423
    %v998 = vunpack.c.l.b16 %v424
    %v999 = vunpack.c.h.b16 %v424
    %v1000 = vunpack.c.l.b16 %v425
    %v1001 = vunpack.c.h.b16 %v425
    %v1002 = vunpack.c.l.b16 %v426
    %v1003 = vunpack.c.h.b16 %v426
    %v1004 = vunpack.c.l.b16 %v427
    %v1005 = vunpack.c.h.b16 %v427
    %v1006 = vunpack.c.l.b16 %v428
    %v1007 = vunpack.c.h.b16 %v428
    %v1008 = vunpack.c.l.b16 %v429
    %v1009 = vunpack.c.h.b16 %v429
    %v1010 = vunpack.c.l.b16 %v430
    %v1011 = vunpack.c.h.b16 %v430
    %v1012 = vunpack.c.l.b16 %v431
    %v1013 = vunpack.c.h.b16 %v431
    %v1014 = vunpack.c.l.b16 %v432
    %v1015 = vunpack.c.h.b16 %v432
    %v1016 = vunpack.c.l.b16 %v433
    %v1017 = vunpack.c.h.b16 %v433
    %v1018 = vunpack.c.l.b16 %v434
    %v1019 = vunpack.c.h.b16 %v434
    %v1020 = vunpack.c.l.b16 %v435
    %v1021 = vunpack.c.h.b16 %v435
    %v1022 = vunpack.c.l.b16 %v436
    %v1023 = vunpack.c.h.b16 %v436
    %v1024 = vunpack.c.l.b16 %v437
    %v1025 = vunpack.c.h.b16 %v437
    %v1026 = vunpack.c.l.b16 %v438
    %v1027 = vunpack.c.h.b16 %v438
    %v1028 = vunpack.c.l.b16 %v439
    %v1029 = vunpack.c.h.b16 %v439
    %v1030 = vunpack.c.l.b16 %v440
    %v1031 = vunpack.c.h.b16 %v440
    %v1032 = vunpack.c.l.b16 %v441
    %v1033 = vunpack.c.h.b16 %v441
    %v1034 = vunpack.c.l.b16 %v442
    %v1035 = vunpack.c.h.b16 %v442
    %v1036 = vunpack.c.l.b16 %v443
    %v1037 = vunpack.c.h.b16 %v443
    %v1038 = vunpack.c.l.b16 %v444
    %v1039 = vunpack.c.h.b16 %v444
    %v1040 = vunpack.c.l.b16 %v445
    %v1041 = vunpack.c.h.b16 %v445
    %v1042 = vunpack.c.l.b16 %v446
    %v1043 = vunpack.c.h.b16 %v446
    %v1044 = vunpack.c.l.b16 %v447
    %v1045 = vunpack.c.h.b16 %v447
    %v1046 = vunpack.c.l.b16 %v448
    %v1047 = vunpack.c.h.b16 %v448
    %v1048 = vunpack.c.l.b16 %v449
    %v1049 = vunpack.c.h.b16 %v449
    %v1050 = vunpack.c.l.b16 %v450
    %v1051 = vunpack.c.h.b16 %v450
    %v1052 = vunpack.c.l.b16 %v451
    %v1053 = vunpack.c.h.b16 %v451
    %v1054 = vunpack.c.l.b16 %v452
    %v1055 = vunpack.c.h.b16 %v452
    %v1056 = vunpack.c.l.b16 %v453
    %v1057 = vunpack.c.h.b16 %v453
    %v1058 = vunpack.c.l.b16 %v454
    %v1059 = vunpack.c.h.b16 %v454
    %v1060 = vunpack.c.l.b16 %v455
    %v1061 = vunpack.c.h.b16 %v455
    %v1062 = vunpack.c.l.b16 %v456
    %v1063 = vunpack.c.h.b16 %v456
    %v1064 = vunpack.c.l.b16 %v457
    %v1065 = vunpack.c.h.b16 %v457
    %v1066 = vunpack.c.l.b16 %v458
    %v1067 = vunpack.c.h.b16 %v458
    %v1068 = vunpack.c.l.b16 %v459
    %v1069 = vunpack.c.h.b16 %v459
    %v1070 = vunpack.c.l.b16 %v460
    %v1071 = vunpack.c.h.b16 %v460
    %v1072 = vunpack.c.l.b16 %v461
    %v1073 = vunpack.c.h.b16 %v461
    %v1074 = vunpack.c.l.b16 %v462
    %v1075 = vunpack.c.h.b16 %v462
    %v1076 = vunpack.c.l.b16 %v463
    %v1077 = vunpack.c.h.b16 %v463
    %v1078 = vunpack.c.l.b16 %v464
    %v1079 = vunpack.c.h.b16 %v464
    %v1080 = vunpack.c.l.b16 %v465
    %v1081 = vunpack.c.h.b16 %v465
    %v1082 = vunpack.c.l.b16 %v466
    %v1083 = vunpack.c.h.b16 %v466
    %v1084 = vunpack.c.l.b16 %v467
    %v1085 = vunpack.c.h.b16 %v467
    %v1086 = vunpack.c.l.b16 %v468
    %v1087 = vunpack.c.h.b16 %v468
    %v1088 = vunpack.c.l.b16 %v469
    %v1089 = vunpack.c.h.b16 %v469
    %v1090 = vunpack.c.l.b16 %v470
    %v1091 = vunpack.c.h.b16 %v470
    %v1092 = vunpack.c.l.b16 %v471
    %v1093 = vunpack.c.h.b16 %v471
    %v1094 = vunpack.c.l.b16 %v472
    %v1095 = vunpack.c.h.b16 %v472
    %v1096 = vunpack.c.l.b16 %v473
    %v1097 = vunpack.c.h.b16 %v473
    %v1098 = vunpack.c.l.b16 %v474
    %v1099 = vunpack.c.h.b16 %v474
    %v1100 = vunpack.c.l.b16 %v475
    %v1101 = vunpack.c.h.b16 %v475
    %v1102 = vunpack.c.l.b16 %v476
    %v1103 = vunpack.c.h.b16 %v476
    %v1104 = vunpack.c.l.b16 %v477
    %v1105 = vunpack.c.h.b16 %v477
    %v1106 = vunpack.c.l.b16 %v478
    %v1107 = vunpack.c.h.b16 %v478
    %v1108 = vunpack.c.l.b16 %v479
    %v1109 = vunpack.c.h.b16 %v479
    %v1110 = vunpack.c.l.b16 %v480
    %v1111 = vunpack.c.h.b16 %v480
    %v1112 = vunpack.c.l.b16 %v481
    %v1113 = vunpack.c.h.b16 %v481
    %v1114 = vunpack.c.l.b16 %v482
    %v1115 = vunpack.c.h.b16 %v482
    %v1116 = vunpack.c.l.b16 %v483
    %v1117 = vunpack.c.h.b16 %v483
    %v1118 = vunpack.c.l.b16 %v484
    %v1119 = vunpack.c.h.b16 %v484
    %v1120 = vunpack.c.l.b16 %v485
    %v1121 = vunpack.c.h.b16 %v485
    %v1122 = vunpack.c.l.b16 %v486
    %v1123 = vunpack.c.h.b16 %v486
    %v1124 = vunpack.c.l.b16 %v487
    %v1125 = vunpack.c.h.b16 %v487
    %v1126 = vunpack.c.l.b16 %v488
    %v1127 = vunpack.c.h.b16 %v488
    %v1128 = vunpack.c.l.b16 %v489
    %v1129 = vunpack.c.h.b16 %v489
    %v1130 = vunpack.c.l.b16 %v490
    %v1131 = vunpack.c.h.b16 %v490
    %v1132 = vunpack.c.l.b16 %v491
    %v1133 = vunpack.c.h.b16 %v491
    %v1134 = vunpack.c.l.b16 %v492
    %v1135 = vunpack.c.h.b16 %v492
    %v1136 = vunpack.c.l.b16 %v493
    %v1137 = vunpack.c.h.b16 %v493
    %v1138 = vunpack.c.l.b16 %v494
    %v1139 = vunpack.c.h.b16 %v494
    %v1140 = vunpack.c.l.b16 %v495
    %v1141 = vunpack.c.h.b16 %v495
    %v1142 = vunpack.c.l.b16 %v496
    %v1143 = vunpack.c.h.b16 %v496
    %v1144 = vunpack.c.l.b16 %v497
    %v1145 = vunpack.c.h.b16 %v497
    %v1146 = vunpack.c.l.b16 %v498
    %v1147 = vunpack.c.h.b16 %v498
    %v1148 = vunpack.c.l.b16 %v499
    %v1149 = vunpack.c.h.b16 %v499
    %v1150 = vunpack.c.l.b16 %v500
    %v1151 = vunpack.c.h.b16 %v500
    %v1152 = vunpack.c.l.b16 %v501
    %v1153 = vunpack.c.h.b16 %v501
    %v1154 = vunpack.c.l.b16 %v502
    %v1155 = vunpack.c.h.b16 %v502
    %v1156 = vunpack.c.l.b16 %v503
    %v1157 = vunpack.c.h.b16 %v503
    %v1158 = vunpack.c.l.b16 %v504
    %v1159 = vunpack.c.h.b16 %v504
    %v1160 = vunpack.c.l.b16 %v505
    %v1161 = vunpack.c.h.b16 %v505
    %v1162 = vunpack.c.l.b16 %v506
    %v1163 = vunpack.c.h.b16 %v506
    %v1164 = vunpack.c.l.b16 %v507
    %v1165 = vunpack.c.h.b16 %v507
    %v1166 = vunpack.c.l.b16 %v508
    %v1167 = vunpack.c.h.b16 %v508
    %v1168 = vunpack.c.l.b16 %v509
    %v1169 = vunpack.c.h.b16 %v509
    %v1170 = vunpack.c.l.b16 %v510
    %v1171 = vunpack.c.h.b16 %v510
    %v1172 = vunpack.c.l.b16 %v511
    %v1173 = vunpack.c.h.b16 %v511
    %v1174 = vunpack.c.l.b16 %v512
    %v1175 = vunpack.c.h.b16 %v512
    %v1176 = vunpack.c.l.b16 %v513
    %v1177 = vunpack.c.h.b16 %v513
    %v1178 = vunpack.c.l.b16 %v514
    %v1179 = vunpack.c.h.b16 %v514
    %v1180 = vunpack.c.l.b16 %v515
    %v1181 = vunpack.c.h.b16 %v515
    %v1182 = vunpack.c.l.b16 %v516
    %v1183 = vunpack.c.h.b16 %v516
    %v1184 = vunpack.c.l.b16 %v517
    %v1185 = vunpack.c.h.b16 %v517
    %v1186 = vunpack.c.l.b16 %v518
    %v1187 = vunpack.c.h.b16 %v518
    %v1188 = vunpack.c.l.b16 %v519
    %v1189 = vunpack.c.h.b16 %v519
    %v1190 = vunpack.c.l.b16 %v520
    %v1191 = vunpack.c.h.b16 %v520
    %v1192 = vunpack.c.l.b16 %v521
    %v1193 = vunpack.c.h.b16 %v521
    %v1194 = vunpack.c.l.b16 %v522
    %v1195 = vunpack.c.h.b16 %v522
    %v1196 = vunpack.c.l.b16 %v523
    %v1197 = vunpack.c.h.b16 %v523
    %v1198 = vunpack.c.l.b16 %v524
    %v1199 = vunpack.c.h.b16 %v524
    %v1200 = vunpack.c.l.b16 %v525
    %v1201 = vunpack.c.h.b16 %v525
    %v1202 = vunpack.c.l.b16 %v526
    %v1203 = vunpack.c.h.b16 %v526
    %v1204 = vunpack.c.l.b16 %v527
    %v1205 = vunpack.c.h.b16 %v527
    %v1206 = vunpack.c.l.b16 %v528
    %v1207 = vunpack.c.h.b16 %v528
    %v1208 = vunpack.c.l.b16 %v529
    %v1209 = vunpack.c.h.b16 %v529
    %v1210 = vunpack.c.l.b16 %v530
    %v1211 = vunpack.c.h.b16 %v530
    %v1212 = vunpack.c.l.b16 %v531
    %v1213 = vunpack.c.h.b16 %v531
    %v1214 = vunpack.c.l.b16 %v532
    %v1215 = vunpack.c.h.b16 %v532
    %v1216 = vunpack.c.l.b16 %v533
    %v1217 = vunpack.c.h.b16 %v533
    %v1218 = vunpack.c.l.b16 %v534
    %v1219 = vunpack.c.h.b16 %v534
    %v1220 = vunpack.c.l.b16 %v535
    %v1221 = vunpack.c.h.b16 %v535
    %v1222 = vunpack.c.l.b16 %v536
    %v1223 = vunpack.c.h.b16 %v536
    %v1224 = vunpack.c.l.b16 %v537
    %v1225 = vunpack.c.h.b16 %v537
    %v1226 = vunpack.c.l.b16 %v538
    %v1227 = vunpack.c.h.b16 %v538
    %v1228 = vunpack.c.l.b16 %v539
    %v1229 = vunpack.c.h.b16 %v539
    %v1230 = vunpack.c.l.b16 %v540
    %v1231 = vunpack.c.h.b16 %v540
    %v1232 = vunpack.c.l.b16 %v541
    %v1233 = vunpack.c.h.b16 %v541
    %v1234 = vunpack.c.l.b16 %v542
    %v1235 = vunpack.c.h.b16 %v542
    %v1236 = vunpack.c.l.b16 %v543
    %v1237 = vunpack.c.h.b16 %v543
    %v1238 = vunpack.c.l.b16 %v544
    %v1239 = vunpack.c.h.b16 %v544
    %v1240 = vunpack.c.l.b16 %v545
    %v1241 = vunpack.c.h.b16 %v545
    %v1242 = vunpack.c.l.b16 %v546
    %v1243 = vunpack.c.h.b16 %v546
    %v1244 = vunpack.c.l.b16 %v547
    %v1245 = vunpack.c.h.b16 %v547
    %v1246 = vunpack.c.l.b16 %v548
    %v1247 = vunpack.c.h.b16 %v548
    %v1248 = vunpack.c.l.b16 %v549
    %v1249 = vunpack.c.h.b16 %v549
    %v1250 = vunpack.c.l.b16 %v550
    %v1251 = vunpack.c.h.b16 %v550
    %v1252 = vunpack.c.l.b16 %v551
    %v1253 = vunpack.c.h.b16 %v551
    %v1254 = vunpack.c.l.b16 %v552
    %v1255 = vunpack.c.h.b16 %v552
    %v1256 = vunpack.c.l.b16 %v553
    %v1257 = vunpack.c.h.b16 %v553
    %v1258 = vunpack.c.l.b16 %v554
    %v1259 = vunpack.c.h.b16 %v554
    %v1260 = vunpack.c.l.b16 %v555
    %v1261 = vunpack.c.h.b16 %v555
    %v1262 = vunpack.c.l.b16 %v556
    %v1263 = vunpack.c.h.b16 %v556
    %v1264 = vunpack.c.l.b16 %v557
    %v1265 = vunpack.c.h.b16 %v557
    %v1266 = vunpack.c.l.b16 %v558
    %v1267 = vunpack.c.h.b16 %v558
    %v1268 = vunpack.c.l.b16 %v559
    %v1269 = vunpack.c.h.b16 %v559
    %v1270 = vunpack.c.l.b16 %v560
    %v1271 = vunpack.c.h.b16 %v560
    %v1272 = vunpack.c.l.b16 %v561
    %v1273 = vunpack.c.h.b16 %v561
    %v1274 = vunpack.c.l.b16 %v562
    %v1275 = vunpack.c.h.b16 %v562
    %v1276 = vunpack.c.l.b16 %v563
    %v1277 = vunpack.c.h.b16 %v563
    %v1278 = vunpack.c.l.b16 %v564
    %v1279 = vunpack.c.h.b16 %v564
    %v1280 = vunpack.c.l.b16 %v565
    %v1281 = vunpack.c.h.b16 %v565
    %v1282 = vunpack.c.l.b16 %v566
    %v1283 = vunpack.c.h.b16 %v566
    %v1284 = vunpack.c.l.b16 %v567
    %v1285 = vunpack.c.h.b16 %v567
    %v1286 = vunpack.c.l.b16 %v568
    %v1287 = vunpack.c.h.b16 %v568
    %v1288 = vunpack.c.l.b16 %v569
    %v1289 = vunpack.c.h.b16 %v569
    %v1290 = vunpack.c.l.b16 %v570
    %v1291 = vunpack.c.h.b16 %v570
    %v1292 = vunpack.c.l.b16 %v571
    %v1293 = vunpack.c.h.b16 %v571
    %v1294 = vunpack.c.l.b16 %v572
    %v1295 = vunpack.c.h.b16 %v572
    %v1296 = vunpack.c.l.b16 %v573
    %v1297 = vunpack.c.h.b16 %v573
    %v1298 = vunpack.c.l.b16 %v574
    %v1299 = vunpack.c.h.b16 %v574
    %v1300 = vunpack.c.l.b16 %v575
    %v1301 = vunpack.c.h.b16 %v575
    %v1302 = vunpack.c.l.b16 %v576
    %v1303 = vunpack.c.h.b16 %v576
    %v1304 = vunpack.c.l.b16 %v577
    %v1305 = vunpack.c.h.b16 %v577
    %v1306 = vunpack.c.l.b16 %v578
    %v1307 = vunpack.c.h.b16 %v578
    %v1308 = vunpack.c.l.b16 %v579
    %v1309 = vunpack.c.h.b16 %v579
    %v1310 = vunpack.c.l.b16 %v580
    %v1311 = vunpack.c.h.b16 %v580
    %v1312 = vunpack.c.l.b16 %v581
    %v1313 = vunpack.c.h.b16 %v581
    %v1314 = vunpack.c.l.b16 %v582
    %v1315 = vunpack.c.h.b16 %v582
    %v1316 = vunpack.c.l.b16 %v583
    %v1317 = vunpack.c.h.b16 %v583
    %v1318 = vunpack.c.l.b16 %v584
    %v1319 = vunpack.c.h.b16 %v584
    %v1320 = vunpack.c.l.b16 %v585
    %v1321 = vunpack.c.h.b16 %v585
    %v1322 = vunpack.c.l.b16 %v586
    %v1323 = vunpack.c.h.b16 %v586
    %v1324 = vunpack.c.l.b16 %v587
    %v1325 = vunpack.c.h.b16 %v587
    %v1326 = vunpack.c.l.b16 %v588
    %v1327 = vunpack.c.h.b16 %v588
    %v1328 = vunpack.c.l.b16 %v589
    %v1329 = vunpack.c.h.b16 %v589
    %v1330 = vunpack.c.l.b16 %v590
    %v1331 = vunpack.c.h.b16 %v590
    %v1332 = vunpack.c.l.b16 %v591
    %v1333 = vunpack.c.h.b16 %v591
    %v1334 = vunpack.c.l.b16 %v592
    %v1335 = vunpack.c.h.b16 %v592
    %v1336 = vunpack.c.l.b16 %v593
    %v1337 = vunpack.c.h.b16 %v593
    %v1338 = vunpack.c.l.b16 %v594
    %v1339 = vunpack.c.h.b16 %v594
    %v1340 = vunpack.c.l.b16 %v595
    %v1341 = vunpack.c.h.b16 %v595
    %v1342 = vunpack.c.l.b16 %v596
    %v1343 = vunpack.c.h.b16 %v596
    %v1344 = vunpack.c.l.b16 %v597
    %v1345 = vunpack.c.h.b16 %v597
    %v1346 = vunpack.c.l.b16 %v598
    %v1347 = vunpack.c.h.b16 %v598
    %v1348 = vunpack.c.l.b16 %v599
    %v1349 = vunpack.c.h.b16 %v599
    %v1350 = vunpack.c.l.b16 %v600
    %v1351 = vunpack.c.h.b16 %v600
    %v1352 = vunpack.c.l.b16 %v601
    %v1353 = vunpack.c.h.b16 %v601
    %v1354 = vunpack.c.l.b16 %v602
    %v1355 = vunpack.c.h.b16 %v602
    %v1356 = vunpack.c.l.b16 %v603
    %v1357 = vunpack.c.h.b16 %v603
    %v1358 = vunpack.c.l.b16 %v604
    %v1359 = vunpack.c.h.b16 %v604
    %v1360 = vunpack.c.l.b16 %v605
    %v1361 = vunpack.c.h.b16 %v605
    %v1362 = vunpack.c.l.b16 %v606
    %v1363 = vunpack.c.h.b16 %v606
    %v1364 = vunpack.c.l.b16 %v607
    %v1365 = vunpack.c.h.b16 %v607
    %v1366 = vunpack.c.l.b16 %v608
    %v1367 = vunpack.c.h.b16 %v608
    %v1368 = vunpack.c.l.b16 %v609
    %v1369 = vunpack.c.h.b16 %v609
    %v1370 = vunpack.c.l.b16 %v610
    %v1371 = vunpack.c.h.b16 %v610
    %v1372 = vunpack.c.l.b16 %v611
    %v1373 = vunpack.c.h.b16 %v611
    %v1374 = vunpack.c.l.b16 %v612
    %v1375 = vunpack.c.h.b16 %v612
    %v1376 = vunpack.c.l.b16 %v613
    %v1377 = vunpack.c.h.b16 %v613
    %v1378 = vunpack.c.l.b16 %v614
    %v1379 = vunpack.c.h.b16 %v614
    %v1380 = vunpack.c.l.b16 %v615
    %v1381 = vunpack.c.h.b16 %v615
    %v1382 = vunpack.c.l.b16 %v616
    %v1383 = vunpack.c.h.b16 %v616
    %v1384 = vunpack.c.l.b16 %v617
    %v1385 = vunpack.c.h.b16 %v617
    %v1386 = vunpack.c.l.b16 %v618
    %v1387 = vunpack.c.h.b16 %v618
    %v1388 = vunpack.c.l.b16 %v619
    %v1389 = vunpack.c.h.b16 %v619
    %v1390 = vunpack.c.l.b16 %v620
    %v1391 = vunpack.c.h.b16 %v620
    %v1392 = vunpack.c.l.b16 %v621
    %v1393 = vunpack.c.h.b16 %v621
    %v1394 = vunpack.c.l.b16 %v622
    %v1395 = vunpack.c.h.b16 %v622
    %v1396 = vunpack.c.l.b16 %v623
    %v1397 = vunpack.c.h.b16 %v623
    %v1398 = vunpack.c.l.b16 %v624
    %v1399 = vunpack.c.h.b16 %v624
    %v1400 = vunpack.c.l.b16 %v625
    %v1401 = vunpack.c.h.b16 %v625
    %v1402 = vunpack.c.l.b16 %v626
    %v1403 = vunpack.c.h.b16 %v626
    %v1404 = vunpack.c.l.b16 %v627
    %v1405 = vunpack.c.h.b16 %v627
    %v1406 = vpack.c.b16 %v898, %v894
    %v1407 = vpack.c.b16 %v899, %v895
    %v1408 = vpack.c.b16 %v900, %v896
    %v1409 = vpack.c.b16 %v901, %v897
    %v1410 = vpack.c.b16 %v906, %v902
    %v1411 = vpack.c.b16 %v907, %v903
    %v1412 = vpack.c.b16 %v908, %v904
    %v1413 = vpack.c.b16 %v909, %v905
    %v1414 = vpack.c.b16 %v914, %v910
    %v1415 = vpack.c.b16 %v915, %v911
    %v1416 = vpack.c.b16 %v916, %v912
    %v1417 = vpack.c.b16 %v917, %v913
    %v1418 = vpack.c.b16 %v922, %v918
    %v1419 = vpack.c.b16 %v923, %v919
    %v1420 = vpack.c.b16 %v924, %v920
    %v1421 = vpack.c.b16 %v925, %v921
    %v1422 = vpack.c.b16 %v930, %v926
    %v1423 = vpack.c.b16 %v931, %v927
    %v1424 = vpack.c.b16 %v932, %v928
    %v1425 = vpack.c.b16 %v933, %v929
    %v1426 = vpack.c.b16 %v938, %v934
    %v1427 = vpack.c.b16 %v939, %v935
    %v1428 = vpack.c.b16 %v940, %v936
    %v1429 = vpack.c.b16 %v941, %v937
    %v1430 = vpack.c.b16 %v946, %v942
    %v1431 = vpack.c.b16 %v947, %v943
    %v1432 = vpack.c.b16 %v948, %v944
    %v1433 = vpack.c.b16 %v949, %v945
    %v1434 = vpack.c.b16 %v954, %v950
    %v1435 = vpack.c.b16 %v955, %v951
    %v1436 = vpack.c.b16 %v956, %v952
    %v1437 = vpack.c.b16 %v957, %v953
    %v1438 = vpack.c.b16 %v962, %v958
    %v1439 = vpack.c.b16 %v963, %v959
    %v1440 = vpack.c.b16 %v964, %v960
    %v1441 = vpack.c.b16 %v965, %v961
    %v1442 = vpack.c.b16 %v970, %v966
    %v1443 = vpack.c.b16 %v971, %v967
    %v1444 = vpack.c.b16 %v972, %v968
    %v1445 = vpack.c.b16 %v973, %v969
    %v1446 = vpack.c.b16 %v978, %v974
    %v1447 = vpack.c.b16 %v979, %v975
    %v1448 = vpack.c.b16 %v980, %v976
    %v1449 = vpack.c.b16 %v981, %v977
    %v1450 = vpack.c.b16 %v986, %v982
    %v1451 = vpack.c.b16 %v987, %v983
    %v1452 = vpack.c.b16 %v988, %v984
    %v1453 = vpack.c.b16 %v989, %v985
    %v1454 = vpack.c.b16 %v994, %v990
    %v1455 = vpack.c.b16 %v995, %v991
    %v1456 = vpack.c.b16 %v996, %v992
    %v1457 = vpack.c.b16 %v997, %v993
    %v1458 = vpack.c.b16 %v1002, %v998
    %v1459 = vpack.c.b16 %v1003, %v999
    %v1460 = vpack.c.b16 %v1004, %v1000
    %v1461 = vpack.c.b16 %v1005, %v1001
    %v1462 = vpack.c.b16 %v1010, %v1006
    %v1463 = vpack.c.b16 %v1011, %v1007
    %v1464 = vpack.c.b16 %v1012, %v1008
    %v1465 = vpack.c.b16 %v1013, %v1009
    %v1466 = vpack.c.b16 %v1018, %v1014
    %v1467 = vpack.c.b16 %v1019, %v1015
    %v1468 = vpack.c.b16 %v1020, %v1016
    %v1469 = vpack.c.b16 %v1021, %v1017
    %v1470 = vpack.c.b16 %v1026, %v1022
    %v1471 = vpack.c.b16 %v1027, %v1023
    %v1472 = vpack.c.b16 %v1028, %v1024
    %v1473 = vpack.c.b16 %v1029, %v1025
    %v1474 = vpack.c.b16 %v1034, %v1030
    %v1475 = vpack.c.b16 %v1035, %v1031
    %v1476 = vpack.c.b16 %v1036, %v1032
    %v1477 = vpack.c.b16 %v1037, %v1033
    %v1478 = vpack.c.b16 %v1042, %v1038
    %v1479 = vpack.c.b16 %v1043, %v1039
    %v1480 = vpack.c.b16 %v1044, %v1040
    %v1481 = vpack.c.b16 %v1045, %v1041
    %v1482 = vpack.c.b16 %v1050, %v1046
    %v1483 = vpack.c.b16 %v1051, %v1047
    %v1484 = vpack.c.b16 %v1052, %v1048
    %v1485 = vpack.c.b16 %v1053, %v1049
    %v1486 = vpack.c.b16 %v1058, %v1054
    %v1487 = vpack.c.b16 %v1059, %v1055
    %v1488 = vpack.c.b16 %v1060, %v1056
    %v1489 = vpack.c.b16 %v1061, %v1057
    %v1490 = vpack.c.b16 %v1066, %v1062
    %v1491 = vpack.c.b16 %v1067, %v1063
    %v1492 = vpack.c.b16 %v1068, %v1064
    %v1493 = vpack.c.b16 %v1069, %v1065
    %v1494 = vpack.c.b16 %v1074, %v1070
    %v1495 = vpack.c.b16 %v1075, %v1071
    %v1496 = vpack.c.b16 %v1076, %v1072
    %v1497 = vpack.c.b16 %v1077, %v1073
    %v1498 = vpack.c.b16 %v1082, %v1078
    %v1499 = vpack.c.b16 %v1083, %v1079
    %v1500 = vpack.c.b16 %v1084, %v1080
    %v1501 = vpack.c.b16 %v1085, %v1081
    %v1502 = vpack.c.b16 %v1090, %v1086
    %v1503 = vpack.c.b16 %v1091, %v1087
    %v1504 = vpack.c.b16 %v1092, %v1088
    %v1505 = vpack.c.b16 %v1093, %v1089
    %v1506 = vpack.c.b16 %v1098, %v1094
    %v1507 = vpack.c.b16 %v1099, %v1095
    %v1508 = vpack.c.b16 %v1100, %v1096
    %v1509 = vpack.c.b16 %v1101, %v1097
    %v1510 = vpack.c.b16 %v1106, %v1102
    %v1511 = vpack.c.b16 %v1107, %v1103
    %v1512 = vpack.c.b16 %v1108, %v1104
    %v1513 = vpack.c.b16 %v1109, %v1105
    %v1514 = vpack.c.b16 %v1114, %v1110
    %v1515 = vpack.c.b16 %v1115, %v1111
    %v1516 = vpack.c.b16 %v1116, %v1112
    %v1517 = vpack.c.b16 %v1117, %v1113
    %v1518 = vpack.c.b16 %v1122, %v1118
    %v1519 = vpack.c.b16 %v1123, %v1119
    %v1520 = vpack.c.b16 %v1124, %v1120
    %v1521 = vpack.c.b16 %v1125, %v1121
    %v1522 = vpack.c.b16 %v1130, %v1126
    %v1523 = vpack.c.b16 %v1131, %v1127
    %v1524 = vpack.c.b16 %v1132, %v1128
    %v1525 = vpack.c.b16 %v1133, %v1129
    %v1526 = vpack.c.b16 %v1138, %v1134
    %v1527 = vpack.c.b16 %v1139, %v1135
    %v1528 = vpack.c.b16 %v1140, %v1136
    %v1529 = vpack.c.b16 %v1141, %v1137
    %v1530 = vpack.c.b16 %v1146, %v1142
    %v1531 = vpack.c.b16 %v1147, %v1143
    %v1532 = vpack.c.b16 %v1148, %v1144
    %v1533 = vpack.c.b16 %v1149, %v1145
    %v1534 = vpack.c.b16 %v1154, %v1150
    %v1535 = vpack.c.b16 %v1155, %v1151
    %v1536 = vpack.c.b16 %v1156, %v1152
    %v1537 = vpack.c.b16 %v1157, %v1153
    %v1538 = vpack.c.b16 %v1162, %v1158
    %v1539 = vpack.c.b16 %v1163, %v1159
    %v1540 = vpack.c.b16 %v1164, %v1160
    %v1541 = vpack.c.b16 %v1165, %v1161
    %v1542 = vpack.c.b16 %v1170, %v1166
    %v1543 = vpack.c.b16 %v1171, %v1167
    %v1544 = vpack.c.b16 %v1172, %v1168
    %v1545 = vpack.c.b16 %v1173, %v1169
    %v1546 = vpack.c.b16 %v1178, %v1174
    %v1547 = vpack.c.b16 %v1179, %v1175
    %v1548 = vpack.c.b16 %v1180, %v1176
    %v1549 = vpack.c.b16 %v1181, %v1177
    %v1550 = vpack.c.b16 %v1186, %v1182
    %v1551 = vpack.c.b16 %v1187, %v1183
    %v1552 = vpack.c.b16 %v1188, %v1184
    %v1553 = vpack.c.b16 %v1189, %v1185
    %v1554 = vpack.c.b16 %v1194, %v1190
    %v1555 = vpack.c.b16 %v1195, %v1191
    %v1556 = vpack.c.b16 %v1196, %v1192
    %v1557 = vpack.c.b16 %v1197, %v1193
    %v1558 = vpack.c.b16 %v1202, %v1198
    %v1559 = vpack.c.b16 %v1203, %v1199
    %v1560 = vpack.c.b16 %v1204, %v1200
    %v1561 = vpack.c.b16 %v1205, %v1201
    %v1562 = vpack.c.b16 %v1210, %v1206
    %v1563 = vpack.c.b16 %v1211, %v1207
    %v1564 = vpack.c.b16 %v1212, %v1208
    %v1565 = vpack.c.b16 %v1213, %v1209
    %v1566 = vpack.c.b16 %v1218, %v1214
    %v1567 = vpack.c.b16 %v1219, %v1215
    %v1568 = vpack.c.b16 %v1220, %v1216
    %v1569 = vpack.c.b16 %v1221, %v1217
    %v1570 = vpack.c.b16 %v1226, %v1222
    %v1571 = vpack.c.b16 %v1227, %v1223
    %v1572 = vpack.c.b16 %v1228, %v1224
    %v1573 = vpack.c.b16 %v1229, %v1225
    %v1574 = vpack.c.b16 %v1234, %v1230
    %v1575 = vpack.c.b16 %v1235, %v1231
    %v1576 = vpack.c.b16 %v1236, %v1232
    %v1577 = vpack.c.b16 %v1237, %v1233
    %v1578 = vpack.c.b16 %v1242, %v1238
    %v1579 = vpack.c.b16 %v1243, %v1239
    %v1580 = vpack.c.b16 %v1244, %v1240
    %v1581 = vpack.c.b16 %v1245, %v1241
    %v1582 = vpack.c.b16 %v1250, %v1246
    %v1583 = vpack.c.b16 %v1251, %v1247
    %v1584 = vpack.c.b16 %v1252, %v1248
    %v1585 = vpack.c.b16 %v1253, %v1249
    %v1586 = vpack.c.b16 %v1258, %v1254
    %v1587 = vpack.c.b16 %v1259, %v1255
    %v1588 = vpack.c.b16 %v1260, %v1256
    %v1589 = vpack.c.b16 %v1261, %v1257
    %v1590 = vpack.c.b16 %v1266, %v1262
    %v1591 = vpack.c.b16 %v1267, %v1263
    %v1592 = vpack.c.b16 %v1268, %v1264
    %v1593 = vpack.c.b16 %v1269, %v1265
    %v1594 = vpack.c.b16 %v1274, %v1270
    %v1595 = vpack.c.b16 %v1275, %v1271
    %v1596 = vpack.c.b16 %v1276, %v1272
    %v1597 = vpack.c.b16 %v1277, %v1273
    %v1598 = vpack.c.b16 %v1282, %v1278
    %v1599 = vpack.c.b16 %v1283, %v1279
    %v1600 = vpack.c.b16 %v1284, %v1280
    %v1601 = vpack.c.b16 %v1285, %v1281
    %v1602 = vpack.c.b16 %v1290, %v1286
    %v1603 = vpack.c.b16 %v1291, %v1287
    %v1604 = vpack.c.b16 %v1292, %v1288
    %v1605 = vpack.c.b16 %v1293, %v1289
    %v1606 = vpack.c.b16 %v1298, %v1294
    %v1607 = vpack.c.b16 %v1299, %v1295
    %v1608 = vpack.c.b16 %v1300, %v1296
    %v1609 = vpack.c.b16 %v1301, %v1297
    %v1610 = vpack.c.b16 %v1306, %v1302
    %v1611 = vpack.c.b16 %v1307, %v1303
    %v1612 = vpack.c.b16 %v1308, %v1304
    %v1613 = vpack.c.b16 %v1309, %v1305
    %v1614 = vpack.c.b16 %v1314, %v1310
    %v1615 = vpack.c.b16 %v1315, %v1311
    %v1616 = vpack.c.b16 %v1316, %v1312
    %v1617 = vpack.c.b16 %v1317, %v1313
    %v1618 = vpack.c.b16 %v1322, %v1318
    %v1619 = vpack.c.b16 %v1323, %v1319
    %v1620 = vpack.c.b16 %v1324, %v1320
    %v1621 = vpack.c.b16 %v1325, %v1321
    %v1622 = vpack.c.b16 %v1330, %v1326
    %v1623 = vpack.c.b16 %v1331, %v1327
    %v1624 = vpack.c.b16 %v1332, %v1328
    %v1625 = vpack.c.b16 %v1333, %v1329
    %v1626 = vpack.c.b16 %v1338, %v1334
    %v1627 = vpack.c.b16 %v1339, %v1335
    %v1628 = vpack.c.b16 %v1340, %v1336
    %v1629 = vpack.c.b16 %v1341, %v1337
    %v1630 = vpack.c.b16 %v1346, %v1342
    %v1631 = vpack.c.b16 %v1347, %v1343
    %v1632 = vpack.c.b16 %v1348, %v1344
    %v1633 = vpack.c.b16 %v1349, %v1345
    %v1634 = vpack.c.b16 %v1354, %v1350
    %v1635 = vpack.c.b16 %v1355, %v1351
    %v1636 = vpack.c.b16 %v1356, %v1352
    %v1637 = vpack.c.b16 %v1357, %v1353
    %v1638 = vpack.c.b16 %v1362, %v1358
    %v1639 = vpack.c.b16 %v1363, %v1359
    %v1640 = vpack.c.b16 %v1364, %v1360
    %v1641 = vpack.c.b16 %v1365, %v1361
    %v1642 = vpack.c.b16 %v1370, %v1366
    %v1643 = vpack.c.b16 %v1371, %v1367
    %v1644 = vpack.c.b16 %v1372, %v1368
    %v1645 = vpack.c.b16 %v1373, %v1369
    %v1646 = vpack.c.b16 %v1378, %v1374
    %v1647 = vpack.c.b16 %v1379, %v1375
    %v1648 = vpack.c.b16 %v1380, %v1376
    %v1649 = vpack.c.b16 %v1381, %v1377
    %v1650 = vpack.c.b16 %v1386, %v1382
    %v1651 = vpack.c.b16 %v1387, %v1383
    %v1652 = vpack.c.b16 %v1388, %v1384
    %v1653 = vpack.c.b16 %v1389, %v1385
    %v1654 = vpack.c.b16 %v1394, %v1390
    %v1655 = vpack.c.b16 %v1395, %v1391
    %v1656 = vpack.c.b16 %v1396, %v1392
    %v1657 = vpack.c.b16 %v1397, %v1393
    %v1658 = vpack.c.b16 %v1402, %v1398
    %v1659 = vpack.c.b16 %v1403, %v1399
    %v1660 = vpack.c.b16 %v1404, %v1400
    %v1661 = vpack.c.b16 %v1405, %v1401
    %1918 = vmatpush.bf16.msra.mxu0 %v1434
    %1919 = vmatpush.bf16.msra.mxu0 %v1430
    %1920 = vmatpush.bf16.msra.mxu0 %v1426
    %1921 = vmatpush.bf16.msra.mxu0 %v1422
    %1922 = vmatpush.bf16.msra.mxu0 %v1418
    %1923 = vmatpush.bf16.msra.mxu0 %v1414
    %1924 = vmatpush.bf16.msra.mxu0 %v1410
    %1925 = vmatpush.bf16.msra.mxu0 %v1406
    %1926 = vmatmul.bf16.gmra.mxu0 %v364
    %v1927 = vpop.f32.mrf.mxu0
    %v1928 = vadd.f32 %v630, %v1927
    %v1929 = vpop.f32.mrf.mxu0
    %1930 = vdwg.mxu0
    %1931 = vmatpush.bf16.msra.mxu0 %v1466
    %1932 = vmatpush.bf16.msra.mxu0 %v1462
    %1933 = vmatpush.bf16.msra.mxu0 %v1458
    %1934 = vmatpush.bf16.msra.mxu0 %v1454
    %1935 = vmatpush.bf16.msra.mxu0 %v1450
    %1936 = vmatpush.bf16.msra.mxu0 %v1446
    %1937 = vmatpush.bf16.msra.mxu0 %v1442
    %1938 = vmatpush.bf16.msra.mxu0 %v1438
    %1939 = vmatmul.bf16.gmra.mxu0 %v365
    %v1940 = vpop.f32.mrf.mxu0
    %v1941 = vadd.f32 %v1928, %v1940
    %v1942 = vpop.f32.mrf.mxu0
    %1943 = vdwg.mxu0
    %1944 = vmatpush.bf16.msra.mxu0 %v1498
    %1945 = vmatpush.bf16.msra.mxu0 %v1494
    %1946 = vmatpush.bf16.msra.mxu0 %v1490
    %1947 = vmatpush.bf16.msra.mxu0 %v1486
    %1948 = vmatpush.bf16.msra.mxu0 %v1482
    %1949 = vmatpush.bf16.msra.mxu0 %v1478
    %1950 = vmatpush.bf16.msra.mxu0 %v1474
    %1951 = vmatpush.bf16.msra.mxu0 %v1470
    %1952 = vmatmul.bf16.gmra.mxu0 %v366
    %v1953 = vpop.f32.mrf.mxu0
    %v1954 = vadd.f32 %v1941, %v1953
    %v1955 = vpop.f32.mrf.mxu0
    %1956 = vdwg.mxu0
    %1957 = vmatpush.bf16.msra.mxu0 %v1530
    %1958 = vmatpush.bf16.msra.mxu0 %v1526
    %1959 = vmatpush.bf16.msra.mxu0 %v1522
    %1960 = vmatpush.bf16.msra.mxu0 %v1518
    %1961 = vmatpush.bf16.msra.mxu0 %v1514
    %1962 = vmatpush.bf16.msra.mxu0 %v1510
    %1963 = vmatpush.bf16.msra.mxu0 %v1506
    %1964 = vmatpush.bf16.msra.mxu0 %v1502
    %1965 = vmatmul.bf16.gmra.mxu0 %v367
    %v1966 = vpop.f32.mrf.mxu0
    %v1967 = vadd.f32 %v1954, %v1966
    %v1968 = vpop.f32.mrf.mxu0
    %1969 = vdwg.mxu0
    %1970 = vmatpush.bf16.msra.mxu0 %v1562
    %1971 = vmatpush.bf16.msra.mxu0 %v1558
    %1972 = vmatpush.bf16.msra.mxu0 %v1554
    %1973 = vmatpush.bf16.msra.mxu0 %v1550
    %1974 = vmatpush.bf16.msra.mxu0 %v1546
    %1975 = vmatpush.bf16.msra.mxu0 %v1542
    %1976 = vmatpush.bf16.msra.mxu0 %v1538
    %1977 = vmatpush.bf16.msra.mxu0 %v1534
    %1978 = vmatmul.bf16.gmra.mxu0 %v368
    %v1979 = vpop.f32.mrf.mxu0
    %v1980 = vadd.f32 %v1967, %v1979
    %v1981 = vpop.f32.mrf.mxu0
    %1982 = vdwg.mxu0
    %1983 = vmatpush.bf16.msra.mxu0 %v1594
    %1984 = vmatpush.bf16.msra.mxu0 %v1590
    %1985 = vmatpush.bf16.msra.mxu0 %v1586
    %1986 = vmatpush.bf16.msra.mxu0 %v1582
    %1987 = vmatpush.bf16.msra.mxu0 %v1578
    %1988 = vmatpush.bf16.msra.mxu0 %v1574
    %1989 = vmatpush.bf16.msra.mxu0 %v1570
    %1990 = vmatpush.bf16.msra.mxu0 %v1566
    %1991 = vmatmul.bf16.gmra.mxu0 %v369
    %v1992 = vpop.f32.mrf.mxu0
    %v1993 = vadd.f32 %v1980, %v1992
    %v1994 = vpop.f32.mrf.mxu0
    %1995 = vdwg.mxu0
    %1996 = vmatpush.bf16.msra.mxu0 %v1626
    %1997 = vmatpush.bf16.msra.mxu0 %v1622
    %1998 = vmatpush.bf16.msra.mxu0 %v1618
    %1999 = vmatpush.bf16.msra.mxu0 %v1614
    %2000 = vmatpush.bf16.msra.mxu0 %v1610
    %2001 = vmatpush.bf16.msra.mxu0 %v1606
    %2002 = vmatpush.bf16.msra.mxu0 %v1602
    %2003 = vmatpush.bf16.msra.mxu0 %v1598
    %2004 = vmatmul.bf16.gmra.mxu0 %v370
    %v2005 = vpop.f32.mrf.mxu0
    %v2006 = vadd.f32 %v1993, %v2005
    %v2007 = vpop.f32.mrf.mxu0
    %2008 = vdwg.mxu0
    %2009 = vmatpush.bf16.msra.mxu0 %v1658
    %2010 = vmatpush.bf16.msra.mxu0 %v1654
    %2011 = vmatpush.bf16.msra.mxu0 %v1650
    %2012 = vmatpush.bf16.msra.mxu0 %v1646
    %2013 = vmatpush.bf16.msra.mxu0 %v1642
    %2014 = vmatpush.bf16.msra.mxu0 %v1638
    %2015 = vmatpush.bf16.msra.mxu0 %v1634
    %2016 = vmatpush.bf16.msra.mxu0 %v1630
    %2017 = vmatmul.bf16.gmra.mxu0 %v371
    %v2018 = vpop.f32.mrf.mxu0
    %v2019 = vadd.f32 %v2006, %v2018
    %v2020 = vpop.f32.mrf.mxu0
    %2021 = vdwg.mxu0
    %2022 = vmatpush.bf16.msra.mxu0 %v1435
    %2023 = vmatpush.bf16.msra.mxu0 %v1431
    %2024 = vmatpush.bf16.msra.mxu0 %v1427
    %2025 = vmatpush.bf16.msra.mxu0 %v1423
    %2026 = vmatpush.bf16.msra.mxu0 %v1419
    %2027 = vmatpush.bf16.msra.mxu0 %v1415
    %2028 = vmatpush.bf16.msra.mxu0 %v1411
    %2029 = vmatpush.bf16.msra.mxu0 %v1407
    %2030 = vmatmul.bf16.gmra.mxu0 %v364
    %v2031 = vpop.f32.mrf.mxu0
    %v2032 = vadd.f32 %v631, %v2031
    %v2033 = vpop.f32.mrf.mxu0
    %2034 = vdwg.mxu0
    %2035 = vmatpush.bf16.msra.mxu0 %v1467
    %2036 = vmatpush.bf16.msra.mxu0 %v1463
    %2037 = vmatpush.bf16.msra.mxu0 %v1459
    %2038 = vmatpush.bf16.msra.mxu0 %v1455
    %2039 = vmatpush.bf16.msra.mxu0 %v1451
    %2040 = vmatpush.bf16.msra.mxu0 %v1447
    %2041 = vmatpush.bf16.msra.mxu0 %v1443
    %2042 = vmatpush.bf16.msra.mxu0 %v1439
    %2043 = vmatmul.bf16.gmra.mxu0 %v365
    %v2044 = vpop.f32.mrf.mxu0
    %v2045 = vadd.f32 %v2032, %v2044
    %v2046 = vpop.f32.mrf.mxu0
    %2047 = vdwg.mxu0
    %2048 = vmatpush.bf16.msra.mxu0 %v1499
    %2049 = vmatpush.bf16.msra.mxu0 %v1495
    %2050 = vmatpush.bf16.msra.mxu0 %v1491
    %2051 = vmatpush.bf16.msra.mxu0 %v1487
    %2052 = vmatpush.bf16.msra.mxu0 %v1483
    %2053 = vmatpush.bf16.msra.mxu0 %v1479
    %2054 = vmatpush.bf16.msra.mxu0 %v1475
    %2055 = vmatpush.bf16.msra.mxu0 %v1471
    %2056 = vmatmul.bf16.gmra.mxu0 %v366
    %v2057 = vpop.f32.mrf.mxu0
    %v2058 = vadd.f32 %v2045, %v2057
    %v2059 = vpop.f32.mrf.mxu0
    %2060 = vdwg.mxu0
    %2061 = vmatpush.bf16.msra.mxu0 %v1531
    %2062 = vmatpush.bf16.msra.mxu0 %v1527
    %2063 = vmatpush.bf16.msra.mxu0 %v1523
    %2064 = vmatpush.bf16.msra.mxu0 %v1519
    %2065 = vmatpush.bf16.msra.mxu0 %v1515
    %2066 = vmatpush.bf16.msra.mxu0 %v1511
    %2067 = vmatpush.bf16.msra.mxu0 %v1507
    %2068 = vmatpush.bf16.msra.mxu0 %v1503
    %2069 = vmatmul.bf16.gmra.mxu0 %v367
    %v2070 = vpop.f32.mrf.mxu0
    %v2071 = vadd.f32 %v2058, %v2070
    %v2072 = vpop.f32.mrf.mxu0
    %2073 = vdwg.mxu0
    %2074 = vmatpush.bf16.msra.mxu0 %v1563
    %2075 = vmatpush.bf16.msra.mxu0 %v1559
    %2076 = vmatpush.bf16.msra.mxu0 %v1555
    %2077 = vmatpush.bf16.msra.mxu0 %v1551
    %2078 = vmatpush.bf16.msra.mxu0 %v1547
    %2079 = vmatpush.bf16.msra.mxu0 %v1543
    %2080 = vmatpush.bf16.msra.mxu0 %v1539
    %2081 = vmatpush.bf16.msra.mxu0 %v1535
    %2082 = vmatmul.bf16.gmra.mxu0 %v368
    %v2083 = vpop.f32.mrf.mxu0
    %v2084 = vadd.f32 %v2071, %v2083
    %v2085 = vpop.f32.mrf.mxu0
    %2086 = vdwg.mxu0
    %2087 = vmatpush.bf16.msra.mxu0 %v1595
    %2088 = vmatpush.bf16.msra.mxu0 %v1591
    %2089 = vmatpush.bf16.msra.mxu0 %v1587
    %2090 = vmatpush.bf16.msra.mxu0 %v1583
    %2091 = vmatpush.bf16.msra.mxu0 %v1579
    %2092 = vmatpush.bf16.msra.mxu0 %v1575
    %2093 = vmatpush.bf16.msra.mxu0 %v1571
    %2094 = vmatpush.bf16.msra.mxu0 %v1567
    %2095 = vmatmul.bf16.gmra.mxu0 %v369
    %v2096 = vpop.f32.mrf.mxu0
    %v2097 = vadd.f32 %v2084, %v2096
    %v2098 = vpop.f32.mrf.mxu0
    %2099 = vdwg.mxu0
    %2100 = vmatpush.bf16.msra.mxu0 %v1627
    %2101 = vmatpush.bf16.msra.mxu0 %v1623
    %2102 = vmatpush.bf16.msra.mxu0 %v1619
    %2103 = vmatpush.bf16.msra.mxu0 %v1615
    %2104 = vmatpush.bf16.msra.mxu0 %v1611
    %2105 = vmatpush.bf16.msra.mxu0 %v1607
    %2106 = vmatpush.bf16.msra.mxu0 %v1603
    %2107 = vmatpush.bf16.msra.mxu0 %v1599
    %2108 = vmatmul.bf16.gmra.mxu0 %v370
    %v2109 = vpop.f32.mrf.mxu0
    %v2110 = vadd.f32 %v2097, %v2109
    %v2111 = vpop.f32.mrf.mxu0
    %2112 = vdwg.mxu0
    %2113 = vmatpush.bf16.msra.mxu0 %v1659
    %2114 = vmatpush.bf16.msra.mxu0 %v1655
    %2115 = vmatpush.bf16.msra.mxu0 %v1651
    %2116 = vmatpush.bf16.msra.mxu0 %v1647
    %2117 = vmatpush.bf16.msra.mxu0 %v1643
    %2118 = vmatpush.bf16.msra.mxu0 %v1639
    %2119 = vmatpush.bf16.msra.mxu0 %v1635
    %2120 = vmatpush.bf16.msra.mxu0 %v1631
    %2121 = vmatmul.bf16.gmra.mxu0 %v371
    %v2122 = vpop.f32.mrf.mxu0
    %v2123 = vadd.f32 %v2110, %v2122
    %v2124 = vpop.f32.mrf.mxu0
    %2125 = vdwg.mxu0
    %2126 = vmatpush.bf16.msra.mxu0 %v1436
    %2127 = vmatpush.bf16.msra.mxu0 %v1432
    %2128 = vmatpush.bf16.msra.mxu0 %v1428
    %2129 = vmatpush.bf16.msra.mxu0 %v1424
    %2130 = vmatpush.bf16.msra.mxu0 %v1420
    %2131 = vmatpush.bf16.msra.mxu0 %v1416
    %2132 = vmatpush.bf16.msra.mxu0 %v1412
    %2133 = vmatpush.bf16.msra.mxu0 %v1408
    %2134 = vmatmul.bf16.gmra.mxu0 %v364
    %v2135 = vpop.f32.mrf.mxu0
    %v2136 = vadd.f32 %v632, %v2135
    %v2137 = vpop.f32.mrf.mxu0
    %2138 = vdwg.mxu0
    %2139 = vmatpush.bf16.msra.mxu0 %v1468
    %2140 = vmatpush.bf16.msra.mxu0 %v1464
    %2141 = vmatpush.bf16.msra.mxu0 %v1460
    %2142 = vmatpush.bf16.msra.mxu0 %v1456
    %2143 = vmatpush.bf16.msra.mxu0 %v1452
    %2144 = vmatpush.bf16.msra.mxu0 %v1448
    %2145 = vmatpush.bf16.msra.mxu0 %v1444
    %2146 = vmatpush.bf16.msra.mxu0 %v1440
    %2147 = vmatmul.bf16.gmra.mxu0 %v365
    %v2148 = vpop.f32.mrf.mxu0
    %v2149 = vadd.f32 %v2136, %v2148
    %v2150 = vpop.f32.mrf.mxu0
    %2151 = vdwg.mxu0
    %2152 = vmatpush.bf16.msra.mxu0 %v1500
    %2153 = vmatpush.bf16.msra.mxu0 %v1496
    %2154 = vmatpush.bf16.msra.mxu0 %v1492
    %2155 = vmatpush.bf16.msra.mxu0 %v1488
    %2156 = vmatpush.bf16.msra.mxu0 %v1484
    %2157 = vmatpush.bf16.msra.mxu0 %v1480
    %2158 = vmatpush.bf16.msra.mxu0 %v1476
    %2159 = vmatpush.bf16.msra.mxu0 %v1472
    %2160 = vmatmul.bf16.gmra.mxu0 %v366
    %v2161 = vpop.f32.mrf.mxu0
    %v2162 = vadd.f32 %v2149, %v2161
    %v2163 = vpop.f32.mrf.mxu0
    %2164 = vdwg.mxu0
    %2165 = vmatpush.bf16.msra.mxu0 %v1532
    %2166 = vmatpush.bf16.msra.mxu0 %v1528
    %2167 = vmatpush.bf16.msra.mxu0 %v1524
    %2168 = vmatpush.bf16.msra.mxu0 %v1520
    %2169 = vmatpush.bf16.msra.mxu0 %v1516
    %2170 = vmatpush.bf16.msra.mxu0 %v1512
    %2171 = vmatpush.bf16.msra.mxu0 %v1508
    %2172 = vmatpush.bf16.msra.mxu0 %v1504
    %2173 = vmatmul.bf16.gmra.mxu0 %v367
    %v2174 = vpop.f32.mrf.mxu0
    %v2175 = vadd.f32 %v2162, %v2174
    %v2176 = vpop.f32.mrf.mxu0
    %2177 = vdwg.mxu0
    %2178 = vmatpush.bf16.msra.mxu0 %v1564
    %2179 = vmatpush.bf16.msra.mxu0 %v1560
    %2180 = vmatpush.bf16.msra.mxu0 %v1556
    %2181 = vmatpush.bf16.msra.mxu0 %v1552
    %2182 = vmatpush.bf16.msra.mxu0 %v1548
    %2183 = vmatpush.bf16.msra.mxu0 %v1544
    %2184 = vmatpush.bf16.msra.mxu0 %v1540
    %2185 = vmatpush.bf16.msra.mxu0 %v1536
    %2186 = vmatmul.bf16.gmra.mxu0 %v368
    %v2187 = vpop.f32.mrf.mxu0
    %v2188 = vadd.f32 %v2175, %v2187
    %v2189 = vpop.f32.mrf.mxu0
    %2190 = vdwg.mxu0
    %2191 = vmatpush.bf16.msra.mxu0 %v1596
    %2192 = vmatpush.bf16.msra.mxu0 %v1592
    %2193 = vmatpush.bf16.msra.mxu0 %v1588
    %2194 = vmatpush.bf16.msra.mxu0 %v1584
    %2195 = vmatpush.bf16.msra.mxu0 %v1580
    %2196 = vmatpush.bf16.msra.mxu0 %v1576
    %2197 = vmatpush.bf16.msra.mxu0 %v1572
    %2198 = vmatpush.bf16.msra.mxu0 %v1568
    %2199 = vmatmul.bf16.gmra.mxu0 %v369
    %v2200 = vpop.f32.mrf.mxu0
    %v2201 = vadd.f32 %v2188, %v2200
    %v2202 = vpop.f32.mrf.mxu0
    %2203 = vdwg.mxu0
    %2204 = vmatpush.bf16.msra.mxu0 %v1628
    %2205 = vmatpush.bf16.msra.mxu0 %v1624
    %2206 = vmatpush.bf16.msra.mxu0 %v1620
    %2207 = vmatpush.bf16.msra.mxu0 %v1616
    %2208 = vmatpush.bf16.msra.mxu0 %v1612
    %2209 = vmatpush.bf16.msra.mxu0 %v1608
    %2210 = vmatpush.bf16.msra.mxu0 %v1604
    %2211 = vmatpush.bf16.msra.mxu0 %v1600
    %2212 = vmatmul.bf16.gmra.mxu0 %v370
    %v2213 = vpop.f32.mrf.mxu0
    %v2214 = vadd.f32 %v2201, %v2213
    %v2215 = vpop.f32.mrf.mxu0
    %2216 = vdwg.mxu0
    %2217 = vmatpush.bf16.msra.mxu0 %v1660
    %2218 = vmatpush.bf16.msra.mxu0 %v1656
    %2219 = vmatpush.bf16.msra.mxu0 %v1652
    %2220 = vmatpush.bf16.msra.mxu0 %v1648
    %2221 = vmatpush.bf16.msra.mxu0 %v1644
    %2222 = vmatpush.bf16.msra.mxu0 %v1640
    %2223 = vmatpush.bf16.msra.mxu0 %v1636
    %2224 = vmatpush.bf16.msra.mxu0 %v1632
    %2225 = vmatmul.bf16.gmra.mxu0 %v371
    %v2226 = vpop.f32.mrf.mxu0
    %v2227 = vadd.f32 %v2214, %v2226
    %v2228 = vpop.f32.mrf.mxu0
    %2229 = vdwg.mxu0
    %2230 = vmatpush.bf16.msra.mxu0 %v1437
    %2231 = vmatpush.bf16.msra.mxu0 %v1433
    %2232 = vmatpush.bf16.msra.mxu0 %v1429
    %2233 = vmatpush.bf16.msra.mxu0 %v1425
    %2234 = vmatpush.bf16.msra.mxu0 %v1421
    %2235 = vmatpush.bf16.msra.mxu0 %v1417
    %2236 = vmatpush.bf16.msra.mxu0 %v1413
    %2237 = vmatpush.bf16.msra.mxu0 %v1409
    %2238 = vmatmul.bf16.gmra.mxu0 %v364
    %v2239 = vpop.f32.mrf.mxu0
    %v2240 = vadd.f32 %v633, %v2239
    %v2241 = vpop.f32.mrf.mxu0
    %2242 = vdwg.mxu0
    %2243 = vmatpush.bf16.msra.mxu0 %v1469
    %2244 = vmatpush.bf16.msra.mxu0 %v1465
    %2245 = vmatpush.bf16.msra.mxu0 %v1461
    %2246 = vmatpush.bf16.msra.mxu0 %v1457
    %2247 = vmatpush.bf16.msra.mxu0 %v1453
    %2248 = vmatpush.bf16.msra.mxu0 %v1449
    %2249 = vmatpush.bf16.msra.mxu0 %v1445
    %2250 = vmatpush.bf16.msra.mxu0 %v1441
    %2251 = vmatmul.bf16.gmra.mxu0 %v365
    %v2252 = vpop.f32.mrf.mxu0
    %v2253 = vadd.f32 %v2240, %v2252
    %v2254 = vpop.f32.mrf.mxu0
    %2255 = vdwg.mxu0
    %2256 = vmatpush.bf16.msra.mxu0 %v1501
    %2257 = vmatpush.bf16.msra.mxu0 %v1497
    %2258 = vmatpush.bf16.msra.mxu0 %v1493
    %2259 = vmatpush.bf16.msra.mxu0 %v1489
    %2260 = vmatpush.bf16.msra.mxu0 %v1485
    %2261 = vmatpush.bf16.msra.mxu0 %v1481
    %2262 = vmatpush.bf16.msra.mxu0 %v1477
    %2263 = vmatpush.bf16.msra.mxu0 %v1473
    %2264 = vmatmul.bf16.gmra.mxu0 %v366
    %v2265 = vpop.f32.mrf.mxu0
    %v2266 = vadd.f32 %v2253, %v2265
    %v2267 = vpop.f32.mrf.mxu0
    %2268 = vdwg.mxu0
    %2269 = vmatpush.bf16.msra.mxu0 %v1533
    %2270 = vmatpush.bf16.msra.mxu0 %v1529
    %2271 = vmatpush.bf16.msra.mxu0 %v1525
    %2272 = vmatpush.bf16.msra.mxu0 %v1521
    %2273 = vmatpush.bf16.msra.mxu0 %v1517
    %2274 = vmatpush.bf16.msra.mxu0 %v1513
    %2275 = vmatpush.bf16.msra.mxu0 %v1509
    %2276 = vmatpush.bf16.msra.mxu0 %v1505
    %2277 = vmatmul.bf16.gmra.mxu0 %v367
    %v2278 = vpop.f32.mrf.mxu0
    %v2279 = vadd.f32 %v2266, %v2278
    %v2280 = vpop.f32.mrf.mxu0
    %2281 = vdwg.mxu0
    %2282 = vmatpush.bf16.msra.mxu0 %v1565
    %2283 = vmatpush.bf16.msra.mxu0 %v1561
    %2284 = vmatpush.bf16.msra.mxu0 %v1557
    %2285 = vmatpush.bf16.msra.mxu0 %v1553
    %2286 = vmatpush.bf16.msra.mxu0 %v1549
    %2287 = vmatpush.bf16.msra.mxu0 %v1545
    %2288 = vmatpush.bf16.msra.mxu0 %v1541
    %2289 = vmatpush.bf16.msra.mxu0 %v1537
    %2290 = vmatmul.bf16.gmra.mxu0 %v368
    %v2291 = vpop.f32.mrf.mxu0
    %v2292 = vadd.f32 %v2279, %v2291
    %v2293 = vpop.f32.mrf.mxu0
    %2294 = vdwg.mxu0
    %2295 = vmatpush.bf16.msra.mxu0 %v1597
    %2296 = vmatpush.bf16.msra.mxu0 %v1593
    %2297 = vmatpush.bf16.msra.mxu0 %v1589
    %2298 = vmatpush.bf16.msra.mxu0 %v1585
    %2299 = vmatpush.bf16.msra.mxu0 %v1581
    %2300 = vmatpush.bf16.msra.mxu0 %v1577
    %2301 = vmatpush.bf16.msra.mxu0 %v1573
    %2302 = vmatpush.bf16.msra.mxu0 %v1569
    %2303 = vmatmul.bf16.gmra.mxu0 %v369
    %v2304 = vpop.f32.mrf.mxu0
    %v2305 = vadd.f32 %v2292, %v2304
    %v2306 = vpop.f32.mrf.mxu0
    %2307 = vdwg.mxu0
    %2308 = vmatpush.bf16.msra.mxu0 %v1629
    %2309 = vmatpush.bf16.msra.mxu0 %v1625
    %2310 = vmatpush.bf16.msra.mxu0 %v1621
    %2311 = vmatpush.bf16.msra.mxu0 %v1617
    %2312 = vmatpush.bf16.msra.mxu0 %v1613
    %2313 = vmatpush.bf16.msra.mxu0 %v1609
    %2314 = vmatpush.bf16.msra.mxu0 %v1605
    %2315 = vmatpush.bf16.msra.mxu0 %v1601
    %2316 = vmatmul.bf16.gmra.mxu0 %v370
    %v2317 = vpop.f32.mrf.mxu0
    %v2318 = vadd.f32 %v2305, %v2317
    %v2319 = vpop.f32.mrf.mxu0
    %2320 = vdwg.mxu0
    %2321 = vmatpush.bf16.msra.mxu0 %v1661
    %2322 = vmatpush.bf16.msra.mxu0 %v1657
    %2323 = vmatpush.bf16.msra.mxu0 %v1653
    %2324 = vmatpush.bf16.msra.mxu0 %v1649
    %2325 = vmatpush.bf16.msra.mxu0 %v1645
    %2326 = vmatpush.bf16.msra.mxu0 %v1641
    %2327 = vmatpush.bf16.msra.mxu0 %v1637
    %2328 = vmatpush.bf16.msra.mxu0 %v1633
    %2329 = vmatmul.bf16.gmra.mxu0 %v371
    %v2330 = vpop.f32.mrf.mxu0
    %v2331 = vadd.f32 %v2318, %v2330
    %v2332 = vpop.f32.mrf.mxu0
    %2333 = vdwg.mxu0
    %vm2334 = vcmp.gt.f32.partialorder %v2019, 0.0
    %vm2335 = vcmp.gt.f32.partialorder %v2123, 0.0
    %vm2336 = vcmp.gt.f32.partialorder %v2227, 0.0
    %vm2337 = vcmp.gt.f32.partialorder %v2331, 0.0
    %v2338 = vmul.f32 %v2019, 0.01
    %v2339 = vmul.f32 %v2123, 0.01
    %v2340 = vmul.f32 %v2227, 0.01
    %v2341 = vmul.f32 %v2331, 0.01
    %v2342 = vsel %vm2334, %v2019, %v2338
    %v2343 = vsel %vm2335, %v2123, %v2339
    %v2344 = vsel %vm2336, %v2227, %v2340
    %v2345 = vsel %vm2337, %v2331, %v2341
    %v2346 = vpack.c.bf16 %v2342, %v2342
    %v2347 = vpack.c.bf16 %v2343, %v2343
    %v2348 = vpack.c.bf16 %v2344, %v2344
    %v2349 = vpack.c.bf16 %v2345, %v2345
    %v2350 = vld [vmem:[#allocation6] sm:$0xff]
    %v2351 = vld [vmem:[#allocation6 + $0x8] sm:$0xff]
    %v2352 = vld [vmem:[#allocation6 + $0x10] sm:$0xff]
    %v2353 = vld [vmem:[#allocation6 + $0x18] sm:$0xff]
    %v2354 = vld [vmem:[#allocation6 + $0x20] sm:$0xff]
    %v2355 = vld [vmem:[#allocation6 + $0x28] sm:$0xff]
    %v2356 = vld [vmem:[#allocation6 + $0x30] sm:$0xff]
    %v2357 = vld [vmem:[#allocation6 + $0x38] sm:$0xff]
    %v2358 = vld [vmem:[#allocation6 + $0x40] sm:$0xff]
    %v2359 = vld [vmem:[#allocation6 + $0x48] sm:$0xff]
    %v2360 = vld [vmem:[#allocation6 + $0x50] sm:$0xff]
    %v2361 = vld [vmem:[#allocation6 + $0x58] sm:$0xff]
    %v2362 = vld [vmem:[#allocation6 + $0x60] sm:$0xff]
    %v2363 = vld [vmem:[#allocation6 + $0x68] sm:$0xff]
    %v2364 = vld [vmem:[#allocation6 + $0x70] sm:$0xff]
    %v2365 = vld [vmem:[#allocation6 + $0x78] sm:$0xff]
    %v2366 = vld [vmem:[#allocation6 + $0x80] sm:$0xff]
    %v2367 = vld [vmem:[#allocation6 + $0x88] sm:$0xff]
    %v2368 = vld [vmem:[#allocation6 + $0x90] sm:$0xff]
    %v2369 = vld [vmem:[#allocation6 + $0x98] sm:$0xff]
    %v2370 = vld [vmem:[#allocation6 + $0xa0] sm:$0xff]
    %v2371 = vld [vmem:[#allocation6 + $0xa8] sm:$0xff]
    %v2372 = vld [vmem:[#allocation6 + $0xb0] sm:$0xff]
    %v2373 = vld [vmem:[#allocation6 + $0xb8] sm:$0xff]
    %v2374 = vld [vmem:[#allocation6 + $0xc0] sm:$0xff]
    %v2375 = vld [vmem:[#allocation6 + $0xc8] sm:$0xff]
    %v2376 = vld [vmem:[#allocation6 + $0xd0] sm:$0xff]
    %v2377 = vld [vmem:[#allocation6 + $0xd8] sm:$0xff]
    %v2378 = vld [vmem:[#allocation6 + $0xe0] sm:$0xff]
    %v2379 = vld [vmem:[#allocation6 + $0xe8] sm:$0xff]
    %v2380 = vld [vmem:[#allocation6 + $0xf0] sm:$0xff]
    %v2381 = vld [vmem:[#allocation6 + $0xf8] sm:$0xff]
    %v2382 = vld [vmem:[#allocation6 + $0x100] sm:$0xff]
    %v2383 = vld [vmem:[#allocation6 + $0x108] sm:$0xff]
    %v2384 = vld [vmem:[#allocation6 + $0x110] sm:$0xff]
    %v2385 = vld [vmem:[#allocation6 + $0x118] sm:$0xff]
    %v2386 = vld [vmem:[#allocation6 + $0x120] sm:$0xff]
    %v2387 = vld [vmem:[#allocation6 + $0x128] sm:$0xff]
    %v2388 = vld [vmem:[#allocation6 + $0x130] sm:$0xff]
    %v2389 = vld [vmem:[#allocation6 + $0x138] sm:$0xff]
    %v2390 = vld [vmem:[#allocation6 + $0x140] sm:$0xff]
    %v2391 = vld [vmem:[#allocation6 + $0x148] sm:$0xff]
    %v2392 = vld [vmem:[#allocation6 + $0x150] sm:$0xff]
    %v2393 = vld [vmem:[#allocation6 + $0x158] sm:$0xff]
    %v2394 = vld [vmem:[#allocation6 + $0x160] sm:$0xff]
    %v2395 = vld [vmem:[#allocation6 + $0x168] sm:$0xff]
    %v2396 = vld [vmem:[#allocation6 + $0x170] sm:$0xff]
    %v2397 = vld [vmem:[#allocation6 + $0x178] sm:$0xff]
    %v2398 = vld [vmem:[#allocation6 + $0x180] sm:$0xff]
    %v2399 = vld [vmem:[#allocation6 + $0x188] sm:$0xff]
    %v2400 = vld [vmem:[#allocation6 + $0x190] sm:$0xff]
    %v2401 = vld [vmem:[#allocation6 + $0x198] sm:$0xff]
    %v2402 = vld [vmem:[#allocation6 + $0x1a0] sm:$0xff]
    %v2403 = vld [vmem:[#allocation6 + $0x1a8] sm:$0xff]
    %v2404 = vld [vmem:[#allocation6 + $0x1b0] sm:$0xff]
    %v2405 = vld [vmem:[#allocation6 + $0x1b8] sm:$0xff]
    %v2406 = vld [vmem:[#allocation6 + $0x1c0] sm:$0xff]
    %v2407 = vld [vmem:[#allocation6 + $0x1c8] sm:$0xff]
    %v2408 = vld [vmem:[#allocation6 + $0x1d0] sm:$0xff]
    %v2409 = vld [vmem:[#allocation6 + $0x1d8] sm:$0xff]
    %v2410 = vld [vmem:[#allocation6 + $0x1e0] sm:$0xff]
    %v2411 = vld [vmem:[#allocation6 + $0x1e8] sm:$0xff]
    %v2412 = vld [vmem:[#allocation6 + $0x1f0] sm:$0xff]
    %v2413 = vld [vmem:[#allocation6 + $0x1f8] sm:$0xff]
    %v2414 = vld [vmem:[%s6] sm:$0x3]
    %v2416 = vperm.slane %v2414, 0
    %v2417 = vperm.slane %v2414, 1
    %v2484 = vunpack.c.l.b16 %v2350
    %v2485 = vunpack.c.h.b16 %v2350
    %v2486 = vunpack.c.l.b16 %v2351
    %v2487 = vunpack.c.h.b16 %v2351
    %v2488 = vunpack.c.l.b16 %v2352
    %v2489 = vunpack.c.h.b16 %v2352
    %v2490 = vunpack.c.l.b16 %v2353
    %v2491 = vunpack.c.h.b16 %v2353
    %v2492 = vunpack.c.l.b16 %v2354
    %v2493 = vunpack.c.h.b16 %v2354
    %v2494 = vunpack.c.l.b16 %v2355
    %v2495 = vunpack.c.h.b16 %v2355
    %v2496 = vunpack.c.l.b16 %v2356
    %v2497 = vunpack.c.h.b16 %v2356
    %v2498 = vunpack.c.l.b16 %v2357
    %v2499 = vunpack.c.h.b16 %v2357
    %v2500 = vunpack.c.l.b16 %v2358
    %v2501 = vunpack.c.h.b16 %v2358
    %v2502 = vunpack.c.l.b16 %v2359
    %v2503 = vunpack.c.h.b16 %v2359
    %v2504 = vunpack.c.l.b16 %v2360
    %v2505 = vunpack.c.h.b16 %v2360
    %v2506 = vunpack.c.l.b16 %v2361
    %v2507 = vunpack.c.h.b16 %v2361
    %v2508 = vunpack.c.l.b16 %v2362
    %v2509 = vunpack.c.h.b16 %v2362
    %v2510 = vunpack.c.l.b16 %v2363
    %v2511 = vunpack.c.h.b16 %v2363
    %v2512 = vunpack.c.l.b16 %v2364
    %v2513 = vunpack.c.h.b16 %v2364
    %v2514 = vunpack.c.l.b16 %v2365
    %v2515 = vunpack.c.h.b16 %v2365
    %v2516 = vunpack.c.l.b16 %v2366
    %v2517 = vunpack.c.h.b16 %v2366
    %v2518 = vunpack.c.l.b16 %v2367
    %v2519 = vunpack.c.h.b16 %v2367
    %v2520 = vunpack.c.l.b16 %v2368
    %v2521 = vunpack.c.h.b16 %v2368
    %v2522 = vunpack.c.l.b16 %v2369
    %v2523 = vunpack.c.h.b16 %v2369
    %v2524 = vunpack.c.l.b16 %v2370
    %v2525 = vunpack.c.h.b16 %v2370
    %v2526 = vunpack.c.l.b16 %v2371
    %v2527 = vunpack.c.h.b16 %v2371
    %v2528 = vunpack.c.l.b16 %v2372
    %v2529 = vunpack.c.h.b16 %v2372
    %v2530 = vunpack.c.l.b16 %v2373
    %v2531 = vunpack.c.h.b16 %v2373
    %v2532 = vunpack.c.l.b16 %v2374
    %v2533 = vunpack.c.h.b16 %v2374
    %v2534 = vunpack.c.l.b16 %v2375
    %v2535 = vunpack.c.h.b16 %v2375
    %v2536 = vunpack.c.l.b16 %v2376
    %v2537 = vunpack.c.h.b16 %v2376
    %v2538 = vunpack.c.l.b16 %v2377
    %v2539 = vunpack.c.h.b16 %v2377
    %v2540 = vunpack.c.l.b16 %v2378
    %v2541 = vunpack.c.h.b16 %v2378
    %v2542 = vunpack.c.l.b16 %v2379
    %v2543 = vunpack.c.h.b16 %v2379
    %v2544 = vunpack.c.l.b16 %v2380
    %v2545 = vunpack.c.h.b16 %v2380
    %v2546 = vunpack.c.l.b16 %v2381
    %v2547 = vunpack.c.h.b16 %v2381
    %v2548 = vunpack.c.l.b16 %v2382
    %v2549 = vunpack.c.h.b16 %v2382
    %v2550 = vunpack.c.l.b16 %v2383
    %v2551 = vunpack.c.h.b16 %v2383
    %v2552 = vunpack.c.l.b16 %v2384
    %v2553 = vunpack.c.h.b16 %v2384
    %v2554 = vunpack.c.l.b16 %v2385
    %v2555 = vunpack.c.h.b16 %v2385
    %v2556 = vunpack.c.l.b16 %v2386
    %v2557 = vunpack.c.h.b16 %v2386
    %v2558 = vunpack.c.l.b16 %v2387
    %v2559 = vunpack.c.h.b16 %v2387
    %v2560 = vunpack.c.l.b16 %v2388
    %v2561 = vunpack.c.h.b16 %v2388
    %v2562 = vunpack.c.l.b16 %v2389
    %v2563 = vunpack.c.h.b16 %v2389
    %v2564 = vunpack.c.l.b16 %v2390
    %v2565 = vunpack.c.h.b16 %v2390
    %v2566 = vunpack.c.l.b16 %v2391
    %v2567 = vunpack.c.h.b16 %v2391
    %v2568 = vunpack.c.l.b16 %v2392
    %v2569 = vunpack.c.h.b16 %v2392
    %v2570 = vunpack.c.l.b16 %v2393
    %v2571 = vunpack.c.h.b16 %v2393
    %v2572 = vunpack.c.l.b16 %v2394
    %v2573 = vunpack.c.h.b16 %v2394
    %v2574 = vunpack.c.l.b16 %v2395
    %v2575 = vunpack.c.h.b16 %v2395
    %v2576 = vunpack.c.l.b16 %v2396
    %v2577 = vunpack.c.h.b16 %v2396
    %v2578 = vunpack.c.l.b16 %v2397
    %v2579 = vunpack.c.h.b16 %v2397
    %v2580 = vunpack.c.l.b16 %v2398
    %v2581 = vunpack.c.h.b16 %v2398
    %v2582 = vunpack.c.l.b16 %v2399
    %v2583 = vunpack.c.h.b16 %v2399
    %v2584 = vunpack.c.l.b16 %v2400
    %v2585 = vunpack.c.h.b16 %v2400
    %v2586 = vunpack.c.l.b16 %v2401
    %v2587 = vunpack.c.h.b16 %v2401
    %v2588 = vunpack.c.l.b16 %v2402
    %v2589 = vunpack.c.h.b16 %v2402
    %v2590 = vunpack.c.l.b16 %v2403
    %v2591 = vunpack.c.h.b16 %v2403
    %v2592 = vunpack.c.l.b16 %v2404
    %v2593 = vunpack.c.h.b16 %v2404
    %v2594 = vunpack.c.l.b16 %v2405
    %v2595 = vunpack.c.h.b16 %v2405
    %v2596 = vunpack.c.l.b16 %v2406
    %v2597 = vunpack.c.h.b16 %v2406
    %v2598 = vunpack.c.l.b16 %v2407
    %v2599 = vunpack.c.h.b16 %v2407
    %v2600 = vunpack.c.l.b16 %v2408
    %v2601 = vunpack.c.h.b16 %v2408
    %v2602 = vunpack.c.l.b16 %v2409
    %v2603 = vunpack.c.h.b16 %v2409
    %v2604 = vunpack.c.l.b16 %v2410
    %v2605 = vunpack.c.h.b16 %v2410
    %v2606 = vunpack.c.l.b16 %v2411
    %v2607 = vunpack.c.h.b16 %v2411
    %v2608 = vunpack.c.l.b16 %v2412
    %v2609 = vunpack.c.h.b16 %v2412
    %v2610 = vunpack.c.l.b16 %v2413
    %v2611 = vunpack.c.h.b16 %v2413
    %v2612 = vpack.c.b16 %v2486, %v2484
    %v2613 = vpack.c.b16 %v2487, %v2485
    %v2614 = vpack.c.b16 %v2490, %v2488
    %v2615 = vpack.c.b16 %v2491, %v2489
    %v2616 = vpack.c.b16 %v2494, %v2492
    %v2617 = vpack.c.b16 %v2495, %v2493
    %v2618 = vpack.c.b16 %v2498, %v2496
    %v2619 = vpack.c.b16 %v2499, %v2497
    %v2620 = vpack.c.b16 %v2502, %v2500
    %v2621 = vpack.c.b16 %v2503, %v2501
    %v2622 = vpack.c.b16 %v2506, %v2504
    %v2623 = vpack.c.b16 %v2507, %v2505
    %v2624 = vpack.c.b16 %v2510, %v2508
    %v2625 = vpack.c.b16 %v2511, %v2509
    %v2626 = vpack.c.b16 %v2514, %v2512
    %v2627 = vpack.c.b16 %v2515, %v2513
    %v2628 = vpack.c.b16 %v2518, %v2516
    %v2629 = vpack.c.b16 %v2519, %v2517
    %v2630 = vpack.c.b16 %v2522, %v2520
    %v2631 = vpack.c.b16 %v2523, %v2521
    %v2632 = vpack.c.b16 %v2526, %v2524
    %v2633 = vpack.c.b16 %v2527, %v2525
    %v2634 = vpack.c.b16 %v2530, %v2528
    %v2635 = vpack.c.b16 %v2531, %v2529
    %v2636 = vpack.c.b16 %v2534, %v2532
    %v2637 = vpack.c.b16 %v2535, %v2533
    %v2638 = vpack.c.b16 %v2538, %v2536
    %v2639 = vpack.c.b16 %v2539, %v2537
    %v2640 = vpack.c.b16 %v2542, %v2540
    %v2641 = vpack.c.b16 %v2543, %v2541
    %v2642 = vpack.c.b16 %v2546, %v2544
    %v2643 = vpack.c.b16 %v2547, %v2545
    %v2644 = vpack.c.b16 %v2550, %v2548
    %v2645 = vpack.c.b16 %v2551, %v2549
    %v2646 = vpack.c.b16 %v2554, %v2552
    %v2647 = vpack.c.b16 %v2555, %v2553
    %v2648 = vpack.c.b16 %v2558, %v2556
    %v2649 = vpack.c.b16 %v2559, %v2557
    %v2650 = vpack.c.b16 %v2562, %v2560
    %v2651 = vpack.c.b16 %v2563, %v2561
    %v2652 = vpack.c.b16 %v2566, %v2564
    %v2653 = vpack.c.b16 %v2567, %v2565
    %v2654 = vpack.c.b16 %v2570, %v2568
    %v2655 = vpack.c.b16 %v2571, %v2569
    %v2656 = vpack.c.b16 %v2574, %v2572
    %v2657 = vpack.c.b16 %v2575, %v2573
    %v2658 = vpack.c.b16 %v2578, %v2576
    %v2659 = vpack.c.b16 %v2579, %v2577
    %v2660 = vpack.c.b16 %v2582, %v2580
    %v2661 = vpack.c.b16 %v2583, %v2581
    %v2662 = vpack.c.b16 %v2586, %v2584
    %v2663 = vpack.c.b16 %v2587, %v2585
    %v2664 = vpack.c.b16 %v2590, %v2588
    %v2665 = vpack.c.b16 %v2591, %v2589
    %v2666 = vpack.c.b16 %v2594, %v2592
    %v2667 = vpack.c.b16 %v2595, %v2593
    %v2668 = vpack.c.b16 %v2598, %v2596
    %v2669 = vpack.c.b16 %v2599, %v2597
    %v2670 = vpack.c.b16 %v2602, %v2600
    %v2671 = vpack.c.b16 %v2603, %v2601
    %v2672 = vpack.c.b16 %v2606, %v2604
    %v2673 = vpack.c.b16 %v2607, %v2605
    %v2674 = vpack.c.b16 %v2610, %v2608
    %v2675 = vpack.c.b16 %v2611, %v2609
    %2740 = vmatpush.bf16.msra.mxu0 %v2626
    %2741 = vmatpush.bf16.msra.mxu0 %v2624
    %2742 = vmatpush.bf16.msra.mxu0 %v2622
    %2743 = vmatpush.bf16.msra.mxu0 %v2620
    %2744 = vmatpush.bf16.msra.mxu0 %v2618
    %2745 = vmatpush.bf16.msra.mxu0 %v2616
    %2746 = vmatpush.bf16.msra.mxu0 %v2614
    %2747 = vmatpush.bf16.msra.mxu0 %v2612
    %2748 = vmatmul.bf16.gmra.mxu0 %v2346
    %v2749 = vpop.f32.mrf.mxu0
    %v2750 = vadd.f32 %v2416, %v2749
    %v2751 = vpop.f32.mrf.mxu0
    %2752 = vdwg.mxu0
    %2753 = vmatpush.bf16.msra.mxu0 %v2642
    %2754 = vmatpush.bf16.msra.mxu0 %v2640
    %2755 = vmatpush.bf16.msra.mxu0 %v2638
    %2756 = vmatpush.bf16.msra.mxu0 %v2636
    %2757 = vmatpush.bf16.msra.mxu0 %v2634
    %2758 = vmatpush.bf16.msra.mxu0 %v2632
    %2759 = vmatpush.bf16.msra.mxu0 %v2630
    %2760 = vmatpush.bf16.msra.mxu0 %v2628
    %2761 = vmatmul.bf16.gmra.mxu0 %v2347
    %v2762 = vpop.f32.mrf.mxu0
    %v2763 = vadd.f32 %v2750, %v2762
    %v2764 = vpop.f32.mrf.mxu0
    %2765 = vdwg.mxu0
    %2766 = vmatpush.bf16.msra.mxu0 %v2658
    %2767 = vmatpush.bf16.msra.mxu0 %v2656
    %2768 = vmatpush.bf16.msra.mxu0 %v2654
    %2769 = vmatpush.bf16.msra.mxu0 %v2652
    %2770 = vmatpush.bf16.msra.mxu0 %v2650
    %2771 = vmatpush.bf16.msra.mxu0 %v2648
    %2772 = vmatpush.bf16.msra.mxu0 %v2646
    %2773 = vmatpush.bf16.msra.mxu0 %v2644
    %2774 = vmatmul.bf16.gmra.mxu0 %v2348
    %v2775 = vpop.f32.mrf.mxu0
    %v2776 = vadd.f32 %v2763, %v2775
    %v2777 = vpop.f32.mrf.mxu0
    %2778 = vdwg.mxu0
    %2779 = vmatpush.bf16.msra.mxu0 %v2674
    %2780 = vmatpush.bf16.msra.mxu0 %v2672
    %2781 = vmatpush.bf16.msra.mxu0 %v2670
    %2782 = vmatpush.bf16.msra.mxu0 %v2668
    %2783 = vmatpush.bf16.msra.mxu0 %v2666
    %2784 = vmatpush.bf16.msra.mxu0 %v2664
    %2785 = vmatpush.bf16.msra.mxu0 %v2662
    %2786 = vmatpush.bf16.msra.mxu0 %v2660
    %2787 = vmatmul.bf16.gmra.mxu0 %v2349
    %v2788 = vpop.f32.mrf.mxu0
    %v2789 = vadd.f32 %v2776, %v2788
    %v2790 = vpop.f32.mrf.mxu0
    %2791 = vdwg.mxu0
    %2792 = vmatpush.bf16.msra.mxu0 %v2627
    %2793 = vmatpush.bf16.msra.mxu0 %v2625
    %2794 = vmatpush.bf16.msra.mxu0 %v2623
    %2795 = vmatpush.bf16.msra.mxu0 %v2621
    %2796 = vmatpush.bf16.msra.mxu0 %v2619
    %2797 = vmatpush.bf16.msra.mxu0 %v2617
    %2798 = vmatpush.bf16.msra.mxu0 %v2615
    %2799 = vmatpush.bf16.msra.mxu0 %v2613
    %2800 = vmatmul.bf16.gmra.mxu0 %v2346
    %v2801 = vpop.f32.mrf.mxu0
    %v2802 = vadd.f32 %v2417, %v2801
    %v2803 = vpop.f32.mrf.mxu0
    %2804 = vdwg.mxu0
    %2805 = vmatpush.bf16.msra.mxu0 %v2643
    %2806 = vmatpush.bf16.msra.mxu0 %v2641
    %2807 = vmatpush.bf16.msra.mxu0 %v2639
    %2808 = vmatpush.bf16.msra.mxu0 %v2637
    %2809 = vmatpush.bf16.msra.mxu0 %v2635
    %2810 = vmatpush.bf16.msra.mxu0 %v2633
    %2811 = vmatpush.bf16.msra.mxu0 %v2631
    %2812 = vmatpush.bf16.msra.mxu0 %v2629
    %2813 = vmatmul.bf16.gmra.mxu0 %v2347
    %v2814 = vpop.f32.mrf.mxu0
    %v2815 = vadd.f32 %v2802, %v2814
    %v2816 = vpop.f32.mrf.mxu0
    %2817 = vdwg.mxu0
    %2818 = vmatpush.bf16.msra.mxu0 %v2659
    %2819 = vmatpush.bf16.msra.mxu0 %v2657
    %2820 = vmatpush.bf16.msra.mxu0 %v2655
    %2821 = vmatpush.bf16.msra.mxu0 %v2653
    %2822 = vmatpush.bf16.msra.mxu0 %v2651
    %2823 = vmatpush.bf16.msra.mxu0 %v2649
    %2824 = vmatpush.bf16.msra.mxu0 %v2647
    %2825 = vmatpush.bf16.msra.mxu0 %v2645
    %2826 = vmatmul.bf16.gmra.mxu0 %v2348
    %v2827 = vpop.f32.mrf.mxu0
    %v2828 = vadd.f32 %v2815, %v2827
    %v2829 = vpop.f32.mrf.mxu0
    %2830 = vdwg.mxu0
    %2831 = vmatpush.bf16.msra.mxu0 %v2675
    %2832 = vmatpush.bf16.msra.mxu0 %v2673
    %2833 = vmatpush.bf16.msra.mxu0 %v2671
    %2834 = vmatpush.bf16.msra.mxu0 %v2669
    %2835 = vmatpush.bf16.msra.mxu0 %v2667
    %2836 = vmatpush.bf16.msra.mxu0 %v2665
    %2837 = vmatpush.bf16.msra.mxu0 %v2663
    %2838 = vmatpush.bf16.msra.mxu0 %v2661
    %2839 = vmatmul.bf16.gmra.mxu0 %v2349
    %v2840 = vpop.f32.mrf.mxu0
    %v2841 = vadd.f32 %v2828, %v2840
    %v2842 = vpop.f32.mrf.mxu0
    %2843 = vdwg.mxu0
    %vm2844 = vcmp.gt.f32.partialorder %v2789, 0.0
    %vm2845 = vcmp.gt.f32.partialorder %v2841, 0.0
    %v2846 = vmul.f32 %v2789, 0.01
    %v2847 = vmul.f32 %v2841, 0.01
    %v2848 = vsel %vm2844, %v2789, %v2846
    %v2849 = vsel %vm2845, %v2841, %v2847
    %v2850 = vpack.c.bf16 %v2848, %v2848
    %v2851 = vpack.c.bf16 %v2849, %v2849
    %v2852 = vld [vmem:[#allocation7] sm:$0xf]
    %v2853 = vld [vmem:[#allocation7 + $0x4] sm:$0xf]
    %v2854 = vld [vmem:[#allocation7 + $0x8] sm:$0xf]
    %v2855 = vld [vmem:[#allocation7 + $0xc] sm:$0xf]
    %v2856 = vld [vmem:[#allocation7 + $0x10] sm:$0xf]
    %v2857 = vld [vmem:[#allocation7 + $0x14] sm:$0xf]
    %v2858 = vld [vmem:[#allocation7 + $0x18] sm:$0xf]
    %v2859 = vld [vmem:[#allocation7 + $0x1c] sm:$0xf]
    %v2860 = vld [vmem:[#allocation7 + $0x20] sm:$0xf]
    %v2861 = vld [vmem:[#allocation7 + $0x24] sm:$0xf]
    %v2862 = vld [vmem:[#allocation7 + $0x28] sm:$0xf]
    %v2863 = vld [vmem:[#allocation7 + $0x2c] sm:$0xf]
    %v2864 = vld [vmem:[#allocation7 + $0x30] sm:$0xf]
    %v2865 = vld [vmem:[#allocation7 + $0x34] sm:$0xf]
    %v2866 = vld [vmem:[#allocation7 + $0x38] sm:$0xf]
    %v2867 = vld [vmem:[#allocation7 + $0x3c] sm:$0xf]
    %v2868 = vld [vmem:[#allocation7 + $0x40] sm:$0xf]
    %v2869 = vld [vmem:[#allocation7 + $0x44] sm:$0xf]
    %v2870 = vld [vmem:[#allocation7 + $0x48] sm:$0xf]
    %v2871 = vld [vmem:[#allocation7 + $0x4c] sm:$0xf]
    %v2872 = vld [vmem:[#allocation7 + $0x50] sm:$0xf]
    %v2873 = vld [vmem:[#allocation7 + $0x54] sm:$0xf]
    %v2874 = vld [vmem:[#allocation7 + $0x58] sm:$0xf]
    %v2875 = vld [vmem:[#allocation7 + $0x5c] sm:$0xf]
    %v2876 = vld [vmem:[#allocation7 + $0x60] sm:$0xf]
    %v2877 = vld [vmem:[#allocation7 + $0x64] sm:$0xf]
    %v2878 = vld [vmem:[#allocation7 + $0x68] sm:$0xf]
    %v2879 = vld [vmem:[#allocation7 + $0x6c] sm:$0xf]
    %v2880 = vld [vmem:[#allocation7 + $0x70] sm:$0xf]
    %v2881 = vld [vmem:[#allocation7 + $0x74] sm:$0xf]
    %v2882 = vld [vmem:[#allocation7 + $0x78] sm:$0xf]
    %v2883 = vld [vmem:[#allocation7 + $0x7c] sm:$0xf]
    %v2884 = vld [vmem:[%s8] sm:$0x1]
    %v2886 = vperm.slane %v2884, 0
    %v2920 = vunpack.c.l.b16 %v2852
    %v2921 = vunpack.c.l.b16 %v2853
    %v2922 = vunpack.c.l.b16 %v2854
    %v2923 = vunpack.c.l.b16 %v2855
    %v2924 = vunpack.c.l.b16 %v2856
    %v2925 = vunpack.c.l.b16 %v2857
    %v2926 = vunpack.c.l.b16 %v2858
    %v2927 = vunpack.c.l.b16 %v2859
    %v2928 = vunpack.c.l.b16 %v2860
    %v2929 = vunpack.c.l.b16 %v2861
    %v2930 = vunpack.c.l.b16 %v2862
    %v2931 = vunpack.c.l.b16 %v2863
    %v2932 = vunpack.c.l.b16 %v2864
    %v2933 = vunpack.c.l.b16 %v2865
    %v2934 = vunpack.c.l.b16 %v2866
    %v2935 = vunpack.c.l.b16 %v2867
    %v2936 = vunpack.c.l.b16 %v2868
    %v2937 = vunpack.c.l.b16 %v2869
    %v2938 = vunpack.c.l.b16 %v2870
    %v2939 = vunpack.c.l.b16 %v2871
    %v2940 = vunpack.c.l.b16 %v2872
    %v2941 = vunpack.c.l.b16 %v2873
    %v2942 = vunpack.c.l.b16 %v2874
    %v2943 = vunpack.c.l.b16 %v2875
    %v2944 = vunpack.c.l.b16 %v2876
    %v2945 = vunpack.c.l.b16 %v2877
    %v2946 = vunpack.c.l.b16 %v2878
    %v2947 = vunpack.c.l.b16 %v2879
    %v2948 = vunpack.c.l.b16 %v2880
    %v2949 = vunpack.c.l.b16 %v2881
    %v2950 = vunpack.c.l.b16 %v2882
    %v2951 = vunpack.c.l.b16 %v2883
    %v2952 = vpack.c.b16 %v2921, %v2920
    %v2953 = vpack.c.b16 %v2923, %v2922
    %v2954 = vpack.c.b16 %v2925, %v2924
    %v2955 = vpack.c.b16 %v2927, %v2926
    %v2956 = vpack.c.b16 %v2929, %v2928
    %v2957 = vpack.c.b16 %v2931, %v2930
    %v2958 = vpack.c.b16 %v2933, %v2932
    %v2959 = vpack.c.b16 %v2935, %v2934
    %v2960 = vpack.c.b16 %v2937, %v2936
    %v2961 = vpack.c.b16 %v2939, %v2938
    %v2962 = vpack.c.b16 %v2941, %v2940
    %v2963 = vpack.c.b16 %v2943, %v2942
    %v2964 = vpack.c.b16 %v2945, %v2944
    %v2965 = vpack.c.b16 %v2947, %v2946
    %v2966 = vpack.c.b16 %v2949, %v2948
    %v2967 = vpack.c.b16 %v2951, %v2950
    %2984 = vmatpush.bf16.msra.mxu0 %v2959
    %2985 = vmatpush.bf16.msra.mxu0 %v2958
    %2986 = vmatpush.bf16.msra.mxu0 %v2957
    %2987 = vmatpush.bf16.msra.mxu0 %v2956
    %2988 = vmatpush.bf16.msra.mxu0 %v2955
    %2989 = vmatpush.bf16.msra.mxu0 %v2954
    %2990 = vmatpush.bf16.msra.mxu0 %v2953
    %2991 = vmatpush.bf16.msra.mxu0 %v2952
    %2992 = vmatmul.bf16.gmra.mxu0 %v2850
    %v2993 = vpop.f32.mrf.mxu0
    %v2994 = vadd.f32 %v2886, %v2993
    %v2995 = vpop.f32.mrf.mxu0
    %2996 = vdwg.mxu0
    %2997 = vmatpush.bf16.msra.mxu0 %v2967
    %2998 = vmatpush.bf16.msra.mxu0 %v2966
    %2999 = vmatpush.bf16.msra.mxu0 %v2965
    %3000 = vmatpush.bf16.msra.mxu0 %v2964
    %3001 = vmatpush.bf16.msra.mxu0 %v2963
    %3002 = vmatpush.bf16.msra.mxu0 %v2962
    %3003 = vmatpush.bf16.msra.mxu0 %v2961
    %3004 = vmatpush.bf16.msra.mxu0 %v2960
    %3005 = vmatmul.bf16.gmra.mxu0 %v2851
    %v3006 = vpop.f32.mrf.mxu0
    %v3007 = vadd.f32 %v2994, %v3006
    %v3008 = vpop.f32.mrf.mxu0
    %3009 = vdwg.mxu0
    %vm3010 = vcmp.gt.f32.partialorder %v3007, 0.0
    %v3011 = vmul.f32 %v3007, 0.01
    %v3012 = vsel %vm3010, %v3007, %v3011
    %v3013 = vpack.c.bf16 %v3012, %v3012
    %v3014 = vld [vmem:[#allocation9] sm:$0xf]
    %v3015 = vld [vmem:[#allocation9 + $0x4] sm:$0xf]
    %v3016 = vld [vmem:[#allocation9 + $0x8] sm:$0xf]
    %v3017 = vld [vmem:[#allocation9 + $0xc] sm:$0xf]
    %v3018 = vld [vmem:[#allocation9 + $0x10] sm:$0xf]
    %v3019 = vld [vmem:[#allocation9 + $0x14] sm:$0xf]
    %v3020 = vld [vmem:[#allocation9 + $0x18] sm:$0xf]
    %v3021 = vld [vmem:[#allocation9 + $0x1c] sm:$0xf]
    %v3022 = vld [vmem:[#allocation9 + $0x20] sm:$0xf]
    %v3023 = vld [vmem:[#allocation9 + $0x24] sm:$0xf]
    %v3024 = vld [vmem:[#allocation9 + $0x28] sm:$0xf]
    %v3025 = vld [vmem:[#allocation9 + $0x2c] sm:$0xf]
    %v3026 = vld [vmem:[#allocation9 + $0x30] sm:$0xf]
    %v3027 = vld [vmem:[#allocation9 + $0x34] sm:$0xf]
    %v3028 = vld [vmem:[#allocation9 + $0x38] sm:$0xf]
    %v3029 = vld [vmem:[#allocation9 + $0x3c] sm:$0xf]
    %v3030 = vld [vmem:[%s10] sm:$0x1]
    %v3032 = vperm.slane %v3030, 0
    %v3050 = vunpack.c.l.b16 %v3014
    %v3051 = vunpack.c.l.b16 %v3015
    %v3052 = vunpack.c.l.b16 %v3016
    %v3053 = vunpack.c.l.b16 %v3017
    %v3054 = vunpack.c.l.b16 %v3018
    %v3055 = vunpack.c.l.b16 %v3019
    %v3056 = vunpack.c.l.b16 %v3020
    %v3057 = vunpack.c.l.b16 %v3021
    %v3058 = vunpack.c.l.b16 %v3022
    %v3059 = vunpack.c.l.b16 %v3023
    %v3060 = vunpack.c.l.b16 %v3024
    %v3061 = vunpack.c.l.b16 %v3025
    %v3062 = vunpack.c.l.b16 %v3026
    %v3063 = vunpack.c.l.b16 %v3027
    %v3064 = vunpack.c.l.b16 %v3028
    %v3065 = vunpack.c.l.b16 %v3029
    %v3066 = vpack.c.b16 %v3051, %v3050
    %v3067 = vpack.c.b16 %v3053, %v3052
    %v3068 = vpack.c.b16 %v3055, %v3054
    %v3069 = vpack.c.b16 %v3057, %v3056
    %v3070 = vpack.c.b16 %v3059, %v3058
    %v3071 = vpack.c.b16 %v3061, %v3060
    %v3072 = vpack.c.b16 %v3063, %v3062
    %v3073 = vpack.c.b16 %v3065, %v3064
    %3082 = vmatpush.bf16.msra.mxu0 %v3073
    %3083 = vmatpush.bf16.msra.mxu0 %v3072
    %3084 = vmatpush.bf16.msra.mxu0 %v3071
    %3085 = vmatpush.bf16.msra.mxu0 %v3070
    %3086 = vmatpush.bf16.msra.mxu0 %v3069
    %3087 = vmatpush.bf16.msra.mxu0 %v3068
    %3088 = vmatpush.bf16.msra.mxu0 %v3067
    %3089 = vmatpush.bf16.msra.mxu0 %v3066
    %3090 = vmatmul.bf16.gmra.mxu0 %v3013
    %v3091 = vpop.f32.mrf.mxu0
    %v3092 = vadd.f32 %v3032, %v3091
    %v3093 = vpop.f32.mrf.mxu0
    %3094 = vdwg.mxu0
    %3095 = vst [vmem:[%s11] sm:$0xff] %v3092
    // Predicated region
    $region66: #{actor_forward.1} parent=1 // pred_check
      _
    $region67: #{actor_forward.1} parent=1 // pred_check_branch
      %3097 = sbr.rel (0) target = $region69
    $region68: #{actor_forward.1} parent=1 // pred_region
      _
    $region69: #{actor_forward.1} parent=1 // pred_fallthru
      _
    // Predicated region
    $region70: #{actor_forward.1} parent=1 // pred_check
      _
    $region71: #{actor_forward.1} parent=1 // pred_check_branch
      %3099 = sbr.rel (0) target = $region73
    $region72: #{actor_forward.1} parent=1 // pred_region
      _
    $region73: #{actor_forward.1} parent=1 // pred_fallthru
      _
    %3100 = vsyncpa [#allocation3], 1
    %3101 = vsyncpa [#allocation5], 1
    %3102 = vsyncpa [#allocation8], 1

// kernel: actor_forward.1
$region0: #{actor_forward.1}
  #allocation0 [shape = 'u32[]', space=smem, size = 0x4, offset = 0x4, fixed_abs, tag = 'smem constant byte address 0x4 - core index']
  #allocation1 [shape = 'u32[72,128]{1,0:T(1,128)}', space=vmem, size = 0x9000, scoped, tag = 'internal scratch']
  %s0 = inlined_call_operand.vmem [shape: bf16[8,32], index: 0, kind: input, shape index: {}]
  %s1 = inlined_call_operand.hbm [shape: bf16[32,1024], index: 1, kind: input, shape index: {}]
  %s2 = inlined_call_operand.vmem [shape: f32[1,1024], index: 2, kind: input, shape index: {}]
  %s3 = inlined_call_operand.hbm [shape: bf16[1024,512], index: 3, kind: input, shape index: {}]
  %s4 = inlined_call_operand.vmem [shape: f32[1,512], index: 4, kind: input, shape index: {}]
  %s5 = inlined_call_operand.hbm [shape: bf16[512,256], index: 5, kind: input, shape index: {}]
  %s6 = inlined_call_operand.vmem [shape: f32[1,256], index: 6, kind: input, shape index: {}]
  %s7 = inlined_call_operand.hbm [shape: bf16[256,128], index: 7, kind: input, shape index: {}]
  %s8 = inlined_call_operand.vmem [shape: f32[1,128], index: 8, kind: input, shape index: {}]
  %s9 = inlined_call_operand.hbm [shape: bf16[128,128], index: 9, kind: input, shape index: {}]
  %s10 = inlined_call_operand.vmem [shape: f32[1,128], index: 10, kind: input, shape index: {}]
  %s11 = inlined_call_operand.vmem [shape: f32[8,128], index: 11, kind: output, shape index: {}]
  %s12 = sld [smem:[#allocation0]]
  $region74: #{actor_forward.1} parent=0
    _
  %s14 = ssub.s32 1, %s12
  %s15 = scalar_select 0, %s14, %s12
  $region1: #{actor_forward.1} parent=0
    #allocation2 [shape = 'u8[65536]{0}', space=vmem, size = 0x10000, scoped, tag = 'input window, operand 1, single buffered']
    #allocation3 [shape = 's32[1]{0}', space=sflag, size = 0x4, scoped, tag = 'scoped memory for actor_forward.1']
    #allocation4 [shape = 'u8[1048576]{0}', space=vmem, size = 0x100000, scoped, tag = 'input window, operand 3, single buffered']
    #allocation5 [shape = 's32[1]{0}', space=sflag, size = 0x4, scoped, tag = 'scoped memory for actor_forward.1']
    #allocation6 [shape = 'u8[262144]{0}', space=vmem, size = 0x40000, scoped, tag = 'input window, operand 5, single buffered']
    #allocation7 [shape = 'u8[65536]{0}', space=vmem, size = 0x10000, scoped, tag = 'input window, operand 7, single buffered']
    #allocation8 [shape = 's32[1]{0}', space=sflag, size = 0x4, scoped, tag = 'scoped memory for actor_forward.1']
    #allocation9 [shape = 'u8[32768]{0}', space=vmem, size = 0x8000, scoped, tag = 'input window, operand 9, single buffered']
    %16 = vsyncpa [#allocation3], 0
    %17 = vsyncpa [#allocation5], 0
    %18 = vsyncpa [#allocation8], 0
    // Predicated region
    $region2: #{actor_forward.1} parent=1 // pred_check
      _
    $region3: #{actor_forward.1} parent=1 // pred_check_branch
      %20 = sbr.rel (0) target = $region5
    $region4: #{actor_forward.1} parent=1 // pred_region
      _
    $region5: #{actor_forward.1} parent=1 // pred_fallthru
      _
    // Predicated region
    $region6: #{actor_forward.1} parent=1 // pred_check
      _
    $region7: #{actor_forward.1} parent=1 // pred_check_branch
      %22 = sbr.rel (0) target = $region9
    $region8: #{actor_forward.1} parent=1 // pred_region
      %24 = vsyncadd [#allocation3], 0
      %s25 = sshll.u32 %s1, 4
      %s26 = int_to_ptr.hbm [resolvable:$true] %s25
      %s27 = sshll.u32 [#allocation2], 4
      %s28 = int_to_ptr.vmem [resolvable:$true] %s27
      %33 = dma.hbm_to_vmem [thread:$0]  %s26, 2048, %s28, [#allocation3], 512, 512, 32
    $region9: #{actor_forward.1} parent=1 // pred_fallthru
      _
    // Predicated region
    $region10: #{actor_forward.1} parent=1 // pred_check
      _
    $region11: #{actor_forward.1} parent=1 // pred_check_branch
      %35 = sbr.rel (0) target = $region13
    $region12: #{actor_forward.1} parent=1 // pred_region
      _
    $region13: #{actor_forward.1} parent=1 // pred_fallthru
      _
    // Predicated region
    $region14: #{actor_forward.1} parent=1 // pred_check
      _
    $region15: #{actor_forward.1} parent=1 // pred_check_branch
      %37 = sbr.rel (0) target = $region17
    $region16: #{actor_forward.1} parent=1 // pred_region
      %39 = vsyncadd [#allocation5], 0
      %s40 = sshll.u32 %s3, 4
      %s41 = int_to_ptr.hbm [resolvable:$true] %s40
      %s42 = sshll.u32 [#allocation4], 4
      %s43 = int_to_ptr.vmem [resolvable:$true] %s42
      %48 = dma.hbm_to_vmem [thread:$0]  %s41, 32768, %s43, [#allocation5], 256, 256, 16
    $region17: #{actor_forward.1} parent=1 // pred_fallthru
      _
    // Predicated region
    $region18: #{actor_forward.1} parent=1 // pred_check
      _
    $region19: #{actor_forward.1} parent=1 // pred_check_branch
      %50 = sbr.rel (0) target = $region21
    $region20: #{actor_forward.1} parent=1 // pred_region
      _
    $region21: #{actor_forward.1} parent=1 // pred_fallthru
      _
    // Predicated region
    $region22: #{actor_forward.1} parent=1 // pred_check
      _
    $region23: #{actor_forward.1} parent=1 // pred_check_branch
      %52 = sbr.rel (0) target = $region25
    $region24: #{actor_forward.1} parent=1 // pred_region
      %54 = vsyncadd [#allocation5], 0
      %s55 = sshll.u32 %s5, 4
      %s56 = int_to_ptr.hbm [resolvable:$true] %s55
      %s57 = sshll.u32 [#allocation6], 4
      %s58 = int_to_ptr.vmem [resolvable:$true] %s57
      %63 = dma.hbm_to_vmem [thread:$0]  %s56, 8192, %s58, [#allocation5], 128, 128, 8
    $region25: #{actor_forward.1} parent=1 // pred_fallthru
      _
    // Predicated region
    $region26: #{actor_forward.1} parent=1 // pred_check
      _
    $region27: #{actor_forward.1} parent=1 // pred_check_branch
      %65 = sbr.rel (0) target = $region29
    $region28: #{actor_forward.1} parent=1 // pred_region
      _
    $region29: #{actor_forward.1} parent=1 // pred_fallthru
      _
    // Predicated region
    $region30: #{actor_forward.1} parent=1 // pred_check
      _
    $region31: #{actor_forward.1} parent=1 // pred_check_branch
      %67 = sbr.rel (0) target = $region33
    $region32: #{actor_forward.1} parent=1 // pred_region
      %69 = vsyncadd [#allocation8], 0
      %s70 = sshll.u32 %s7, 4
      %s71 = int_to_ptr.hbm [resolvable:$true] %s70
      %s72 = sshll.u32 [#allocation7], 4
      %s73 = int_to_ptr.vmem [resolvable:$true] %s72
      %78 = dma.hbm_to_vmem [thread:$0]  %s71, 2048, %s73, [#allocation8], 64, 64, 4
    $region33: #{actor_forward.1} parent=1 // pred_fallthru
      _
    // Predicated region
    $region34: #{actor_forward.1} parent=1 // pred_check
      _
    $region35: #{actor_forward.1} parent=1 // pred_check_branch
      %80 = sbr.rel (0) target = $region37
    $region36: #{actor_forward.1} parent=1 // pred_region
      _
    $region37: #{actor_forward.1} parent=1 // pred_fallthru
      _
    // Predicated region
    $region38: #{actor_forward.1} parent=1 // pred_check
      _
    $region39: #{actor_forward.1} parent=1 // pred_check_branch
      %82 = sbr.rel (0) target = $region41
    $region40: #{actor_forward.1} parent=1 // pred_region
      %84 = vsyncadd [#allocation8], 0
      %s85 = sshll.u32 %s9, 4
      %s86 = int_to_ptr.hbm [resolvable:$true] %s85
      %s87 = sshll.u32 [#allocation9], 4
      %s88 = int_to_ptr.vmem [resolvable:$true] %s87
      %93 = dma.hbm_to_vmem [thread:$0]  %s86, 1024, %s88, [#allocation8], 64, 64, 4
    $region41: #{actor_forward.1} parent=1 // pred_fallthru
      _
    // Predicated region
    $region42: #{actor_forward.1} parent=1 // pred_check
      _
    $region43: #{actor_forward.1} parent=1 // pred_check_branch
      %95 = sbr.rel (0) target = $region45
    $region44: #{actor_forward.1} parent=1 // pred_region
      _
    $region45: #{actor_forward.1} parent=1 // pred_fallthru
      _
    // Predicated region
    $region46: #{actor_forward.1} parent=1 // pred_check
      _
    $region47: #{actor_forward.1} parent=1 // pred_check_branch
      %97 = sbr.rel (0) target = $region49
    $region48: #{actor_forward.1} parent=1 // pred_region
      %99 = dma.done [#allocation3], 2048
    $region49: #{actor_forward.1} parent=1 // pred_fallthru
      _
    // Predicated region
    $region50: #{actor_forward.1} parent=1 // pred_check
      _
    $region51: #{actor_forward.1} parent=1 // pred_check_branch
      %101 = sbr.rel (0) target = $region53
    $region52: #{actor_forward.1} parent=1 // pred_region
      %103 = dma.done [#allocation5], 32768
    $region53: #{actor_forward.1} parent=1 // pred_fallthru
      _
    // Predicated region
    $region54: #{actor_forward.1} parent=1 // pred_check
      _
    $region55: #{actor_forward.1} parent=1 // pred_check_branch
      %105 = sbr.rel (0) target = $region57
    $region56: #{actor_forward.1} parent=1 // pred_region
      %107 = dma.done [#allocation5], 8192
    $region57: #{actor_forward.1} parent=1 // pred_fallthru
      _
    // Predicated region
    $region58: #{actor_forward.1} parent=1 // pred_check
      _
    $region59: #{actor_forward.1} parent=1 // pred_check_branch
      %109 = sbr.rel (0) target = $region61
    $region60: #{actor_forward.1} parent=1 // pred_region
      %111 = dma.done [#allocation8], 2048
    $region61: #{actor_forward.1} parent=1 // pred_fallthru
      _
    // Predicated region
    $region62: #{actor_forward.1} parent=1 // pred_check
      _
    $region63: #{actor_forward.1} parent=1 // pred_check_branch
      %113 = sbr.rel (0) target = $region65
    $region64: #{actor_forward.1} parent=1 // pred_region
      %115 = dma.done [#allocation8], 1024
    $region65: #{actor_forward.1} parent=1 // pred_fallthru
      _
    %v117 = vld [vmem:[%s0] sm:$0xf]
    %v118 = vld [vmem:[#allocation2] sm:$0xff]
    %v119 = vld [vmem:[#allocation2 + $0x8] sm:$0xff]
    %v120 = vld [vmem:[#allocation2 + $0x10] sm:$0xff]
    %v121 = vld [vmem:[#allocation2 + $0x18] sm:$0xff]
    %v122 = vld [vmem:[#allocation2 + $0x20] sm:$0xff]
    %v123 = vld [vmem:[#allocation2 + $0x28] sm:$0xff]
    %v124 = vld [vmem:[#allocation2 + $0x30] sm:$0xff]
    %v125 = vld [vmem:[#allocation2 + $0x38] sm:$0xff]
    %v126 = vld [vmem:[#allocation2 + $0x40] sm:$0xff]
    %v127 = vld [vmem:[#allocation2 + $0x48] sm:$0xff]
    %v128 = vld [vmem:[#allocation2 + $0x50] sm:$0xff]
    %v129 = vld [vmem:[#allocation2 + $0x58] sm:$0xff]
    %v130 = vld [vmem:[#allocation2 + $0x60] sm:$0xff]
    %v131 = vld [vmem:[#allocation2 + $0x68] sm:$0xff]
    %v132 = vld [vmem:[#allocation2 + $0x70] sm:$0xff]
    %v133 = vld [vmem:[#allocation2 + $0x78] sm:$0xff]
    %v134 = vld [vmem:[%s2] sm:$0xff]
    %v136 = vperm.slane %v134, 0
    %v137 = vperm.slane %v134, 1
    %v138 = vperm.slane %v134, 2
    %v139 = vperm.slane %v134, 3
    %v140 = vperm.slane %v134, 4
    %v141 = vperm.slane %v134, 5
    %v142 = vperm.slane %v134, 6
    %v143 = vperm.slane %v134, 7
    %v168 = vunpack.c.l.b16 %v118
    %v169 = vunpack.c.h.b16 %v118
    %v170 = vunpack.c.l.b16 %v119
    %v171 = vunpack.c.h.b16 %v119
    %v172 = vunpack.c.l.b16 %v120
    %v173 = vunpack.c.h.b16 %v120
    %v174 = vunpack.c.l.b16 %v121
    %v175 = vunpack.c.h.b16 %v121
    %v176 = vunpack.c.l.b16 %v122
    %v177 = vunpack.c.h.b16 %v122
    %v178 = vunpack.c.l.b16 %v123
    %v179 = vunpack.c.h.b16 %v123
    %v180 = vunpack.c.l.b16 %v124
    %v181 = vunpack.c.h.b16 %v124
    %v182 = vunpack.c.l.b16 %v125
    %v183 = vunpack.c.h.b16 %v125
    %v184 = vunpack.c.l.b16 %v126
    %v185 = vunpack.c.h.b16 %v126
    %v186 = vunpack.c.l.b16 %v127
    %v187 = vunpack.c.h.b16 %v127
    %v188 = vunpack.c.l.b16 %v128
    %v189 = vunpack.c.h.b16 %v128
    %v190 = vunpack.c.l.b16 %v129
    %v191 = vunpack.c.h.b16 %v129
    %v192 = vunpack.c.l.b16 %v130
    %v193 = vunpack.c.h.b16 %v130
    %v194 = vunpack.c.l.b16 %v131
    %v195 = vunpack.c.h.b16 %v131
    %v196 = vunpack.c.l.b16 %v132
    %v197 = vunpack.c.h.b16 %v132
    %v198 = vunpack.c.l.b16 %v133
    %v199 = vunpack.c.h.b16 %v133
    %v200 = vpack.c.b16 %v176, %v168
    %v201 = vpack.c.b16 %v177, %v169
    %v202 = vpack.c.b16 %v178, %v170
    %v203 = vpack.c.b16 %v179, %v171
    %v204 = vpack.c.b16 %v180, %v172
    %v205 = vpack.c.b16 %v181, %v173
    %v206 = vpack.c.b16 %v182, %v174
    %v207 = vpack.c.b16 %v183, %v175
    %v208 = vpack.c.b16 %v192, %v184
    %v209 = vpack.c.b16 %v193, %v185
    %v210 = vpack.c.b16 %v194, %v186
    %v211 = vpack.c.b16 %v195, %v187
    %v212 = vpack.c.b16 %v196, %v188
    %v213 = vpack.c.b16 %v197, %v189
    %v214 = vpack.c.b16 %v198, %v190
    %v215 = vpack.c.b16 %v199, %v191
    %vm232 = vcmask 261120
    %v234 = vsel %vm232, %v117, 0
    %236 = vmatpush.bf16.msra.mxu0 0
    %237 = vmatpush.bf16.msra.mxu0 0
    %238 = vmatpush.bf16.msra.mxu0 0
    %239 = vmatpush.bf16.msra.mxu0 0
    %240 = vmatpush.bf16.msra.mxu0 0
    %241 = vmatpush.bf16.msra.mxu0 0
    %242 = vmatpush.bf16.msra.mxu0 %v208
    %243 = vmatpush.bf16.msra.mxu0 %v200
    %244 = vmatmul.bf16.gmra.mxu0 %v234
    %v245 = vpop.f32.mrf.mxu0
    %v246 = vadd.f32 %v136, %v245
    %v247 = vpop.f32.mrf.mxu0
    %248 = vdwg.mxu0
    %249 = vmatpush.bf16.msra.mxu0 0
    %250 = vmatpush.bf16.msra.mxu0 0
    %251 = vmatpush.bf16.msra.mxu0 0
    %252 = vmatpush.bf16.msra.mxu0 0
    %253 = vmatpush.bf16.msra.mxu0 0
    %254 = vmatpush.bf16.msra.mxu0 0
    %255 = vmatpush.bf16.msra.mxu0 %v209
    %256 = vmatpush.bf16.msra.mxu0 %v201
    %257 = vmatmul.bf16.gmra.mxu0 %v234
    %v258 = vpop.f32.mrf.mxu0
    %v259 = vadd.f32 %v137, %v258
    %v260 = vpop.f32.mrf.mxu0
    %261 = vdwg.mxu0
    %262 = vmatpush.bf16.msra.mxu0 0
    %263 = vmatpush.bf16.msra.mxu0 0
    %264 = vmatpush.bf16.msra.mxu0 0
    %265 = vmatpush.bf16.msra.mxu0 0
    %266 = vmatpush.bf16.msra.mxu0 0
    %267 = vmatpush.bf16.msra.mxu0 0
    %268 = vmatpush.bf16.msra.mxu0 %v210
    %269 = vmatpush.bf16.msra.mxu0 %v202
    %270 = vmatmul.bf16.gmra.mxu0 %v234
    %v271 = vpop.f32.mrf.mxu0
    %v272 = vadd.f32 %v138, %v271
    %v273 = vpop.f32.mrf.mxu0
    %274 = vdwg.mxu0
    %275 = vmatpush.bf16.msra.mxu0 0
    %276 = vmatpush.bf16.msra.mxu0 0
    %277 = vmatpush.bf16.msra.mxu0 0
    %278 = vmatpush.bf16.msra.mxu0 0
    %279 = vmatpush.bf16.msra.mxu0 0
    %280 = vmatpush.bf16.msra.mxu0 0
    %281 = vmatpush.bf16.msra.mxu0 %v211
    %282 = vmatpush.bf16.msra.mxu0 %v203
    %283 = vmatmul.bf16.gmra.mxu0 %v234
    %v284 = vpop.f32.mrf.mxu0
    %v285 = vadd.f32 %v139, %v284
    %v286 = vpop.f32.mrf.mxu0
    %287 = vdwg.mxu0
    %288 = vmatpush.bf16.msra.mxu0 0
    %289 = vmatpush.bf16.msra.mxu0 0
    %290 = vmatpush.bf16.msra.mxu0 0
    %291 = vmatpush.bf16.msra.mxu0 0
    %292 = vmatpush.bf16.msra.mxu0 0
    %293 = vmatpush.bf16.msra.mxu0 0
    %294 = vmatpush.bf16.msra.mxu0 %v212
    %295 = vmatpush.bf16.msra.mxu0 %v204
    %296 = vmatmul.bf16.gmra.mxu0 %v234
    %v297 = vpop.f32.mrf.mxu0
    %v298 = vadd.f32 %v140, %v297
    %v299 = vpop.f32.mrf.mxu0
    %300 = vdwg.mxu0
    %301 = vmatpush.bf16.msra.mxu0 0
    %302 = vmatpush.bf16.msra.mxu0 0
    %303 = vmatpush.bf16.msra.mxu0 0
    %304 = vmatpush.bf16.msra.mxu0 0
    %305 = vmatpush.bf16.msra.mxu0 0
    %306 = vmatpush.bf16.msra.mxu0 0
    %307 = vmatpush.bf16.msra.mxu0 %v213
    %308 = vmatpush.bf16.msra.mxu0 %v205
    %309 = vmatmul.bf16.gmra.mxu0 %v234
    %v310 = vpop.f32.mrf.mxu0
    %v311 = vadd.f32 %v141, %v310
    %v312 = vpop.f32.mrf.mxu0
    %313 = vdwg.mxu0
    %314 = vmatpush.bf16.msra.mxu0 0
    %315 = vmatpush.bf16.msra.mxu0 0
    %316 = vmatpush.bf16.msra.mxu0 0
    %317 = vmatpush.bf16.msra.mxu0 0
    %318 = vmatpush.bf16.msra.mxu0 0
    %319 = vmatpush.bf16.msra.mxu0 0
    %320 = vmatpush.bf16.msra.mxu0 %v214
    %321 = vmatpush.bf16.msra.mxu0 %v206
    %322 = vmatmul.bf16.gmra.mxu0 %v234
    %v323 = vpop.f32.mrf.mxu0
    %v324 = vadd.f32 %v142, %v323
    %v325 = vpop.f32.mrf.mxu0
    %326 = vdwg.mxu0
    %327 = vmatpush.bf16.msra.mxu0 0
    %328 = vmatpush.bf16.msra.mxu0 0
    %329 = vmatpush.bf16.msra.mxu0 0
    %330 = vmatpush.bf16.msra.mxu0 0
    %331 = vmatpush.bf16.msra.mxu0 0
    %332 = vmatpush.bf16.msra.mxu0 0
    %333 = vmatpush.bf16.msra.mxu0 %v215
    %334 = vmatpush.bf16.msra.mxu0 %v207
    %335 = vmatmul.bf16.gmra.mxu0 %v234
    %v336 = vpop.f32.mrf.mxu0
    %v337 = vadd.f32 %v143, %v336
    %v338 = vpop.f32.mrf.mxu0
    %339 = vdwg.mxu0
    %vm340 = vcmp.gt.f32.partialorder %v246, 0.0
    %vm341 = vcmp.gt.f32.partialorder %v259, 0.0
    %vm342 = vcmp.gt.f32.partialorder %v272, 0.0
    %vm343 = vcmp.gt.f32.partialorder %v285, 0.0
    %vm344 = vcmp.gt.f32.partialorder %v298, 0.0
    %vm345 = vcmp.gt.f32.partialorder %v311, 0.0
    %vm346 = vcmp.gt.f32.partialorder %v324, 0.0
    %vm347 = vcmp.gt.f32.partialorder %v337, 0.0
    %v348 = vmul.f32 %v246, 0.01
    %v349 = vmul.f32 %v259, 0.01
    %v350 = vmul.f32 %v272, 0.01
    %v351 = vmul.f32 %v285, 0.01
    %v352 = vmul.f32 %v298, 0.01
    %v353 = vmul.f32 %v311, 0.01
    %v354 = vmul.f32 %v324, 0.01
    %v355 = vmul.f32 %v337, 0.01
    %v356 = vsel %vm340, %v246, %v348
    %v357 = vsel %vm341, %v259, %v349
    %v358 = vsel %vm342, %v272, %v350
    %v359 = vsel %vm343, %v285, %v351
    %v360 = vsel %vm344, %v298, %v352
    %v361 = vsel %vm345, %v311, %v353
    %v362 = vsel %vm346, %v324, %v354
    %v363 = vsel %vm347, %v337, %v355
    %v364 = vpack.c.bf16 %v356, %v356
    %v365 = vpack.c.bf16 %v357, %v357
    %v366 = vpack.c.bf16 %v358, %v358
    %v367 = vpack.c.bf16 %v359, %v359
    %v368 = vpack.c.bf16 %v360, %v360
    %v369 = vpack.c.bf16 %v361, %v361
    %v370 = vpack.c.bf16 %v362, %v362
    %v371 = vpack.c.bf16 %v363, %v363
    %v372 = vld [vmem:[#allocation4] sm:$0xff]
    %v373 = vld [vmem:[#allocation4 + $0x8] sm:$0xff]
    %v374 = vld [vmem:[#allocation4 + $0x10] sm:$0xff]
    %v375 = vld [vmem:[#allocation4 + $0x18] sm:$0xff]
    %v376 = vld [vmem:[#allocation4 + $0x20] sm:$0xff]
    %v377 = vld [vmem:[#allocation4 + $0x28] sm:$0xff]
    %v378 = vld [vmem:[#allocation4 + $0x30] sm:$0xff]
    %v379 = vld [vmem:[#allocation4 + $0x38] sm:$0xff]
    %v380 = vld [vmem:[#allocation4 + $0x40] sm:$0xff]
    %v381 = vld [vmem:[#allocation4 + $0x48] sm:$0xff]
    %v382 = vld [vmem:[#allocation4 + $0x50] sm:$0xff]
    %v383 = vld [vmem:[#allocation4 + $0x58] sm:$0xff]
    %v384 = vld [vmem:[#allocation4 + $0x60] sm:$0xff]
    %v385 = vld [vmem:[#allocation4 + $0x68] sm:$0xff]
    %v386 = vld [vmem:[#allocation4 + $0x70] sm:$0xff]
    %v387 = vld [vmem:[#allocation4 + $0x78] sm:$0xff]
    %v388 = vld [vmem:[#allocation4 + $0x80] sm:$0xff]
    %v389 = vld [vmem:[#allocation4 + $0x88] sm:$0xff]
    %v390 = vld [vmem:[#allocation4 + $0x90] sm:$0xff]
    %v391 = vld [vmem:[#allocation4 + $0x98] sm:$0xff]
    %v392 = vld [vmem:[#allocation4 + $0xa0] sm:$0xff]
    %v393 = vld [vmem:[#allocation4 + $0xa8] sm:$0xff]
    %v394 = vld [vmem:[#allocation4 + $0xb0] sm:$0xff]
    %v395 = vld [vmem:[#allocation4 + $0xb8] sm:$0xff]
    %v396 = vld [vmem:[#allocation4 + $0xc0] sm:$0xff]
    %v397 = vld [vmem:[#allocation4 + $0xc8] sm:$0xff]
    %v398 = vld [vmem:[#allocation4 + $0xd0] sm:$0xff]
    %v399 = vld [vmem:[#allocation4 + $0xd8] sm:$0xff]
    %v400 = vld [vmem:[#allocation4 + $0xe0] sm:$0xff]
    %v401 = vld [vmem:[#allocation4 + $0xe8] sm:$0xff]
    %v402 = vld [vmem:[#allocation4 + $0xf0] sm:$0xff]
    %v403 = vld [vmem:[#allocation4 + $0xf8] sm:$0xff]
    %v404 = vld [vmem:[#allocation4 + $0x100] sm:$0xff]
    %v405 = vld [vmem:[#allocation4 + $0x108] sm:$0xff]
    %v406 = vld [vmem:[#allocation4 + $0x110] sm:$0xff]
    %v407 = vld [vmem:[#allocation4 + $0x118] sm:$0xff]
    %v408 = vld [vmem:[#allocation4 + $0x120] sm:$0xff]
    %v409 = vld [vmem:[#allocation4 + $0x128] sm:$0xff]
    %v410 = vld [vmem:[#allocation4 + $0x130] sm:$0xff]
    %v411 = vld [vmem:[#allocation4 + $0x138] sm:$0xff]
    %v412 = vld [vmem:[#allocation4 + $0x140] sm:$0xff]
    %v413 = vld [vmem:[#allocation4 + $0x148] sm:$0xff]
    %v414 = vld [vmem:[#allocation4 + $0x150] sm:$0xff]
    %v415 = vld [vmem:[#allocation4 + $0x158] sm:$0xff]
    %v416 = vld [vmem:[#allocation4 + $0x160] sm:$0xff]
    %v417 = vld [vmem:[#allocation4 + $0x168] sm:$0xff]
    %v418 = vld [vmem:[#allocation4 + $0x170] sm:$0xff]
    %v419 = vld [vmem:[#allocation4 + $0x178] sm:$0xff]
    %v420 = vld [vmem:[#allocation4 + $0x180] sm:$0xff]
    %v421 = vld [vmem:[#allocation4 + $0x188] sm:$0xff]
    %v422 = vld [vmem:[#allocation4 + $0x190] sm:$0xff]
    %v423 = vld [vmem:[#allocation4 + $0x198] sm:$0xff]
    %v424 = vld [vmem:[#allocation4 + $0x1a0] sm:$0xff]
    %v425 = vld [vmem:[#allocation4 + $0x1a8] sm:$0xff]
    %v426 = vld [vmem:[#allocation4 + $0x1b0] sm:$0xff]
    %v427 = vld [vmem:[#allocation4 + $0x1b8] sm:$0xff]
    %v428 = vld [vmem:[#allocation4 + $0x1c0] sm:$0xff]
    %v429 = vld [vmem:[#allocation4 + $0x1c8] sm:$0xff]
    %v430 = vld [vmem:[#allocation4 + $0x1d0] sm:$0xff]
    %v431 = vld [vmem:[#allocation4 + $0x1d8] sm:$0xff]
    %v432 = vld [vmem:[#allocation4 + $0x1e0] sm:$0xff]
    %v433 = vld [vmem:[#allocation4 + $0x1e8] sm:$0xff]
    %v434 = vld [vmem:[#allocation4 + $0x1f0] sm:$0xff]
    %v435 = vld [vmem:[#allocation4 + $0x1f8] sm:$0xff]
    %v436 = vld [vmem:[#allocation4 + $0x200] sm:$0xff]
    %v437 = vld [vmem:[#allocation4 + $0x208] sm:$0xff]
    %v438 = vld [vmem:[#allocation4 + $0x210] sm:$0xff]
    %v439 = vld [vmem:[#allocation4 + $0x218] sm:$0xff]
    %v440 = vld [vmem:[#allocation4 + $0x220] sm:$0xff]
    %v441 = vld [vmem:[#allocation4 + $0x228] sm:$0xff]
    %v442 = vld [vmem:[#allocation4 + $0x230] sm:$0xff]
    %v443 = vld [vmem:[#allocation4 + $0x238] sm:$0xff]
    %v444 = vld [vmem:[#allocation4 + $0x240] sm:$0xff]
    %v445 = vld [vmem:[#allocation4 + $0x248] sm:$0xff]
    %v446 = vld [vmem:[#allocation4 + $0x250] sm:$0xff]
    %v447 = vld [vmem:[#allocation4 + $0x258] sm:$0xff]
    %v448 = vld [vmem:[#allocation4 + $0x260] sm:$0xff]
    %v449 = vld [vmem:[#allocation4 + $0x268] sm:$0xff]
    %v450 = vld [vmem:[#allocation4 + $0x270] sm:$0xff]
    %v451 = vld [vmem:[#allocation4 + $0x278] sm:$0xff]
    %v452 = vld [vmem:[#allocation4 + $0x280] sm:$0xff]
    %v453 = vld [vmem:[#allocation4 + $0x288] sm:$0xff]
    %v454 = vld [vmem:[#allocation4 + $0x290] sm:$0xff]
    %v455 = vld [vmem:[#allocation4 + $0x298] sm:$0xff]
    %v456 = vld [vmem:[#allocation4 + $0x2a0] sm:$0xff]
    %v457 = vld [vmem:[#allocation4 + $0x2a8] sm:$0xff]
    %v458 = vld [vmem:[#allocation4 + $0x2b0] sm:$0xff]
    %v459 = vld [vmem:[#allocation4 + $0x2b8] sm:$0xff]
    %v460 = vld [vmem:[#allocation4 + $0x2c0] sm:$0xff]
    %v461 = vld [vmem:[#allocation4 + $0x2c8] sm:$0xff]
    %v462 = vld [vmem:[#allocation4 + $0x2d0] sm:$0xff]
    %v463 = vld [vmem:[#allocation4 + $0x2d8] sm:$0xff]
    %v464 = vld [vmem:[#allocation4 + $0x2e0] sm:$0xff]
    %v465 = vld [vmem:[#allocation4 + $0x2e8] sm:$0xff]
    %v466 = vld [vmem:[#allocation4 + $0x2f0] sm:$0xff]
    %v467 = vld [vmem:[#allocation4 + $0x2f8] sm:$0xff]
    %v468 = vld [vmem:[#allocation4 + $0x300] sm:$0xff]
    %v469 = vld [vmem:[#allocation4 + $0x308] sm:$0xff]
    %v470 = vld [vmem:[#allocation4 + $0x310] sm:$0xff]
    %v471 = vld [vmem:[#allocation4 + $0x318] sm:$0xff]
    %v472 = vld [vmem:[#allocation4 + $0x320] sm:$0xff]
    %v473 = vld [vmem:[#allocation4 + $0x328] sm:$0xff]
    %v474 = vld [vmem:[#allocation4 + $0x330] sm:$0xff]
    %v475 = vld [vmem:[#allocation4 + $0x338] sm:$0xff]
    %v476 = vld [vmem:[#allocation4 + $0x340] sm:$0xff]
    %v477 = vld [vmem:[#allocation4 + $0x348] sm:$0xff]
    %v478 = vld [vmem:[#allocation4 + $0x350] sm:$0xff]
    %v479 = vld [vmem:[#allocation4 + $0x358] sm:$0xff]
    %v480 = vld [vmem:[#allocation4 + $0x360] sm:$0xff]
    %v481 = vld [vmem:[#allocation4 + $0x368] sm:$0xff]
    %v482 = vld [vmem:[#allocation4 + $0x370] sm:$0xff]
    %v483 = vld [vmem:[#allocation4 + $0x378] sm:$0xff]
    %v484 = vld [vmem:[#allocation4 + $0x380] sm:$0xff]
    %v485 = vld [vmem:[#allocation4 + $0x388] sm:$0xff]
    %v486 = vld [vmem:[#allocation4 + $0x390] sm:$0xff]
    %v487 = vld [vmem:[#allocation4 + $0x398] sm:$0xff]
    %v488 = vld [vmem:[#allocation4 + $0x3a0] sm:$0xff]
    %v489 = vld [vmem:[#allocation4 + $0x3a8] sm:$0xff]
    %v490 = vld [vmem:[#allocation4 + $0x3b0] sm:$0xff]
    %v491 = vld [vmem:[#allocation4 + $0x3b8] sm:$0xff]
    %v492 = vld [vmem:[#allocation4 + $0x3c0] sm:$0xff]
    %v493 = vld [vmem:[#allocation4 + $0x3c8] sm:$0xff]
    %v494 = vld [vmem:[#allocation4 + $0x3d0] sm:$0xff]
    %v495 = vld [vmem:[#allocation4 + $0x3d8] sm:$0xff]
    %v496 = vld [vmem:[#allocation4 + $0x3e0] sm:$0xff]
    %v497 = vld [vmem:[#allocation4 + $0x3e8] sm:$0xff]
    %v498 = vld [vmem:[#allocation4 + $0x3f0] sm:$0xff]
    %v499 = vld [vmem:[#allocation4 + $0x3f8] sm:$0xff]
    %v500 = vld [vmem:[#allocation4 + $0x400] sm:$0xff]
    %v501 = vld [vmem:[#allocation4 + $0x408] sm:$0xff]
    %v502 = vld [vmem:[#allocation4 + $0x410] sm:$0xff]
    %v503 = vld [vmem:[#allocation4 + $0x418] sm:$0xff]
    %v504 = vld [vmem:[#allocation4 + $0x420] sm:$0xff]
    %v505 = vld [vmem:[#allocation4 + $0x428] sm:$0xff]
    %v506 = vld [vmem:[#allocation4 + $0x430] sm:$0xff]
    %v507 = vld [vmem:[#allocation4 + $0x438] sm:$0xff]
    %v508 = vld [vmem:[#allocation4 + $0x440] sm:$0xff]
    %v509 = vld [vmem:[#allocation4 + $0x448] sm:$0xff]
    %v510 = vld [vmem:[#allocation4 + $0x450] sm:$0xff]
    %v511 = vld [vmem:[#allocation4 + $0x458] sm:$0xff]
    %v512 = vld [vmem:[#allocation4 + $0x460] sm:$0xff]
    %v513 = vld [vmem:[#allocation4 + $0x468] sm:$0xff]
    %v514 = vld [vmem:[#allocation4 + $0x470] sm:$0xff]
    %v515 = vld [vmem:[#allocation4 + $0x478] sm:$0xff]
    %v516 = vld [vmem:[#allocation4 + $0x480] sm:$0xff]
    %v517 = vld [vmem:[#allocation4 + $0x488] sm:$0xff]
    %v518 = vld [vmem:[#allocation4 + $0x490] sm:$0xff]
    %v519 = vld [vmem:[#allocation4 + $0x498] sm:$0xff]
    %v520 = vld [vmem:[#allocation4 + $0x4a0] sm:$0xff]
    %v521 = vld [vmem:[#allocation4 + $0x4a8] sm:$0xff]
    %v522 = vld [vmem:[#allocation4 + $0x4b0] sm:$0xff]
    %v523 = vld [vmem:[#allocation4 + $0x4b8] sm:$0xff]
    %v524 = vld [vmem:[#allocation4 + $0x4c0] sm:$0xff]
    %v525 = vld [vmem:[#allocation4 + $0x4c8] sm:$0xff]
    %v526 = vld [vmem:[#allocation4 + $0x4d0] sm:$0xff]
    %v527 = vld [vmem:[#allocation4 + $0x4d8] sm:$0xff]
    %v528 = vld [vmem:[#allocation4 + $0x4e0] sm:$0xff]
    %v529 = vld [vmem:[#allocation4 + $0x4e8] sm:$0xff]
    %v530 = vld [vmem:[#allocation4 + $0x4f0] sm:$0xff]
    %v531 = vld [vmem:[#allocation4 + $0x4f8] sm:$0xff]
    %v532 = vld [vmem:[#allocation4 + $0x500] sm:$0xff]
    %v533 = vld [vmem:[#allocation4 + $0x508] sm:$0xff]
    %v534 = vld [vmem:[#allocation4 + $0x510] sm:$0xff]
    %v535 = vld [vmem:[#allocation4 + $0x518] sm:$0xff]
    %v536 = vld [vmem:[#allocation4 + $0x520] sm:$0xff]
    %v537 = vld [vmem:[#allocation4 + $0x528] sm:$0xff]
    %v538 = vld [vmem:[#allocation4 + $0x530] sm:$0xff]
    %v539 = vld [vmem:[#allocation4 + $0x538] sm:$0xff]
    %v540 = vld [vmem:[#allocation4 + $0x540] sm:$0xff]
    %v541 = vld [vmem:[#allocation4 + $0x548] sm:$0xff]
    %v542 = vld [vmem:[#allocation4 + $0x550] sm:$0xff]
    %v543 = vld [vmem:[#allocation4 + $0x558] sm:$0xff]
    %v544 = vld [vmem:[#allocation4 + $0x560] sm:$0xff]
    %v545 = vld [vmem:[#allocation4 + $0x568] sm:$0xff]
    %v546 = vld [vmem:[#allocation4 + $0x570] sm:$0xff]
    %v547 = vld [vmem:[#allocation4 + $0x578] sm:$0xff]
    %v548 = vld [vmem:[#allocation4 + $0x580] sm:$0xff]
    %v549 = vld [vmem:[#allocation4 + $0x588] sm:$0xff]
    %v550 = vld [vmem:[#allocation4 + $0x590] sm:$0xff]
    %v551 = vld [vmem:[#allocation4 + $0x598] sm:$0xff]
    %v552 = vld [vmem:[#allocation4 + $0x5a0] sm:$0xff]
    %v553 = vld [vmem:[#allocation4 + $0x5a8] sm:$0xff]
    %v554 = vld [vmem:[#allocation4 + $0x5b0] sm:$0xff]
    %v555 = vld [vmem:[#allocation4 + $0x5b8] sm:$0xff]
    %v556 = vld [vmem:[#allocation4 + $0x5c0] sm:$0xff]
    %v557 = vld [vmem:[#allocation4 + $0x5c8] sm:$0xff]
    %v558 = vld [vmem:[#allocation4 + $0x5d0] sm:$0xff]
    %v559 = vld [vmem:[#allocation4 + $0x5d8] sm:$0xff]
    %v560 = vld [vmem:[#allocation4 + $0x5e0] sm:$0xff]
    %v561 = vld [vmem:[#allocation4 + $0x5e8] sm:$0xff]
    %v562 = vld [vmem:[#allocation4 + $0x5f0] sm:$0xff]
    %v563 = vld [vmem:[#allocation4 + $0x5f8] sm:$0xff]
    %v564 = vld [vmem:[#allocation4 + $0x600] sm:$0xff]
    %v565 = vld [vmem:[#allocation4 + $0x608] sm:$0xff]
    %v566 = vld [vmem:[#allocation4 + $0x610] sm:$0xff]
    %v567 = vld [vmem:[#allocation4 + $0x618] sm:$0xff]
    %v568 = vld [vmem:[#allocation4 + $0x620] sm:$0xff]
    %v569 = vld [vmem:[#allocation4 + $0x628] sm:$0xff]
    %v570 = vld [vmem:[#allocation4 + $0x630] sm:$0xff]
    %v571 = vld [vmem:[#allocation4 + $0x638] sm:$0xff]
    %v572 = vld [vmem:[#allocation4 + $0x640] sm:$0xff]
    %v573 = vld [vmem:[#allocation4 + $0x648] sm:$0xff]
    %v574 = vld [vmem:[#allocation4 + $0x650] sm:$0xff]
    %v575 = vld [vmem:[#allocation4 + $0x658] sm:$0xff]
    %v576 = vld [vmem:[#allocation4 + $0x660] sm:$0xff]
    %v577 = vld [vmem:[#allocation4 + $0x668] sm:$0xff]
    %v578 = vld [vmem:[#allocation4 + $0x670] sm:$0xff]
    %v579 = vld [vmem:[#allocation4 + $0x678] sm:$0xff]
    %v580 = vld [vmem:[#allocation4 + $0x680] sm:$0xff]
    %v581 = vld [vmem:[#allocation4 + $0x688] sm:$0xff]
    %v582 = vld [vmem:[#allocation4 + $0x690] sm:$0xff]
    %v583 = vld [vmem:[#allocation4 + $0x698] sm:$0xff]
    %v584 = vld [vmem:[#allocation4 + $0x6a0] sm:$0xff]
    %v585 = vld [vmem:[#allocation4 + $0x6a8] sm:$0xff]
    %v586 = vld [vmem:[#allocation4 + $0x6b0] sm:$0xff]
    %v587 = vld [vmem:[#allocation4 + $0x6b8] sm:$0xff]
    %v588 = vld [vmem:[#allocation4 + $0x6c0] sm:$0xff]
    %v589 = vld [vmem:[#allocation4 + $0x6c8] sm:$0xff]
    %v590 = vld [vmem:[#allocation4 + $0x6d0] sm:$0xff]
    %v591 = vld [vmem:[#allocation4 + $0x6d8] sm:$0xff]
    %v592 = vld [vmem:[#allocation4 + $0x6e0] sm:$0xff]
    %v593 = vld [vmem:[#allocation4 + $0x6e8] sm:$0xff]
    %v594 = vld [vmem:[#allocation4 + $0x6f0] sm:$0xff]
    %v595 = vld [vmem:[#allocation4 + $0x6f8] sm:$0xff]
    %v596 = vld [vmem:[#allocation4 + $0x700] sm:$0xff]
    %v597 = vld [vmem:[#allocation4 + $0x708] sm:$0xff]
    %v598 = vld [vmem:[#allocation4 + $0x710] sm:$0xff]
    %v599 = vld [vmem:[#allocation4 + $0x718] sm:$0xff]
    %v600 = vld [vmem:[#allocation4 + $0x720] sm:$0xff]
    %v601 = vld [vmem:[#allocation4 + $0x728] sm:$0xff]
    %v602 = vld [vmem:[#allocation4 + $0x730] sm:$0xff]
    %v603 = vld [vmem:[#allocation4 + $0x738] sm:$0xff]
    %v604 = vld [vmem:[#allocation4 + $0x740] sm:$0xff]
    %v605 = vld [vmem:[#allocation4 + $0x748] sm:$0xff]
    %v606 = vld [vmem:[#allocation4 + $0x750] sm:$0xff]
    %v607 = vld [vmem:[#allocation4 + $0x758] sm:$0xff]
    %v608 = vld [vmem:[#allocation4 + $0x760] sm:$0xff]
    %v609 = vld [vmem:[#allocation4 + $0x768] sm:$0xff]
    %v610 = vld [vmem:[#allocation4 + $0x770] sm:$0xff]
    %v611 = vld [vmem:[#allocation4 + $0x778] sm:$0xff]
    %v612 = vld [vmem:[#allocation4 + $0x780] sm:$0xff]
    %v613 = vld [vmem:[#allocation4 + $0x788] sm:$0xff]
    %v614 = vld [vmem:[#allocation4 + $0x790] sm:$0xff]
    %v615 = vld [vmem:[#allocation4 + $0x798] sm:$0xff]
    %v616 = vld [vmem:[#allocation4 + $0x7a0] sm:$0xff]
    %v617 = vld [vmem:[#allocation4 + $0x7a8] sm:$0xff]
    %v618 = vld [vmem:[#allocation4 + $0x7b0] sm:$0xff]
    %v619 = vld [vmem:[#allocation4 + $0x7b8] sm:$0xff]
    %v620 = vld [vmem:[#allocation4 + $0x7c0] sm:$0xff]
    %v621 = vld [vmem:[#allocation4 + $0x7c8] sm:$0xff]
    %v622 = vld [vmem:[#allocation4 + $0x7d0] sm:$0xff]
    %v623 = vld [vmem:[#allocation4 + $0x7d8] sm:$0xff]
    %v624 = vld [vmem:[#allocation4 + $0x7e0] sm:$0xff]
    %v625 = vld [vmem:[#allocation4 + $0x7e8] sm:$0xff]
    %v626 = vld [vmem:[#allocation4 + $0x7f0] sm:$0xff]
    %v627 = vld [vmem:[#allocation4 + $0x7f8] sm:$0xff]
    %v628 = vld [vmem:[%s4] sm:$0xf]
    %v630 = vperm.slane %v628, 0
    %v631 = vperm.slane %v628, 1
    %v632 = vperm.slane %v628, 2
    %v633 = vperm.slane %v628, 3
    %v894 = vunpack.c.l.b16 %v372
    %v895 = vunpack.c.h.b16 %v372
    %v896 = vunpack.c.l.b16 %v373
    %v897 = vunpack.c.h.b16 %v373
    %v898 = vunpack.c.l.b16 %v374
    %v899 = vunpack.c.h.b16 %v374
    %v900 = vunpack.c.l.b16 %v375
    %v901 = vunpack.c.h.b16 %v375
    %v902 = vunpack.c.l.b16 %v376
    %v903 = vunpack.c.h.b16 %v376
    %v904 = vunpack.c.l.b16 %v377
    %v905 = vunpack.c.h.b16 %v377
    %v906 = vunpack.c.l.b16 %v378
    %v907 = vunpack.c.h.b16 %v378
    %v908 = vunpack.c.l.b16 %v379
    %v909 = vunpack.c.h.b16 %v379
    %v910 = vunpack.c.l.b16 %v380
    %v911 = vunpack.c.h.b16 %v380
    %v912 = vunpack.c.l.b16 %v381
    %v913 = vunpack.c.h.b16 %v381
    %v914 = vunpack.c.l.b16 %v382
    %v915 = vunpack.c.h.b16 %v382
    %v916 = vunpack.c.l.b16 %v383
    %v917 = vunpack.c.h.b16 %v383
    %v918 = vunpack.c.l.b16 %v384
    %v919 = vunpack.c.h.b16 %v384
    %v920 = vunpack.c.l.b16 %v385
    %v921 = vunpack.c.h.b16 %v385
    %v922 = vunpack.c.l.b16 %v386
    %v923 = vunpack.c.h.b16 %v386
    %v924 = vunpack.c.l.b16 %v387
    %v925 = vunpack.c.h.b16 %v387
    %v926 = vunpack.c.l.b16 %v388
    %v927 = vunpack.c.h.b16 %v388
    %v928 = vunpack.c.l.b16 %v389
    %v929 = vunpack.c.h.b16 %v389
    %v930 = vunpack.c.l.b16 %v390
    %v931 = vunpack.c.h.b16 %v390
    %v932 = vunpack.c.l.b16 %v391
    %v933 = vunpack.c.h.b16 %v391
    %v934 = vunpack.c.l.b16 %v392
    %v935 = vunpack.c.h.b16 %v392
    %v936 = vunpack.c.l.b16 %v393
    %v937 = vunpack.c.h.b16 %v393
    %v938 = vunpack.c.l.b16 %v394
    %v939 = vunpack.c.h.b16 %v394
    %v940 = vunpack.c.l.b16 %v395
    %v941 = vunpack.c.h.b16 %v395
    %v942 = vunpack.c.l.b16 %v396
    %v943 = vunpack.c.h.b16 %v396
    %v944 = vunpack.c.l.b16 %v397
    %v945 = vunpack.c.h.b16 %v397
    %v946 = vunpack.c.l.b16 %v398
    %v947 = vunpack.c.h.b16 %v398
    %v948 = vunpack.c.l.b16 %v399
    %v949 = vunpack.c.h.b16 %v399
    %v950 = vunpack.c.l.b16 %v400
    %v951 = vunpack.c.h.b16 %v400
    %v952 = vunpack.c.l.b16 %v401
    %v953 = vunpack.c.h.b16 %v401
    %v954 = vunpack.c.l.b16 %v402
    %v955 = vunpack.c.h.b16 %v402
    %v956 = vunpack.c.l.b16 %v403
    %v957 = vunpack.c.h.b16 %v403
    %v958 = vunpack.c.l.b16 %v404
    %v959 = vunpack.c.h.b16 %v404
    %v960 = vunpack.c.l.b16 %v405
    %v961 = vunpack.c.h.b16 %v405
    %v962 = vunpack.c.l.b16 %v406
    %v963 = vunpack.c.h.b16 %v406
    %v964 = vunpack.c.l.b16 %v407
    %v965 = vunpack.c.h.b16 %v407
    %v966 = vunpack.c.l.b16 %v408
    %v967 = vunpack.c.h.b16 %v408
    %v968 = vunpack.c.l.b16 %v409
    %v969 = vunpack.c.h.b16 %v409
    %v970 = vunpack.c.l.b16 %v410
    %v971 = vunpack.c.h.b16 %v410
    %v972 = vunpack.c.l.b16 %v411
    %v973 = vunpack.c.h.b16 %v411
    %v974 = vunpack.c.l.b16 %v412
    %v975 = vunpack.c.h.b16 %v412
    %v976 = vunpack.c.l.b16 %v413
    %v977 = vunpack.c.h.b16 %v413
    %v978 = vunpack.c.l.b16 %v414
    %v979 = vunpack.c.h.b16 %v414
    %v980 = vunpack.c.l.b16 %v415
    %v981 = vunpack.c.h.b16 %v415
    %v982 = vunpack.c.l.b16 %v416
    %v983 = vunpack.c.h.b16 %v416
    %v984 = vunpack.c.l.b16 %v417
    %v985 = vunpack.c.h.b16 %v417
    %v986 = vunpack.c.l.b16 %v418
    %v987 = vunpack.c.h.b16 %v418
    %v988 = vunpack.c.l.b16 %v419
    %v989 = vunpack.c.h.b16 %v419
    %v990 = vunpack.c.l.b16 %v420
    %v991 = vunpack.c.h.b16 %v420
    %v992 = vunpack.c.l.b16 %v421
    %v993 = vunpack.c.h.b16 %v421
    %v994 = vunpack.c.l.b16 %v422
    %v995 = vunpack.c.h.b16 %v422
    %v996 = vunpack.c.l.b16 %v423
    %v997 = vunpack.c.h.b16 %v423
    %v998 = vunpack.c.l.b16 %v424
    %v999 = vunpack.c.h.b16 %v424
    %v1000 = vunpack.c.l.b16 %v425
    %v1001 = vunpack.c.h.b16 %v425
    %v1002 = vunpack.c.l.b16 %v426
    %v1003 = vunpack.c.h.b16 %v426
    %v1004 = vunpack.c.l.b16 %v427
    %v1005 = vunpack.c.h.b16 %v427
    %v1006 = vunpack.c.l.b16 %v428
    %v1007 = vunpack.c.h.b16 %v428
    %v1008 = vunpack.c.l.b16 %v429
    %v1009 = vunpack.c.h.b16 %v429
    %v1010 = vunpack.c.l.b16 %v430
    %v1011 = vunpack.c.h.b16 %v430
    %v1012 = vunpack.c.l.b16 %v431
    %v1013 = vunpack.c.h.b16 %v431
    %v1014 = vunpack.c.l.b16 %v432
    %v1015 = vunpack.c.h.b16 %v432
    %v1016 = vunpack.c.l.b16 %v433
    %v1017 = vunpack.c.h.b16 %v433
    %v1018 = vunpack.c.l.b16 %v434
    %v1019 = vunpack.c.h.b16 %v434
    %v1020 = vunpack.c.l.b16 %v435
    %v1021 = vunpack.c.h.b16 %v435
    %v1022 = vunpack.c.l.b16 %v436
    %v1023 = vunpack.c.h.b16 %v436
    %v1024 = vunpack.c.l.b16 %v437
    %v1025 = vunpack.c.h.b16 %v437
    %v1026 = vunpack.c.l.b16 %v438
    %v1027 = vunpack.c.h.b16 %v438
    %v1028 = vunpack.c.l.b16 %v439
    %v1029 = vunpack.c.h.b16 %v439
    %v1030 = vunpack.c.l.b16 %v440
    %v1031 = vunpack.c.h.b16 %v440
    %v1032 = vunpack.c.l.b16 %v441
    %v1033 = vunpack.c.h.b16 %v441
    %v1034 = vunpack.c.l.b16 %v442
    %v1035 = vunpack.c.h.b16 %v442
    %v1036 = vunpack.c.l.b16 %v443
    %v1037 = vunpack.c.h.b16 %v443
    %v1038 = vunpack.c.l.b16 %v444
    %v1039 = vunpack.c.h.b16 %v444
    %v1040 = vunpack.c.l.b16 %v445
    %v1041 = vunpack.c.h.b16 %v445
    %v1042 = vunpack.c.l.b16 %v446
    %v1043 = vunpack.c.h.b16 %v446
    %v1044 = vunpack.c.l.b16 %v447
    %v1045 = vunpack.c.h.b16 %v447
    %v1046 = vunpack.c.l.b16 %v448
    %v1047 = vunpack.c.h.b16 %v448
    %v1048 = vunpack.c.l.b16 %v449
    %v1049 = vunpack.c.h.b16 %v449
    %v1050 = vunpack.c.l.b16 %v450
    %v1051 = vunpack.c.h.b16 %v450
    %v1052 = vunpack.c.l.b16 %v451
    %v1053 = vunpack.c.h.b16 %v451
    %v1054 = vunpack.c.l.b16 %v452
    %v1055 = vunpack.c.h.b16 %v452
    %v1056 = vunpack.c.l.b16 %v453
    %v1057 = vunpack.c.h.b16 %v453
    %v1058 = vunpack.c.l.b16 %v454
    %v1059 = vunpack.c.h.b16 %v454
    %v1060 = vunpack.c.l.b16 %v455
    %v1061 = vunpack.c.h.b16 %v455
    %v1062 = vunpack.c.l.b16 %v456
    %v1063 = vunpack.c.h.b16 %v456
    %v1064 = vunpack.c.l.b16 %v457
    %v1065 = vunpack.c.h.b16 %v457
    %v1066 = vunpack.c.l.b16 %v458
    %v1067 = vunpack.c.h.b16 %v458
    %v1068 = vunpack.c.l.b16 %v459
    %v1069 = vunpack.c.h.b16 %v459
    %v1070 = vunpack.c.l.b16 %v460
    %v1071 = vunpack.c.h.b16 %v460
    %v1072 = vunpack.c.l.b16 %v461
    %v1073 = vunpack.c.h.b16 %v461
    %v1074 = vunpack.c.l.b16 %v462
    %v1075 = vunpack.c.h.b16 %v462
    %v1076 = vunpack.c.l.b16 %v463
    %v1077 = vunpack.c.h.b16 %v463
    %v1078 = vunpack.c.l.b16 %v464
    %v1079 = vunpack.c.h.b16 %v464
    %v1080 = vunpack.c.l.b16 %v465
    %v1081 = vunpack.c.h.b16 %v465
    %v1082 = vunpack.c.l.b16 %v466
    %v1083 = vunpack.c.h.b16 %v466
    %v1084 = vunpack.c.l.b16 %v467
    %v1085 = vunpack.c.h.b16 %v467
    %v1086 = vunpack.c.l.b16 %v468
    %v1087 = vunpack.c.h.b16 %v468
    %v1088 = vunpack.c.l.b16 %v469
    %v1089 = vunpack.c.h.b16 %v469
    %v1090 = vunpack.c.l.b16 %v470
    %v1091 = vunpack.c.h.b16 %v470
    %v1092 = vunpack.c.l.b16 %v471
    %v1093 = vunpack.c.h.b16 %v471
    %v1094 = vunpack.c.l.b16 %v472
    %v1095 = vunpack.c.h.b16 %v472
    %v1096 = vunpack.c.l.b16 %v473
    %v1097 = vunpack.c.h.b16 %v473
    %v1098 = vunpack.c.l.b16 %v474
    %v1099 = vunpack.c.h.b16 %v474
    %v1100 = vunpack.c.l.b16 %v475
    %v1101 = vunpack.c.h.b16 %v475
    %v1102 = vunpack.c.l.b16 %v476
    %v1103 = vunpack.c.h.b16 %v476
    %v1104 = vunpack.c.l.b16 %v477
    %v1105 = vunpack.c.h.b16 %v477
    %v1106 = vunpack.c.l.b16 %v478
    %v1107 = vunpack.c.h.b16 %v478
    %v1108 = vunpack.c.l.b16 %v479
    %v1109 = vunpack.c.h.b16 %v479
    %v1110 = vunpack.c.l.b16 %v480
    %v1111 = vunpack.c.h.b16 %v480
    %v1112 = vunpack.c.l.b16 %v481
    %v1113 = vunpack.c.h.b16 %v481
    %v1114 = vunpack.c.l.b16 %v482
    %v1115 = vunpack.c.h.b16 %v482
    %v1116 = vunpack.c.l.b16 %v483
    %v1117 = vunpack.c.h.b16 %v483
    %v1118 = vunpack.c.l.b16 %v484
    %v1119 = vunpack.c.h.b16 %v484
    %v1120 = vunpack.c.l.b16 %v485
    %v1121 = vunpack.c.h.b16 %v485
    %v1122 = vunpack.c.l.b16 %v486
    %v1123 = vunpack.c.h.b16 %v486
    %v1124 = vunpack.c.l.b16 %v487
    %v1125 = vunpack.c.h.b16 %v487
    %v1126 = vunpack.c.l.b16 %v488
    %v1127 = vunpack.c.h.b16 %v488
    %v1128 = vunpack.c.l.b16 %v489
    %v1129 = vunpack.c.h.b16 %v489
    %v1130 = vunpack.c.l.b16 %v490
    %v1131 = vunpack.c.h.b16 %v490
    %v1132 = vunpack.c.l.b16 %v491
    %v1133 = vunpack.c.h.b16 %v491
    %v1134 = vunpack.c.l.b16 %v492
    %v1135 = vunpack.c.h.b16 %v492
    %v1136 = vunpack.c.l.b16 %v493
    %v1137 = vunpack.c.h.b16 %v493
    %v1138 = vunpack.c.l.b16 %v494
    %v1139 = vunpack.c.h.b16 %v494
    %v1140 = vunpack.c.l.b16 %v495
    %v1141 = vunpack.c.h.b16 %v495
    %v1142 = vunpack.c.l.b16 %v496
    %v1143 = vunpack.c.h.b16 %v496
    %v1144 = vunpack.c.l.b16 %v497
    %v1145 = vunpack.c.h.b16 %v497
    %v1146 = vunpack.c.l.b16 %v498
    %v1147 = vunpack.c.h.b16 %v498
    %v1148 = vunpack.c.l.b16 %v499
    %v1149 = vunpack.c.h.b16 %v499
    %v1150 = vunpack.c.l.b16 %v500
    %v1151 = vunpack.c.h.b16 %v500
    %v1152 = vunpack.c.l.b16 %v501
    %v1153 = vunpack.c.h.b16 %v501
    %v1154 = vunpack.c.l.b16 %v502
    %v1155 = vunpack.c.h.b16 %v502
    %v1156 = vunpack.c.l.b16 %v503
    %v1157 = vunpack.c.h.b16 %v503
    %v1158 = vunpack.c.l.b16 %v504
    %v1159 = vunpack.c.h.b16 %v504
    %v1160 = vunpack.c.l.b16 %v505
    %v1161 = vunpack.c.h.b16 %v505
    %v1162 = vunpack.c.l.b16 %v506
    %v1163 = vunpack.c.h.b16 %v506
    %v1164 = vunpack.c.l.b16 %v507
    %v1165 = vunpack.c.h.b16 %v507
    %v1166 = vunpack.c.l.b16 %v508
    %v1167 = vunpack.c.h.b16 %v508
    %v1168 = vunpack.c.l.b16 %v509
    %v1169 = vunpack.c.h.b16 %v509
    %v1170 = vunpack.c.l.b16 %v510
    %v1171 = vunpack.c.h.b16 %v510
    %v1172 = vunpack.c.l.b16 %v511
    %v1173 = vunpack.c.h.b16 %v511
    %v1174 = vunpack.c.l.b16 %v512
    %v1175 = vunpack.c.h.b16 %v512
    %v1176 = vunpack.c.l.b16 %v513
    %v1177 = vunpack.c.h.b16 %v513
    %v1178 = vunpack.c.l.b16 %v514
    %v1179 = vunpack.c.h.b16 %v514
    %v1180 = vunpack.c.l.b16 %v515
    %v1181 = vunpack.c.h.b16 %v515
    %v1182 = vunpack.c.l.b16 %v516
    %v1183 = vunpack.c.h.b16 %v516
    %v1184 = vunpack.c.l.b16 %v517
    %v1185 = vunpack.c.h.b16 %v517
    %v1186 = vunpack.c.l.b16 %v518
    %v1187 = vunpack.c.h.b16 %v518
    %v1188 = vunpack.c.l.b16 %v519
    %v1189 = vunpack.c.h.b16 %v519
    %v1190 = vunpack.c.l.b16 %v520
    %v1191 = vunpack.c.h.b16 %v520
    %v1192 = vunpack.c.l.b16 %v521
    %v1193 = vunpack.c.h.b16 %v521
    %v1194 = vunpack.c.l.b16 %v522
    %v1195 = vunpack.c.h.b16 %v522
    %v1196 = vunpack.c.l.b16 %v523
    %v1197 = vunpack.c.h.b16 %v523
    %v1198 = vunpack.c.l.b16 %v524
    %v1199 = vunpack.c.h.b16 %v524
    %v1200 = vunpack.c.l.b16 %v525
    %v1201 = vunpack.c.h.b16 %v525
    %v1202 = vunpack.c.l.b16 %v526
    %v1203 = vunpack.c.h.b16 %v526
    %v1204 = vunpack.c.l.b16 %v527
    %v1205 = vunpack.c.h.b16 %v527
    %v1206 = vunpack.c.l.b16 %v528
    %v1207 = vunpack.c.h.b16 %v528
    %v1208 = vunpack.c.l.b16 %v529
    %v1209 = vunpack.c.h.b16 %v529
    %v1210 = vunpack.c.l.b16 %v530
    %v1211 = vunpack.c.h.b16 %v530
    %v1212 = vunpack.c.l.b16 %v531
    %v1213 = vunpack.c.h.b16 %v531
    %v1214 = vunpack.c.l.b16 %v532
    %v1215 = vunpack.c.h.b16 %v532
    %v1216 = vunpack.c.l.b16 %v533
    %v1217 = vunpack.c.h.b16 %v533
    %v1218 = vunpack.c.l.b16 %v534
    %v1219 = vunpack.c.h.b16 %v534
    %v1220 = vunpack.c.l.b16 %v535
    %v1221 = vunpack.c.h.b16 %v535
    %v1222 = vunpack.c.l.b16 %v536
    %v1223 = vunpack.c.h.b16 %v536
    %v1224 = vunpack.c.l.b16 %v537
    %v1225 = vunpack.c.h.b16 %v537
    %v1226 = vunpack.c.l.b16 %v538
    %v1227 = vunpack.c.h.b16 %v538
    %v1228 = vunpack.c.l.b16 %v539
    %v1229 = vunpack.c.h.b16 %v539
    %v1230 = vunpack.c.l.b16 %v540
    %v1231 = vunpack.c.h.b16 %v540
    %v1232 = vunpack.c.l.b16 %v541
    %v1233 = vunpack.c.h.b16 %v541
    %v1234 = vunpack.c.l.b16 %v542
    %v1235 = vunpack.c.h.b16 %v542
    %v1236 = vunpack.c.l.b16 %v543
    %v1237 = vunpack.c.h.b16 %v543
    %v1238 = vunpack.c.l.b16 %v544
    %v1239 = vunpack.c.h.b16 %v544
    %v1240 = vunpack.c.l.b16 %v545
    %v1241 = vunpack.c.h.b16 %v545
    %v1242 = vunpack.c.l.b16 %v546
    %v1243 = vunpack.c.h.b16 %v546
    %v1244 = vunpack.c.l.b16 %v547
    %v1245 = vunpack.c.h.b16 %v547
    %v1246 = vunpack.c.l.b16 %v548
    %v1247 = vunpack.c.h.b16 %v548
    %v1248 = vunpack.c.l.b16 %v549
    %v1249 = vunpack.c.h.b16 %v549
    %v1250 = vunpack.c.l.b16 %v550
    %v1251 = vunpack.c.h.b16 %v550
    %v1252 = vunpack.c.l.b16 %v551
    %v1253 = vunpack.c.h.b16 %v551
    %v1254 = vunpack.c.l.b16 %v552
    %v1255 = vunpack.c.h.b16 %v552
    %v1256 = vunpack.c.l.b16 %v553
    %v1257 = vunpack.c.h.b16 %v553
    %v1258 = vunpack.c.l.b16 %v554
    %v1259 = vunpack.c.h.b16 %v554
    %v1260 = vunpack.c.l.b16 %v555
    %v1261 = vunpack.c.h.b16 %v555
    %v1262 = vunpack.c.l.b16 %v556
    %v1263 = vunpack.c.h.b16 %v556
    %v1264 = vunpack.c.l.b16 %v557
    %v1265 = vunpack.c.h.b16 %v557
    %v1266 = vunpack.c.l.b16 %v558
    %v1267 = vunpack.c.h.b16 %v558
    %v1268 = vunpack.c.l.b16 %v559
    %v1269 = vunpack.c.h.b16 %v559
    %v1270 = vunpack.c.l.b16 %v560
    %v1271 = vunpack.c.h.b16 %v560
    %v1272 = vunpack.c.l.b16 %v561
    %v1273 = vunpack.c.h.b16 %v561
    %v1274 = vunpack.c.l.b16 %v562
    %v1275 = vunpack.c.h.b16 %v562
    %v1276 = vunpack.c.l.b16 %v563
    %v1277 = vunpack.c.h.b16 %v563
    %v1278 = vunpack.c.l.b16 %v564
    %v1279 = vunpack.c.h.b16 %v564
    %v1280 = vunpack.c.l.b16 %v565
    %v1281 = vunpack.c.h.b16 %v565
    %v1282 = vunpack.c.l.b16 %v566
    %v1283 = vunpack.c.h.b16 %v566
    %v1284 = vunpack.c.l.b16 %v567
    %v1285 = vunpack.c.h.b16 %v567
    %v1286 = vunpack.c.l.b16 %v568
    %v1287 = vunpack.c.h.b16 %v568
    %v1288 = vunpack.c.l.b16 %v569
    %v1289 = vunpack.c.h.b16 %v569
    %v1290 = vunpack.c.l.b16 %v570
    %v1291 = vunpack.c.h.b16 %v570
    %v1292 = vunpack.c.l.b16 %v571
    %v1293 = vunpack.c.h.b16 %v571
    %v1294 = vunpack.c.l.b16 %v572
    %v1295 = vunpack.c.h.b16 %v572
    %v1296 = vunpack.c.l.b16 %v573
    %v1297 = vunpack.c.h.b16 %v573
    %v1298 = vunpack.c.l.b16 %v574
    %v1299 = vunpack.c.h.b16 %v574
    %v1300 = vunpack.c.l.b16 %v575
    %v1301 = vunpack.c.h.b16 %v575
    %v1302 = vunpack.c.l.b16 %v576
    %v1303 = vunpack.c.h.b16 %v576
    %v1304 = vunpack.c.l.b16 %v577
    %v1305 = vunpack.c.h.b16 %v577
    %v1306 = vunpack.c.l.b16 %v578
    %v1307 = vunpack.c.h.b16 %v578
    %v1308 = vunpack.c.l.b16 %v579
    %v1309 = vunpack.c.h.b16 %v579
    %v1310 = vunpack.c.l.b16 %v580
    %v1311 = vunpack.c.h.b16 %v580
    %v1312 = vunpack.c.l.b16 %v581
    %v1313 = vunpack.c.h.b16 %v581
    %v1314 = vunpack.c.l.b16 %v582
    %v1315 = vunpack.c.h.b16 %v582
    %v1316 = vunpack.c.l.b16 %v583
    %v1317 = vunpack.c.h.b16 %v583
    %v1318 = vunpack.c.l.b16 %v584
    %v1319 = vunpack.c.h.b16 %v584
    %v1320 = vunpack.c.l.b16 %v585
    %v1321 = vunpack.c.h.b16 %v585
    %v1322 = vunpack.c.l.b16 %v586
    %v1323 = vunpack.c.h.b16 %v586
    %v1324 = vunpack.c.l.b16 %v587
    %v1325 = vunpack.c.h.b16 %v587
    %v1326 = vunpack.c.l.b16 %v588
    %v1327 = vunpack.c.h.b16 %v588
    %v1328 = vunpack.c.l.b16 %v589
    %v1329 = vunpack.c.h.b16 %v589
    %v1330 = vunpack.c.l.b16 %v590
    %v1331 = vunpack.c.h.b16 %v590
    %v1332 = vunpack.c.l.b16 %v591
    %v1333 = vunpack.c.h.b16 %v591
    %v1334 = vunpack.c.l.b16 %v592
    %v1335 = vunpack.c.h.b16 %v592
    %v1336 = vunpack.c.l.b16 %v593
    %v1337 = vunpack.c.h.b16 %v593
    %v1338 = vunpack.c.l.b16 %v594
    %v1339 = vunpack.c.h.b16 %v594
    %v1340 = vunpack.c.l.b16 %v595
    %v1341 = vunpack.c.h.b16 %v595
    %v1342 = vunpack.c.l.b16 %v596
    %v1343 = vunpack.c.h.b16 %v596
    %v1344 = vunpack.c.l.b16 %v597
    %v1345 = vunpack.c.h.b16 %v597
    %v1346 = vunpack.c.l.b16 %v598
    %v1347 = vunpack.c.h.b16 %v598
    %v1348 = vunpack.c.l.b16 %v599
    %v1349 = vunpack.c.h.b16 %v599
    %v1350 = vunpack.c.l.b16 %v600
    %v1351 = vunpack.c.h.b16 %v600
    %v1352 = vunpack.c.l.b16 %v601
    %v1353 = vunpack.c.h.b16 %v601
    %v1354 = vunpack.c.l.b16 %v602
    %v1355 = vunpack.c.h.b16 %v602
    %v1356 = vunpack.c.l.b16 %v603
    %v1357 = vunpack.c.h.b16 %v603
    %v1358 = vunpack.c.l.b16 %v604
    %v1359 = vunpack.c.h.b16 %v604
    %v1360 = vunpack.c.l.b16 %v605
    %v1361 = vunpack.c.h.b16 %v605
    %v1362 = vunpack.c.l.b16 %v606
    %v1363 = vunpack.c.h.b16 %v606
    %v1364 = vunpack.c.l.b16 %v607
    %v1365 = vunpack.c.h.b16 %v607
    %v1366 = vunpack.c.l.b16 %v608
    %v1367 = vunpack.c.h.b16 %v608
    %v1368 = vunpack.c.l.b16 %v609
    %v1369 = vunpack.c.h.b16 %v609
    %v1370 = vunpack.c.l.b16 %v610
    %v1371 = vunpack.c.h.b16 %v610
    %v1372 = vunpack.c.l.b16 %v611
    %v1373 = vunpack.c.h.b16 %v611
    %v1374 = vunpack.c.l.b16 %v612
    %v1375 = vunpack.c.h.b16 %v612
    %v1376 = vunpack.c.l.b16 %v613
    %v1377 = vunpack.c.h.b16 %v613
    %v1378 = vunpack.c.l.b16 %v614
    %v1379 = vunpack.c.h.b16 %v614
    %v1380 = vunpack.c.l.b16 %v615
    %v1381 = vunpack.c.h.b16 %v615
    %v1382 = vunpack.c.l.b16 %v616
    %v1383 = vunpack.c.h.b16 %v616
    %v1384 = vunpack.c.l.b16 %v617
    %v1385 = vunpack.c.h.b16 %v617
    %v1386 = vunpack.c.l.b16 %v618
    %v1387 = vunpack.c.h.b16 %v618
    %v1388 = vunpack.c.l.b16 %v619
    %v1389 = vunpack.c.h.b16 %v619
    %v1390 = vunpack.c.l.b16 %v620
    %v1391 = vunpack.c.h.b16 %v620
    %v1392 = vunpack.c.l.b16 %v621
    %v1393 = vunpack.c.h.b16 %v621
    %v1394 = vunpack.c.l.b16 %v622
    %v1395 = vunpack.c.h.b16 %v622
    %v1396 = vunpack.c.l.b16 %v623
    %v1397 = vunpack.c.h.b16 %v623
    %v1398 = vunpack.c.l.b16 %v624
    %v1399 = vunpack.c.h.b16 %v624
    %v1400 = vunpack.c.l.b16 %v625
    %v1401 = vunpack.c.h.b16 %v625
    %v1402 = vunpack.c.l.b16 %v626
    %v1403 = vunpack.c.h.b16 %v626
    %v1404 = vunpack.c.l.b16 %v627
    %v1405 = vunpack.c.h.b16 %v627
    %v1406 = vpack.c.b16 %v898, %v894
    %v1407 = vpack.c.b16 %v899, %v895
    %v1408 = vpack.c.b16 %v900, %v896
    %v1409 = vpack.c.b16 %v901, %v897
    %v1410 = vpack.c.b16 %v906, %v902
    %v1411 = vpack.c.b16 %v907, %v903
    %v1412 = vpack.c.b16 %v908, %v904
    %v1413 = vpack.c.b16 %v909, %v905
    %v1414 = vpack.c.b16 %v914, %v910
    %v1415 = vpack.c.b16 %v915, %v911
    %v1416 = vpack.c.b16 %v916, %v912
    %v1417 = vpack.c.b16 %v917, %v913
    %v1418 = vpack.c.b16 %v922, %v918
    %v1419 = vpack.c.b16 %v923, %v919
    %v1420 = vpack.c.b16 %v924, %v920
    %v1421 = vpack.c.b16 %v925, %v921
    %v1422 = vpack.c.b16 %v930, %v926
    %v1423 = vpack.c.b16 %v931, %v927
    %v1424 = vpack.c.b16 %v932, %v928
    %v1425 = vpack.c.b16 %v933, %v929
    %v1426 = vpack.c.b16 %v938, %v934
    %v1427 = vpack.c.b16 %v939, %v935
    %v1428 = vpack.c.b16 %v940, %v936
    %v1429 = vpack.c.b16 %v941, %v937
    %v1430 = vpack.c.b16 %v946, %v942
    %v1431 = vpack.c.b16 %v947, %v943
    %v1432 = vpack.c.b16 %v948, %v944
    %v1433 = vpack.c.b16 %v949, %v945
    %v1434 = vpack.c.b16 %v954, %v950
    %v1435 = vpack.c.b16 %v955, %v951
    %v1436 = vpack.c.b16 %v956, %v952
    %v1437 = vpack.c.b16 %v957, %v953
    %v1438 = vpack.c.b16 %v962, %v958
    %v1439 = vpack.c.b16 %v963, %v959
    %v1440 = vpack.c.b16 %v964, %v960
    %v1441 = vpack.c.b16 %v965, %v961
    %v1442 = vpack.c.b16 %v970, %v966
    %v1443 = vpack.c.b16 %v971, %v967
    %v1444 = vpack.c.b16 %v972, %v968
    %v1445 = vpack.c.b16 %v973, %v969
    %v1446 = vpack.c.b16 %v978, %v974
    %v1447 = vpack.c.b16 %v979, %v975
    %v1448 = vpack.c.b16 %v980, %v976
    %v1449 = vpack.c.b16 %v981, %v977
    %v1450 = vpack.c.b16 %v986, %v982
    %v1451 = vpack.c.b16 %v987, %v983
    %v1452 = vpack.c.b16 %v988, %v984
    %v1453 = vpack.c.b16 %v989, %v985
    %v1454 = vpack.c.b16 %v994, %v990
    %v1455 = vpack.c.b16 %v995, %v991
    %v1456 = vpack.c.b16 %v996, %v992
    %v1457 = vpack.c.b16 %v997, %v993
    %v1458 = vpack.c.b16 %v1002, %v998
    %v1459 = vpack.c.b16 %v1003, %v999
    %v1460 = vpack.c.b16 %v1004, %v1000
    %v1461 = vpack.c.b16 %v1005, %v1001
    %v1462 = vpack.c.b16 %v1010, %v1006
    %v1463 = vpack.c.b16 %v1011, %v1007
    %v1464 = vpack.c.b16 %v1012, %v1008
    %v1465 = vpack.c.b16 %v1013, %v1009
    %v1466 = vpack.c.b16 %v1018, %v1014
    %v1467 = vpack.c.b16 %v1019, %v1015
    %v1468 = vpack.c.b16 %v1020, %v1016
    %v1469 = vpack.c.b16 %v1021, %v1017
    %v1470 = vpack.c.b16 %v1026, %v1022
    %v1471 = vpack.c.b16 %v1027, %v1023
    %v1472 = vpack.c.b16 %v1028, %v1024
    %v1473 = vpack.c.b16 %v1029, %v1025
    %v1474 = vpack.c.b16 %v1034, %v1030
    %v1475 = vpack.c.b16 %v1035, %v1031
    %v1476 = vpack.c.b16 %v1036, %v1032
    %v1477 = vpack.c.b16 %v1037, %v1033
    %v1478 = vpack.c.b16 %v1042, %v1038
    %v1479 = vpack.c.b16 %v1043, %v1039
    %v1480 = vpack.c.b16 %v1044, %v1040
    %v1481 = vpack.c.b16 %v1045, %v1041
    %v1482 = vpack.c.b16 %v1050, %v1046
    %v1483 = vpack.c.b16 %v1051, %v1047
    %v1484 = vpack.c.b16 %v1052, %v1048
    %v1485 = vpack.c.b16 %v1053, %v1049
    %v1486 = vpack.c.b16 %v1058, %v1054
    %v1487 = vpack.c.b16 %v1059, %v1055
    %v1488 = vpack.c.b16 %v1060, %v1056
    %v1489 = vpack.c.b16 %v1061, %v1057
    %v1490 = vpack.c.b16 %v1066, %v1062
    %v1491 = vpack.c.b16 %v1067, %v1063
    %v1492 = vpack.c.b16 %v1068, %v1064
    %v1493 = vpack.c.b16 %v1069, %v1065
    %v1494 = vpack.c.b16 %v1074, %v1070
    %v1495 = vpack.c.b16 %v1075, %v1071
    %v1496 = vpack.c.b16 %v1076, %v1072
    %v1497 = vpack.c.b16 %v1077, %v1073
    %v1498 = vpack.c.b16 %v1082, %v1078
    %v1499 = vpack.c.b16 %v1083, %v1079
    %v1500 = vpack.c.b16 %v1084, %v1080
    %v1501 = vpack.c.b16 %v1085, %v1081
    %v1502 = vpack.c.b16 %v1090, %v1086
    %v1503 = vpack.c.b16 %v1091, %v1087
    %v1504 = vpack.c.b16 %v1092, %v1088
    %v1505 = vpack.c.b16 %v1093, %v1089
    %v1506 = vpack.c.b16 %v1098, %v1094
    %v1507 = vpack.c.b16 %v1099, %v1095
    %v1508 = vpack.c.b16 %v1100, %v1096
    %v1509 = vpack.c.b16 %v1101, %v1097
    %v1510 = vpack.c.b16 %v1106, %v1102
    %v1511 = vpack.c.b16 %v1107, %v1103
    %v1512 = vpack.c.b16 %v1108, %v1104
    %v1513 = vpack.c.b16 %v1109, %v1105
    %v1514 = vpack.c.b16 %v1114, %v1110
    %v1515 = vpack.c.b16 %v1115, %v1111
    %v1516 = vpack.c.b16 %v1116, %v1112
    %v1517 = vpack.c.b16 %v1117, %v1113
    %v1518 = vpack.c.b16 %v1122, %v1118
    %v1519 = vpack.c.b16 %v1123, %v1119
    %v1520 = vpack.c.b16 %v1124, %v1120
    %v1521 = vpack.c.b16 %v1125, %v1121
    %v1522 = vpack.c.b16 %v1130, %v1126
    %v1523 = vpack.c.b16 %v1131, %v1127
    %v1524 = vpack.c.b16 %v1132, %v1128
    %v1525 = vpack.c.b16 %v1133, %v1129
    %v1526 = vpack.c.b16 %v1138, %v1134
    %v1527 = vpack.c.b16 %v1139, %v1135
    %v1528 = vpack.c.b16 %v1140, %v1136
    %v1529 = vpack.c.b16 %v1141, %v1137
    %v1530 = vpack.c.b16 %v1146, %v1142
    %v1531 = vpack.c.b16 %v1147, %v1143
    %v1532 = vpack.c.b16 %v1148, %v1144
    %v1533 = vpack.c.b16 %v1149, %v1145
    %v1534 = vpack.c.b16 %v1154, %v1150
    %v1535 = vpack.c.b16 %v1155, %v1151
    %v1536 = vpack.c.b16 %v1156, %v1152
    %v1537 = vpack.c.b16 %v1157, %v1153
    %v1538 = vpack.c.b16 %v1162, %v1158
    %v1539 = vpack.c.b16 %v1163, %v1159
    %v1540 = vpack.c.b16 %v1164, %v1160
    %v1541 = vpack.c.b16 %v1165, %v1161
    %v1542 = vpack.c.b16 %v1170, %v1166
    %v1543 = vpack.c.b16 %v1171, %v1167
    %v1544 = vpack.c.b16 %v1172, %v1168
    %v1545 = vpack.c.b16 %v1173, %v1169
    %v1546 = vpack.c.b16 %v1178, %v1174
    %v1547 = vpack.c.b16 %v1179, %v1175
    %v1548 = vpack.c.b16 %v1180, %v1176
    %v1549 = vpack.c.b16 %v1181, %v1177
    %v1550 = vpack.c.b16 %v1186, %v1182
    %v1551 = vpack.c.b16 %v1187, %v1183
    %v1552 = vpack.c.b16 %v1188, %v1184
    %v1553 = vpack.c.b16 %v1189, %v1185
    %v1554 = vpack.c.b16 %v1194, %v1190
    %v1555 = vpack.c.b16 %v1195, %v1191
    %v1556 = vpack.c.b16 %v1196, %v1192
    %v1557 = vpack.c.b16 %v1197, %v1193
    %v1558 = vpack.c.b16 %v1202, %v1198
    %v1559 = vpack.c.b16 %v1203, %v1199
    %v1560 = vpack.c.b16 %v1204, %v1200
    %v1561 = vpack.c.b16 %v1205, %v1201
    %v1562 = vpack.c.b16 %v1210, %v1206
    %v1563 = vpack.c.b16 %v1211, %v1207
    %v1564 = vpack.c.b16 %v1212, %v1208
    %v1565 = vpack.c.b16 %v1213, %v1209
    %v1566 = vpack.c.b16 %v1218, %v1214
    %v1567 = vpack.c.b16 %v1219, %v1215
    %v1568 = vpack.c.b16 %v1220, %v1216
    %v1569 = vpack.c.b16 %v1221, %v1217
    %v1570 = vpack.c.b16 %v1226, %v1222
    %v1571 = vpack.c.b16 %v1227, %v1223
    %v1572 = vpack.c.b16 %v1228, %v1224
    %v1573 = vpack.c.b16 %v1229, %v1225
    %v1574 = vpack.c.b16 %v1234, %v1230
    %v1575 = vpack.c.b16 %v1235, %v1231
    %v1576 = vpack.c.b16 %v1236, %v1232
    %v1577 = vpack.c.b16 %v1237, %v1233
    %v1578 = vpack.c.b16 %v1242, %v1238
    %v1579 = vpack.c.b16 %v1243, %v1239
    %v1580 = vpack.c.b16 %v1244, %v1240
    %v1581 = vpack.c.b16 %v1245, %v1241
    %v1582 = vpack.c.b16 %v1250, %v1246
    %v1583 = vpack.c.b16 %v1251, %v1247
    %v1584 = vpack.c.b16 %v1252, %v1248
    %v1585 = vpack.c.b16 %v1253, %v1249
    %v1586 = vpack.c.b16 %v1258, %v1254
    %v1587 = vpack.c.b16 %v1259, %v1255
    %v1588 = vpack.c.b16 %v1260, %v1256
    %v1589 = vpack.c.b16 %v1261, %v1257
    %v1590 = vpack.c.b16 %v1266, %v1262
    %v1591 = vpack.c.b16 %v1267, %v1263
    %v1592 = vpack.c.b16 %v1268, %v1264
    %v1593 = vpack.c.b16 %v1269, %v1265
    %v1594 = vpack.c.b16 %v1274, %v1270
    %v1595 = vpack.c.b16 %v1275, %v1271
    %v1596 = vpack.c.b16 %v1276, %v1272
    %v1597 = vpack.c.b16 %v1277, %v1273
    %v1598 = vpack.c.b16 %v1282, %v1278
    %v1599 = vpack.c.b16 %v1283, %v1279
    %v1600 = vpack.c.b16 %v1284, %v1280
    %v1601 = vpack.c.b16 %v1285, %v1281
    %v1602 = vpack.c.b16 %v1290, %v1286
    %v1603 = vpack.c.b16 %v1291, %v1287
    %v1604 = vpack.c.b16 %v1292, %v1288
    %v1605 = vpack.c.b16 %v1293, %v1289
    %v1606 = vpack.c.b16 %v1298, %v1294
    %v1607 = vpack.c.b16 %v1299, %v1295
    %v1608 = vpack.c.b16 %v1300, %v1296
    %v1609 = vpack.c.b16 %v1301, %v1297
    %v1610 = vpack.c.b16 %v1306, %v1302
    %v1611 = vpack.c.b16 %v1307, %v1303
    %v1612 = vpack.c.b16 %v1308, %v1304
    %v1613 = vpack.c.b16 %v1309, %v1305
    %v1614 = vpack.c.b16 %v1314, %v1310
    %v1615 = vpack.c.b16 %v1315, %v1311
    %v1616 = vpack.c.b16 %v1316, %v1312
    %v1617 = vpack.c.b16 %v1317, %v1313
    %v1618 = vpack.c.b16 %v1322, %v1318
    %v1619 = vpack.c.b16 %v1323, %v1319
    %v1620 = vpack.c.b16 %v1324, %v1320
    %v1621 = vpack.c.b16 %v1325, %v1321
    %v1622 = vpack.c.b16 %v1330, %v1326
    %v1623 = vpack.c.b16 %v1331, %v1327
    %v1624 = vpack.c.b16 %v1332, %v1328
    %v1625 = vpack.c.b16 %v1333, %v1329
    %v1626 = vpack.c.b16 %v1338, %v1334
    %v1627 = vpack.c.b16 %v1339, %v1335
    %v1628 = vpack.c.b16 %v1340, %v1336
    %v1629 = vpack.c.b16 %v1341, %v1337
    %v1630 = vpack.c.b16 %v1346, %v1342
    %v1631 = vpack.c.b16 %v1347, %v1343
    %v1632 = vpack.c.b16 %v1348, %v1344
    %v1633 = vpack.c.b16 %v1349, %v1345
    %v1634 = vpack.c.b16 %v1354, %v1350
    %v1635 = vpack.c.b16 %v1355, %v1351
    %v1636 = vpack.c.b16 %v1356, %v1352
    %v1637 = vpack.c.b16 %v1357, %v1353
    %v1638 = vpack.c.b16 %v1362, %v1358
    %v1639 = vpack.c.b16 %v1363, %v1359
    %v1640 = vpack.c.b16 %v1364, %v1360
    %v1641 = vpack.c.b16 %v1365, %v1361
    %v1642 = vpack.c.b16 %v1370, %v1366
    %v1643 = vpack.c.b16 %v1371, %v1367
    %v1644 = vpack.c.b16 %v1372, %v1368
    %v1645 = vpack.c.b16 %v1373, %v1369
    %v1646 = vpack.c.b16 %v1378, %v1374
    %v1647 = vpack.c.b16 %v1379, %v1375
    %v1648 = vpack.c.b16 %v1380, %v1376
    %v1649 = vpack.c.b16 %v1381, %v1377
    %v1650 = vpack.c.b16 %v1386, %v1382
    %v1651 = vpack.c.b16 %v1387, %v1383
    %v1652 = vpack.c.b16 %v1388, %v1384
    %v1653 = vpack.c.b16 %v1389, %v1385
    %v1654 = vpack.c.b16 %v1394, %v1390
    %v1655 = vpack.c.b16 %v1395, %v1391
    %v1656 = vpack.c.b16 %v1396, %v1392
    %v1657 = vpack.c.b16 %v1397, %v1393
    %v1658 = vpack.c.b16 %v1402, %v1398
    %v1659 = vpack.c.b16 %v1403, %v1399
    %v1660 = vpack.c.b16 %v1404, %v1400
    %v1661 = vpack.c.b16 %v1405, %v1401
    %1918 = vmatpush.bf16.msra.mxu0 %v1434
    %1919 = vmatpush.bf16.msra.mxu0 %v1430
    %1920 = vmatpush.bf16.msra.mxu0 %v1426
    %1921 = vmatpush.bf16.msra.mxu0 %v1422
    %1922 = vmatpush.bf16.msra.mxu0 %v1418
    %1923 = vmatpush.bf16.msra.mxu0 %v1414
    %1924 = vmatpush.bf16.msra.mxu0 %v1410
    %1925 = vmatpush.bf16.msra.mxu0 %v1406
    %1926 = vmatmul.bf16.gmra.mxu0 %v364
    %v1927 = vpop.f32.mrf.mxu0
    %v1928 = vadd.f32 %v630, %v1927
    %v1929 = vpop.f32.mrf.mxu0
    %1930 = vdwg.mxu0
    %1931 = vmatpush.bf16.msra.mxu0 %v1466
    %1932 = vmatpush.bf16.msra.mxu0 %v1462
    %1933 = vmatpush.bf16.msra.mxu0 %v1458
    %1934 = vmatpush.bf16.msra.mxu0 %v1454
    %1935 = vmatpush.bf16.msra.mxu0 %v1450
    %1936 = vmatpush.bf16.msra.mxu0 %v1446
    %1937 = vmatpush.bf16.msra.mxu0 %v1442
    %1938 = vmatpush.bf16.msra.mxu0 %v1438
    %1939 = vmatmul.bf16.gmra.mxu0 %v365
    %v1940 = vpop.f32.mrf.mxu0
    %v1941 = vadd.f32 %v1928, %v1940
    %v1942 = vpop.f32.mrf.mxu0
    %1943 = vdwg.mxu0
    %1944 = vmatpush.bf16.msra.mxu0 %v1498
    %1945 = vmatpush.bf16.msra.mxu0 %v1494
    %1946 = vmatpush.bf16.msra.mxu0 %v1490
    %1947 = vmatpush.bf16.msra.mxu0 %v1486
    %1948 = vmatpush.bf16.msra.mxu0 %v1482
    %1949 = vmatpush.bf16.msra.mxu0 %v1478
    %1950 = vmatpush.bf16.msra.mxu0 %v1474
    %1951 = vmatpush.bf16.msra.mxu0 %v1470
    %1952 = vmatmul.bf16.gmra.mxu0 %v366
    %v1953 = vpop.f32.mrf.mxu0
    %v1954 = vadd.f32 %v1941, %v1953
    %v1955 = vpop.f32.mrf.mxu0
    %1956 = vdwg.mxu0
    %1957 = vmatpush.bf16.msra.mxu0 %v1530
    %1958 = vmatpush.bf16.msra.mxu0 %v1526
    %1959 = vmatpush.bf16.msra.mxu0 %v1522
    %1960 = vmatpush.bf16.msra.mxu0 %v1518
    %1961 = vmatpush.bf16.msra.mxu0 %v1514
    %1962 = vmatpush.bf16.msra.mxu0 %v1510
    %1963 = vmatpush.bf16.msra.mxu0 %v1506
    %1964 = vmatpush.bf16.msra.mxu0 %v1502
    %1965 = vmatmul.bf16.gmra.mxu0 %v367
    %v1966 = vpop.f32.mrf.mxu0
    %v1967 = vadd.f32 %v1954, %v1966
    %v1968 = vpop.f32.mrf.mxu0
    %1969 = vdwg.mxu0
    %1970 = vmatpush.bf16.msra.mxu0 %v1562
    %1971 = vmatpush.bf16.msra.mxu0 %v1558
    %1972 = vmatpush.bf16.msra.mxu0 %v1554
    %1973 = vmatpush.bf16.msra.mxu0 %v1550
    %1974 = vmatpush.bf16.msra.mxu0 %v1546
    %1975 = vmatpush.bf16.msra.mxu0 %v1542
    %1976 = vmatpush.bf16.msra.mxu0 %v1538
    %1977 = vmatpush.bf16.msra.mxu0 %v1534
    %1978 = vmatmul.bf16.gmra.mxu0 %v368
    %v1979 = vpop.f32.mrf.mxu0
    %v1980 = vadd.f32 %v1967, %v1979
    %v1981 = vpop.f32.mrf.mxu0
    %1982 = vdwg.mxu0
    %1983 = vmatpush.bf16.msra.mxu0 %v1594
    %1984 = vmatpush.bf16.msra.mxu0 %v1590
    %1985 = vmatpush.bf16.msra.mxu0 %v1586
    %1986 = vmatpush.bf16.msra.mxu0 %v1582
    %1987 = vmatpush.bf16.msra.mxu0 %v1578
    %1988 = vmatpush.bf16.msra.mxu0 %v1574
    %1989 = vmatpush.bf16.msra.mxu0 %v1570
    %1990 = vmatpush.bf16.msra.mxu0 %v1566
    %1991 = vmatmul.bf16.gmra.mxu0 %v369
    %v1992 = vpop.f32.mrf.mxu0
    %v1993 = vadd.f32 %v1980, %v1992
    %v1994 = vpop.f32.mrf.mxu0
    %1995 = vdwg.mxu0
    %1996 = vmatpush.bf16.msra.mxu0 %v1626
    %1997 = vmatpush.bf16.msra.mxu0 %v1622
    %1998 = vmatpush.bf16.msra.mxu0 %v1618
    %1999 = vmatpush.bf16.msra.mxu0 %v1614
    %2000 = vmatpush.bf16.msra.mxu0 %v1610
    %2001 = vmatpush.bf16.msra.mxu0 %v1606
    %2002 = vmatpush.bf16.msra.mxu0 %v1602
    %2003 = vmatpush.bf16.msra.mxu0 %v1598
    %2004 = vmatmul.bf16.gmra.mxu0 %v370
    %v2005 = vpop.f32.mrf.mxu0
    %v2006 = vadd.f32 %v1993, %v2005
    %v2007 = vpop.f32.mrf.mxu0
    %2008 = vdwg.mxu0
    %2009 = vmatpush.bf16.msra.mxu0 %v1658
    %2010 = vmatpush.bf16.msra.mxu0 %v1654
    %2011 = vmatpush.bf16.msra.mxu0 %v1650
    %2012 = vmatpush.bf16.msra.mxu0 %v1646
    %2013 = vmatpush.bf16.msra.mxu0 %v1642
    %2014 = vmatpush.bf16.msra.mxu0 %v1638
    %2015 = vmatpush.bf16.msra.mxu0 %v1634
    %2016 = vmatpush.bf16.msra.mxu0 %v1630
    %2017 = vmatmul.bf16.gmra.mxu0 %v371
    %v2018 = vpop.f32.mrf.mxu0
    %v2019 = vadd.f32 %v2006, %v2018
    %v2020 = vpop.f32.mrf.mxu0
    %2021 = vdwg.mxu0
    %2022 = vmatpush.bf16.msra.mxu0 %v1435
    %2023 = vmatpush.bf16.msra.mxu0 %v1431
    %2024 = vmatpush.bf16.msra.mxu0 %v1427
    %2025 = vmatpush.bf16.msra.mxu0 %v1423
    %2026 = vmatpush.bf16.msra.mxu0 %v1419
    %2027 = vmatpush.bf16.msra.mxu0 %v1415
    %2028 = vmatpush.bf16.msra.mxu0 %v1411
    %2029 = vmatpush.bf16.msra.mxu0 %v1407
    %2030 = vmatmul.bf16.gmra.mxu0 %v364
    %v2031 = vpop.f32.mrf.mxu0
    %v2032 = vadd.f32 %v631, %v2031
    %v2033 = vpop.f32.mrf.mxu0
    %2034 = vdwg.mxu0
    %2035 = vmatpush.bf16.msra.mxu0 %v1467
    %2036 = vmatpush.bf16.msra.mxu0 %v1463
    %2037 = vmatpush.bf16.msra.mxu0 %v1459
    %2038 = vmatpush.bf16.msra.mxu0 %v1455
    %2039 = vmatpush.bf16.msra.mxu0 %v1451
    %2040 = vmatpush.bf16.msra.mxu0 %v1447
    %2041 = vmatpush.bf16.msra.mxu0 %v1443
    %2042 = vmatpush.bf16.msra.mxu0 %v1439
    %2043 = vmatmul.bf16.gmra.mxu0 %v365
    %v2044 = vpop.f32.mrf.mxu0
    %v2045 = vadd.f32 %v2032, %v2044
    %v2046 = vpop.f32.mrf.mxu0
    %2047 = vdwg.mxu0
    %2048 = vmatpush.bf16.msra.mxu0 %v1499
    %2049 = vmatpush.bf16.msra.mxu0 %v1495
    %2050 = vmatpush.bf16.msra.mxu0 %v1491
    %2051 = vmatpush.bf16.msra.mxu0 %v1487
    %2052 = vmatpush.bf16.msra.mxu0 %v1483
    %2053 = vmatpush.bf16.msra.mxu0 %v1479
    %2054 = vmatpush.bf16.msra.mxu0 %v1475
    %2055 = vmatpush.bf16.msra.mxu0 %v1471
    %2056 = vmatmul.bf16.gmra.mxu0 %v366
    %v2057 = vpop.f32.mrf.mxu0
    %v2058 = vadd.f32 %v2045, %v2057
    %v2059 = vpop.f32.mrf.mxu0
    %2060 = vdwg.mxu0
    %2061 = vmatpush.bf16.msra.mxu0 %v1531
    %2062 = vmatpush.bf16.msra.mxu0 %v1527
    %2063 = vmatpush.bf16.msra.mxu0 %v1523
    %2064 = vmatpush.bf16.msra.mxu0 %v1519
    %2065 = vmatpush.bf16.msra.mxu0 %v1515
    %2066 = vmatpush.bf16.msra.mxu0 %v1511
    %2067 = vmatpush.bf16.msra.mxu0 %v1507
    %2068 = vmatpush.bf16.msra.mxu0 %v1503
    %2069 = vmatmul.bf16.gmra.mxu0 %v367
    %v2070 = vpop.f32.mrf.mxu0
    %v2071 = vadd.f32 %v2058, %v2070
    %v2072 = vpop.f32.mrf.mxu0
    %2073 = vdwg.mxu0
    %2074 = vmatpush.bf16.msra.mxu0 %v1563
    %2075 = vmatpush.bf16.msra.mxu0 %v1559
    %2076 = vmatpush.bf16.msra.mxu0 %v1555
    %2077 = vmatpush.bf16.msra.mxu0 %v1551
    %2078 = vmatpush.bf16.msra.mxu0 %v1547
    %2079 = vmatpush.bf16.msra.mxu0 %v1543
    %2080 = vmatpush.bf16.msra.mxu0 %v1539
    %2081 = vmatpush.bf16.msra.mxu0 %v1535
    %2082 = vmatmul.bf16.gmra.mxu0 %v368
    %v2083 = vpop.f32.mrf.mxu0
    %v2084 = vadd.f32 %v2071, %v2083
    %v2085 = vpop.f32.mrf.mxu0
    %2086 = vdwg.mxu0
    %2087 = vmatpush.bf16.msra.mxu0 %v1595
    %2088 = vmatpush.bf16.msra.mxu0 %v1591
    %2089 = vmatpush.bf16.msra.mxu0 %v1587
    %2090 = vmatpush.bf16.msra.mxu0 %v1583
    %2091 = vmatpush.bf16.msra.mxu0 %v1579
    %2092 = vmatpush.bf16.msra.mxu0 %v1575
    %2093 = vmatpush.bf16.msra.mxu0 %v1571
    %2094 = vmatpush.bf16.msra.mxu0 %v1567
    %2095 = vmatmul.bf16.gmra.mxu0 %v369
    %v2096 = vpop.f32.mrf.mxu0
    %v2097 = vadd.f32 %v2084, %v2096
    %v2098 = vpop.f32.mrf.mxu0
    %2099 = vdwg.mxu0
    %2100 = vmatpush.bf16.msra.mxu0 %v1627
    %2101 = vmatpush.bf16.msra.mxu0 %v1623
    %2102 = vmatpush.bf16.msra.mxu0 %v1619
    %2103 = vmatpush.bf16.msra.mxu0 %v1615
    %2104 = vmatpush.bf16.msra.mxu0 %v1611
    %2105 = vmatpush.bf16.msra.mxu0 %v1607
    %2106 = vmatpush.bf16.msra.mxu0 %v1603
    %2107 = vmatpush.bf16.msra.mxu0 %v1599
    %2108 = vmatmul.bf16.gmra.mxu0 %v370
    %v2109 = vpop.f32.mrf.mxu0
    %v2110 = vadd.f32 %v2097, %v2109
    %v2111 = vpop.f32.mrf.mxu0
    %2112 = vdwg.mxu0
    %2113 = vmatpush.bf16.msra.mxu0 %v1659
    %2114 = vmatpush.bf16.msra.mxu0 %v1655
    %2115 = vmatpush.bf16.msra.mxu0 %v1651
    %2116 = vmatpush.bf16.msra.mxu0 %v1647
    %2117 = vmatpush.bf16.msra.mxu0 %v1643
    %2118 = vmatpush.bf16.msra.mxu0 %v1639
    %2119 = vmatpush.bf16.msra.mxu0 %v1635
    %2120 = vmatpush.bf16.msra.mxu0 %v1631
    %2121 = vmatmul.bf16.gmra.mxu0 %v371
    %v2122 = vpop.f32.mrf.mxu0
    %v2123 = vadd.f32 %v2110, %v2122
    %v2124 = vpop.f32.mrf.mxu0
    %2125 = vdwg.mxu0
    %2126 = vmatpush.bf16.msra.mxu0 %v1436
    %2127 = vmatpush.bf16.msra.mxu0 %v1432
    %2128 = vmatpush.bf16.msra.mxu0 %v1428
    %2129 = vmatpush.bf16.msra.mxu0 %v1424
    %2130 = vmatpush.bf16.msra.mxu0 %v1420
    %2131 = vmatpush.bf16.msra.mxu0 %v1416
    %2132 = vmatpush.bf16.msra.mxu0 %v1412
    %2133 = vmatpush.bf16.msra.mxu0 %v1408
    %2134 = vmatmul.bf16.gmra.mxu0 %v364
    %v2135 = vpop.f32.mrf.mxu0
    %v2136 = vadd.f32 %v632, %v2135
    %v2137 = vpop.f32.mrf.mxu0
    %2138 = vdwg.mxu0
    %2139 = vmatpush.bf16.msra.mxu0 %v1468
    %2140 = vmatpush.bf16.msra.mxu0 %v1464
    %2141 = vmatpush.bf16.msra.mxu0 %v1460
    %2142 = vmatpush.bf16.msra.mxu0 %v1456
    %2143 = vmatpush.bf16.msra.mxu0 %v1452
    %2144 = vmatpush.bf16.msra.mxu0 %v1448
    %2145 = vmatpush.bf16.msra.mxu0 %v1444
    %2146 = vmatpush.bf16.msra.mxu0 %v1440
    %2147 = vmatmul.bf16.gmra.mxu0 %v365
    %v2148 = vpop.f32.mrf.mxu0
    %v2149 = vadd.f32 %v2136, %v2148
    %v2150 = vpop.f32.mrf.mxu0
    %2151 = vdwg.mxu0
    %2152 = vmatpush.bf16.msra.mxu0 %v1500
    %2153 = vmatpush.bf16.msra.mxu0 %v1496
    %2154 = vmatpush.bf16.msra.mxu0 %v1492
    %2155 = vmatpush.bf16.msra.mxu0 %v1488
    %2156 = vmatpush.bf16.msra.mxu0 %v1484
    %2157 = vmatpush.bf16.msra.mxu0 %v1480
    %2158 = vmatpush.bf16.msra.mxu0 %v1476
    %2159 = vmatpush.bf16.msra.mxu0 %v1472
    %2160 = vmatmul.bf16.gmra.mxu0 %v366
    %v2161 = vpop.f32.mrf.mxu0
    %v2162 = vadd.f32 %v2149, %v2161
    %v2163 = vpop.f32.mrf.mxu0
    %2164 = vdwg.mxu0
    %2165 = vmatpush.bf16.msra.mxu0 %v1532
    %2166 = vmatpush.bf16.msra.mxu0 %v1528
    %2167 = vmatpush.bf16.msra.mxu0 %v1524
    %2168 = vmatpush.bf16.msra.mxu0 %v1520
    %2169 = vmatpush.bf16.msra.mxu0 %v1516
    %2170 = vmatpush.bf16.msra.mxu0 %v1512
    %2171 = vmatpush.bf16.msra.mxu0 %v1508
    %2172 = vmatpush.bf16.msra.mxu0 %v1504
    %2173 = vmatmul.bf16.gmra.mxu0 %v367
    %v2174 = vpop.f32.mrf.mxu0
    %v2175 = vadd.f32 %v2162, %v2174
    %v2176 = vpop.f32.mrf.mxu0
    %2177 = vdwg.mxu0
    %2178 = vmatpush.bf16.msra.mxu0 %v1564
    %2179 = vmatpush.bf16.msra.mxu0 %v1560
    %2180 = vmatpush.bf16.msra.mxu0 %v1556
    %2181 = vmatpush.bf16.msra.mxu0 %v1552
    %2182 = vmatpush.bf16.msra.mxu0 %v1548
    %2183 = vmatpush.bf16.msra.mxu0 %v1544
    %2184 = vmatpush.bf16.msra.mxu0 %v1540
    %2185 = vmatpush.bf16.msra.mxu0 %v1536
    %2186 = vmatmul.bf16.gmra.mxu0 %v368
    %v2187 = vpop.f32.mrf.mxu0
    %v2188 = vadd.f32 %v2175, %v2187
    %v2189 = vpop.f32.mrf.mxu0
    %2190 = vdwg.mxu0
    %2191 = vmatpush.bf16.msra.mxu0 %v1596
    %2192 = vmatpush.bf16.msra.mxu0 %v1592
    %2193 = vmatpush.bf16.msra.mxu0 %v1588
    %2194 = vmatpush.bf16.msra.mxu0 %v1584
    %2195 = vmatpush.bf16.msra.mxu0 %v1580
    %2196 = vmatpush.bf16.msra.mxu0 %v1576
    %2197 = vmatpush.bf16.msra.mxu0 %v1572
    %2198 = vmatpush.bf16.msra.mxu0 %v1568
    %2199 = vmatmul.bf16.gmra.mxu0 %v369
    %v2200 = vpop.f32.mrf.mxu0
    %v2201 = vadd.f32 %v2188, %v2200
    %v2202 = vpop.f32.mrf.mxu0
    %2203 = vdwg.mxu0
    %2204 = vmatpush.bf16.msra.mxu0 %v1628
    %2205 = vmatpush.bf16.msra.mxu0 %v1624
    %2206 = vmatpush.bf16.msra.mxu0 %v1620
    %2207 = vmatpush.bf16.msra.mxu0 %v1616
    %2208 = vmatpush.bf16.msra.mxu0 %v1612
    %2209 = vmatpush.bf16.msra.mxu0 %v1608
    %2210 = vmatpush.bf16.msra.mxu0 %v1604
    %2211 = vmatpush.bf16.msra.mxu0 %v1600
    %2212 = vmatmul.bf16.gmra.mxu0 %v370
    %v2213 = vpop.f32.mrf.mxu0
    %v2214 = vadd.f32 %v2201, %v2213
    %v2215 = vpop.f32.mrf.mxu0
    %2216 = vdwg.mxu0
    %2217 = vmatpush.bf16.msra.mxu0 %v1660
    %2218 = vmatpush.bf16.msra.mxu0 %v1656
    %2219 = vmatpush.bf16.msra.mxu0 %v1652
    %2220 = vmatpush.bf16.msra.mxu0 %v1648
    %2221 = vmatpush.bf16.msra.mxu0 %v1644
    %2222 = vmatpush.bf16.msra.mxu0 %v1640
    %2223 = vmatpush.bf16.msra.mxu0 %v1636
    %2224 = vmatpush.bf16.msra.mxu0 %v1632
    %2225 = vmatmul.bf16.gmra.mxu0 %v371
    %v2226 = vpop.f32.mrf.mxu0
    %v2227 = vadd.f32 %v2214, %v2226
    %v2228 = vpop.f32.mrf.mxu0
    %2229 = vdwg.mxu0
    %2230 = vmatpush.bf16.msra.mxu0 %v1437
    %2231 = vmatpush.bf16.msra.mxu0 %v1433
    %2232 = vmatpush.bf16.msra.mxu0 %v1429
    %2233 = vmatpush.bf16.msra.mxu0 %v1425
    %2234 = vmatpush.bf16.msra.mxu0 %v1421
    %2235 = vmatpush.bf16.msra.mxu0 %v1417
    %2236 = vmatpush.bf16.msra.mxu0 %v1413
    %2237 = vmatpush.bf16.msra.mxu0 %v1409
    %2238 = vmatmul.bf16.gmra.mxu0 %v364
    %v2239 = vpop.f32.mrf.mxu0
    %v2240 = vadd.f32 %v633, %v2239
    %v2241 = vpop.f32.mrf.mxu0
    %2242 = vdwg.mxu0
    %2243 = vmatpush.bf16.msra.mxu0 %v1469
    %2244 = vmatpush.bf16.msra.mxu0 %v1465
    %2245 = vmatpush.bf16.msra.mxu0 %v1461
    %2246 = vmatpush.bf16.msra.mxu0 %v1457
    %2247 = vmatpush.bf16.msra.mxu0 %v1453
    %2248 = vmatpush.bf16.msra.mxu0 %v1449
    %2249 = vmatpush.bf16.msra.mxu0 %v1445
    %2250 = vmatpush.bf16.msra.mxu0 %v1441
    %2251 = vmatmul.bf16.gmra.mxu0 %v365
    %v2252 = vpop.f32.mrf.mxu0
    %v2253 = vadd.f32 %v2240, %v2252
    %v2254 = vpop.f32.mrf.mxu0
    %2255 = vdwg.mxu0
    %2256 = vmatpush.bf16.msra.mxu0 %v1501
    %2257 = vmatpush.bf16.msra.mxu0 %v1497
    %2258 = vmatpush.bf16.msra.mxu0 %v1493
    %2259 = vmatpush.bf16.msra.mxu0 %v1489
    %2260 = vmatpush.bf16.msra.mxu0 %v1485
    %2261 = vmatpush.bf16.msra.mxu0 %v1481
    %2262 = vmatpush.bf16.msra.mxu0 %v1477
    %2263 = vmatpush.bf16.msra.mxu0 %v1473
    %2264 = vmatmul.bf16.gmra.mxu0 %v366
    %v2265 = vpop.f32.mrf.mxu0
    %v2266 = vadd.f32 %v2253, %v2265
    %v2267 = vpop.f32.mrf.mxu0
    %2268 = vdwg.mxu0
    %2269 = vmatpush.bf16.msra.mxu0 %v1533
    %2270 = vmatpush.bf16.msra.mxu0 %v1529
    %2271 = vmatpush.bf16.msra.mxu0 %v1525
    %2272 = vmatpush.bf16.msra.mxu0 %v1521
    %2273 = vmatpush.bf16.msra.mxu0 %v1517
    %2274 = vmatpush.bf16.msra.mxu0 %v1513
    %2275 = vmatpush.bf16.msra.mxu0 %v1509
    %2276 = vmatpush.bf16.msra.mxu0 %v1505
    %2277 = vmatmul.bf16.gmra.mxu0 %v367
    %v2278 = vpop.f32.mrf.mxu0
    %v2279 = vadd.f32 %v2266, %v2278
    %v2280 = vpop.f32.mrf.mxu0
    %2281 = vdwg.mxu0
    %2282 = vmatpush.bf16.msra.mxu0 %v1565
    %2283 = vmatpush.bf16.msra.mxu0 %v1561
    %2284 = vmatpush.bf16.msra.mxu0 %v1557
    %2285 = vmatpush.bf16.msra.mxu0 %v1553
    %2286 = vmatpush.bf16.msra.mxu0 %v1549
    %2287 = vmatpush.bf16.msra.mxu0 %v1545
    %2288 = vmatpush.bf16.msra.mxu0 %v1541
    %2289 = vmatpush.bf16.msra.mxu0 %v1537
    %2290 = vmatmul.bf16.gmra.mxu0 %v368
    %v2291 = vpop.f32.mrf.mxu0
    %v2292 = vadd.f32 %v2279, %v2291
    %v2293 = vpop.f32.mrf.mxu0
    %2294 = vdwg.mxu0
    %2295 = vmatpush.bf16.msra.mxu0 %v1597
    %2296 = vmatpush.bf16.msra.mxu0 %v1593
    %2297 = vmatpush.bf16.msra.mxu0 %v1589
    %2298 = vmatpush.bf16.msra.mxu0 %v1585
    %2299 = vmatpush.bf16.msra.mxu0 %v1581
    %2300 = vmatpush.bf16.msra.mxu0 %v1577
    %2301 = vmatpush.bf16.msra.mxu0 %v1573
    %2302 = vmatpush.bf16.msra.mxu0 %v1569
    %2303 = vmatmul.bf16.gmra.mxu0 %v369
    %v2304 = vpop.f32.mrf.mxu0
    %v2305 = vadd.f32 %v2292, %v2304
    %v2306 = vpop.f32.mrf.mxu0
    %2307 = vdwg.mxu0
    %2308 = vmatpush.bf16.msra.mxu0 %v1629
    %2309 = vmatpush.bf16.msra.mxu0 %v1625
    %2310 = vmatpush.bf16.msra.mxu0 %v1621
    %2311 = vmatpush.bf16.msra.mxu0 %v1617
    %2312 = vmatpush.bf16.msra.mxu0 %v1613
    %2313 = vmatpush.bf16.msra.mxu0 %v1609
    %2314 = vmatpush.bf16.msra.mxu0 %v1605
    %2315 = vmatpush.bf16.msra.mxu0 %v1601
    %2316 = vmatmul.bf16.gmra.mxu0 %v370
    %v2317 = vpop.f32.mrf.mxu0
    %v2318 = vadd.f32 %v2305, %v2317
    %v2319 = vpop.f32.mrf.mxu0
    %2320 = vdwg.mxu0
    %2321 = vmatpush.bf16.msra.mxu0 %v1661
    %2322 = vmatpush.bf16.msra.mxu0 %v1657
    %2323 = vmatpush.bf16.msra.mxu0 %v1653
    %2324 = vmatpush.bf16.msra.mxu0 %v1649
    %2325 = vmatpush.bf16.msra.mxu0 %v1645
    %2326 = vmatpush.bf16.msra.mxu0 %v1641
    %2327 = vmatpush.bf16.msra.mxu0 %v1637
    %2328 = vmatpush.bf16.msra.mxu0 %v1633
    %2329 = vmatmul.bf16.gmra.mxu0 %v371
    %v2330 = vpop.f32.mrf.mxu0
    %v2331 = vadd.f32 %v2318, %v2330
    %v2332 = vpop.f32.mrf.mxu0
    %2333 = vdwg.mxu0
    %vm2334 = vcmp.gt.f32.partialorder %v2019, 0.0
    %vm2335 = vcmp.gt.f32.partialorder %v2123, 0.0
    %vm2336 = vcmp.gt.f32.partialorder %v2227, 0.0
    %vm2337 = vcmp.gt.f32.partialorder %v2331, 0.0
    %v2338 = vmul.f32 %v2019, 0.01
    %v2339 = vmul.f32 %v2123, 0.01
    %v2340 = vmul.f32 %v2227, 0.01
    %v2341 = vmul.f32 %v2331, 0.01
    %v2342 = vsel %vm2334, %v2019, %v2338
    %v2343 = vsel %vm2335, %v2123, %v2339
    %v2344 = vsel %vm2336, %v2227, %v2340
    %v2345 = vsel %vm2337, %v2331, %v2341
    %v2346 = vpack.c.bf16 %v2342, %v2342
    %v2347 = vpack.c.bf16 %v2343, %v2343
    %v2348 = vpack.c.bf16 %v2344, %v2344
    %v2349 = vpack.c.bf16 %v2345, %v2345
    %v2350 = vld [vmem:[#allocation6] sm:$0xff]
    %v2351 = vld [vmem:[#allocation6 + $0x8] sm:$0xff]
    %v2352 = vld [vmem:[#allocation6 + $0x10] sm:$0xff]
    %v2353 = vld [vmem:[#allocation6 + $0x18] sm:$0xff]
    %v2354 = vld [vmem:[#allocation6 + $0x20] sm:$0xff]
    %v2355 = vld [vmem:[#allocation6 + $0x28] sm:$0xff]
    %v2356 = vld [vmem:[#allocation6 + $0x30] sm:$0xff]
    %v2357 = vld [vmem:[#allocation6 + $0x38] sm:$0xff]
    %v2358 = vld [vmem:[#allocation6 + $0x40] sm:$0xff]
    %v2359 = vld [vmem:[#allocation6 + $0x48] sm:$0xff]
    %v2360 = vld [vmem:[#allocation6 + $0x50] sm:$0xff]
    %v2361 = vld [vmem:[#allocation6 + $0x58] sm:$0xff]
    %v2362 = vld [vmem:[#allocation6 + $0x60] sm:$0xff]
    %v2363 = vld [vmem:[#allocation6 + $0x68] sm:$0xff]
    %v2364 = vld [vmem:[#allocation6 + $0x70] sm:$0xff]
    %v2365 = vld [vmem:[#allocation6 + $0x78] sm:$0xff]
    %v2366 = vld [vmem:[#allocation6 + $0x80] sm:$0xff]
    %v2367 = vld [vmem:[#allocation6 + $0x88] sm:$0xff]
    %v2368 = vld [vmem:[#allocation6 + $0x90] sm:$0xff]
    %v2369 = vld [vmem:[#allocation6 + $0x98] sm:$0xff]
    %v2370 = vld [vmem:[#allocation6 + $0xa0] sm:$0xff]
    %v2371 = vld [vmem:[#allocation6 + $0xa8] sm:$0xff]
    %v2372 = vld [vmem:[#allocation6 + $0xb0] sm:$0xff]
    %v2373 = vld [vmem:[#allocation6 + $0xb8] sm:$0xff]
    %v2374 = vld [vmem:[#allocation6 + $0xc0] sm:$0xff]
    %v2375 = vld [vmem:[#allocation6 + $0xc8] sm:$0xff]
    %v2376 = vld [vmem:[#allocation6 + $0xd0] sm:$0xff]
    %v2377 = vld [vmem:[#allocation6 + $0xd8] sm:$0xff]
    %v2378 = vld [vmem:[#allocation6 + $0xe0] sm:$0xff]
    %v2379 = vld [vmem:[#allocation6 + $0xe8] sm:$0xff]
    %v2380 = vld [vmem:[#allocation6 + $0xf0] sm:$0xff]
    %v2381 = vld [vmem:[#allocation6 + $0xf8] sm:$0xff]
    %v2382 = vld [vmem:[#allocation6 + $0x100] sm:$0xff]
    %v2383 = vld [vmem:[#allocation6 + $0x108] sm:$0xff]
    %v2384 = vld [vmem:[#allocation6 + $0x110] sm:$0xff]
    %v2385 = vld [vmem:[#allocation6 + $0x118] sm:$0xff]
    %v2386 = vld [vmem:[#allocation6 + $0x120] sm:$0xff]
    %v2387 = vld [vmem:[#allocation6 + $0x128] sm:$0xff]
    %v2388 = vld [vmem:[#allocation6 + $0x130] sm:$0xff]
    %v2389 = vld [vmem:[#allocation6 + $0x138] sm:$0xff]
    %v2390 = vld [vmem:[#allocation6 + $0x140] sm:$0xff]
    %v2391 = vld [vmem:[#allocation6 + $0x148] sm:$0xff]
    %v2392 = vld [vmem:[#allocation6 + $0x150] sm:$0xff]
    %v2393 = vld [vmem:[#allocation6 + $0x158] sm:$0xff]
    %v2394 = vld [vmem:[#allocation6 + $0x160] sm:$0xff]
    %v2395 = vld [vmem:[#allocation6 + $0x168] sm:$0xff]
    %v2396 = vld [vmem:[#allocation6 + $0x170] sm:$0xff]
    %v2397 = vld [vmem:[#allocation6 + $0x178] sm:$0xff]
    %v2398 = vld [vmem:[#allocation6 + $0x180] sm:$0xff]
    %v2399 = vld [vmem:[#allocation6 + $0x188] sm:$0xff]
    %v2400 = vld [vmem:[#allocation6 + $0x190] sm:$0xff]
    %v2401 = vld [vmem:[#allocation6 + $0x198] sm:$0xff]
    %v2402 = vld [vmem:[#allocation6 + $0x1a0] sm:$0xff]
    %v2403 = vld [vmem:[#allocation6 + $0x1a8] sm:$0xff]
    %v2404 = vld [vmem:[#allocation6 + $0x1b0] sm:$0xff]
    %v2405 = vld [vmem:[#allocation6 + $0x1b8] sm:$0xff]
    %v2406 = vld [vmem:[#allocation6 + $0x1c0] sm:$0xff]
    %v2407 = vld [vmem:[#allocation6 + $0x1c8] sm:$0xff]
    %v2408 = vld [vmem:[#allocation6 + $0x1d0] sm:$0xff]
    %v2409 = vld [vmem:[#allocation6 + $0x1d8] sm:$0xff]
    %v2410 = vld [vmem:[#allocation6 + $0x1e0] sm:$0xff]
    %v2411 = vld [vmem:[#allocation6 + $0x1e8] sm:$0xff]
    %v2412 = vld [vmem:[#allocation6 + $0x1f0] sm:$0xff]
    %v2413 = vld [vmem:[#allocation6 + $0x1f8] sm:$0xff]
    %v2414 = vld [vmem:[%s6] sm:$0x3]
    %v2416 = vperm.slane %v2414, 0
    %v2417 = vperm.slane %v2414, 1
    %v2484 = vunpack.c.l.b16 %v2350
    %v2485 = vunpack.c.h.b16 %v2350
    %v2486 = vunpack.c.l.b16 %v2351
    %v2487 = vunpack.c.h.b16 %v2351
    %v2488 = vunpack.c.l.b16 %v2352
    %v2489 = vunpack.c.h.b16 %v2352
    %v2490 = vunpack.c.l.b16 %v2353
    %v2491 = vunpack.c.h.b16 %v2353
    %v2492 = vunpack.c.l.b16 %v2354
    %v2493 = vunpack.c.h.b16 %v2354
    %v2494 = vunpack.c.l.b16 %v2355
    %v2495 = vunpack.c.h.b16 %v2355
    %v2496 = vunpack.c.l.b16 %v2356
    %v2497 = vunpack.c.h.b16 %v2356
    %v2498 = vunpack.c.l.b16 %v2357
    %v2499 = vunpack.c.h.b16 %v2357
    %v2500 = vunpack.c.l.b16 %v2358
    %v2501 = vunpack.c.h.b16 %v2358
    %v2502 = vunpack.c.l.b16 %v2359
    %v2503 = vunpack.c.h.b16 %v2359
    %v2504 = vunpack.c.l.b16 %v2360
    %v2505 = vunpack.c.h.b16 %v2360
    %v2506 = vunpack.c.l.b16 %v2361
    %v2507 = vunpack.c.h.b16 %v2361
    %v2508 = vunpack.c.l.b16 %v2362
    %v2509 = vunpack.c.h.b16 %v2362
    %v2510 = vunpack.c.l.b16 %v2363
    %v2511 = vunpack.c.h.b16 %v2363
    %v2512 = vunpack.c.l.b16 %v2364
    %v2513 = vunpack.c.h.b16 %v2364
    %v2514 = vunpack.c.l.b16 %v2365
    %v2515 = vunpack.c.h.b16 %v2365
    %v2516 = vunpack.c.l.b16 %v2366
    %v2517 = vunpack.c.h.b16 %v2366
    %v2518 = vunpack.c.l.b16 %v2367
    %v2519 = vunpack.c.h.b16 %v2367
    %v2520 = vunpack.c.l.b16 %v2368
    %v2521 = vunpack.c.h.b16 %v2368
    %v2522 = vunpack.c.l.b16 %v2369
    %v2523 = vunpack.c.h.b16 %v2369
    %v2524 = vunpack.c.l.b16 %v2370
    %v2525 = vunpack.c.h.b16 %v2370
    %v2526 = vunpack.c.l.b16 %v2371
    %v2527 = vunpack.c.h.b16 %v2371
    %v2528 = vunpack.c.l.b16 %v2372
    %v2529 = vunpack.c.h.b16 %v2372
    %v2530 = vunpack.c.l.b16 %v2373
    %v2531 = vunpack.c.h.b16 %v2373
    %v2532 = vunpack.c.l.b16 %v2374
    %v2533 = vunpack.c.h.b16 %v2374
    %v2534 = vunpack.c.l.b16 %v2375
    %v2535 = vunpack.c.h.b16 %v2375
    %v2536 = vunpack.c.l.b16 %v2376
    %v2537 = vunpack.c.h.b16 %v2376
    %v2538 = vunpack.c.l.b16 %v2377
    %v2539 = vunpack.c.h.b16 %v2377
    %v2540 = vunpack.c.l.b16 %v2378
    %v2541 = vunpack.c.h.b16 %v2378
    %v2542 = vunpack.c.l.b16 %v2379
    %v2543 = vunpack.c.h.b16 %v2379
    %v2544 = vunpack.c.l.b16 %v2380
    %v2545 = vunpack.c.h.b16 %v2380
    %v2546 = vunpack.c.l.b16 %v2381
    %v2547 = vunpack.c.h.b16 %v2381
    %v2548 = vunpack.c.l.b16 %v2382
    %v2549 = vunpack.c.h.b16 %v2382
    %v2550 = vunpack.c.l.b16 %v2383
    %v2551 = vunpack.c.h.b16 %v2383
    %v2552 = vunpack.c.l.b16 %v2384
    %v2553 = vunpack.c.h.b16 %v2384
    %v2554 = vunpack.c.l.b16 %v2385
    %v2555 = vunpack.c.h.b16 %v2385
    %v2556 = vunpack.c.l.b16 %v2386
    %v2557 = vunpack.c.h.b16 %v2386
    %v2558 = vunpack.c.l.b16 %v2387
    %v2559 = vunpack.c.h.b16 %v2387
    %v2560 = vunpack.c.l.b16 %v2388
    %v2561 = vunpack.c.h.b16 %v2388
    %v2562 = vunpack.c.l.b16 %v2389
    %v2563 = vunpack.c.h.b16 %v2389
    %v2564 = vunpack.c.l.b16 %v2390
    %v2565 = vunpack.c.h.b16 %v2390
    %v2566 = vunpack.c.l.b16 %v2391
    %v2567 = vunpack.c.h.b16 %v2391
    %v2568 = vunpack.c.l.b16 %v2392
    %v2569 = vunpack.c.h.b16 %v2392
    %v2570 = vunpack.c.l.b16 %v2393
    %v2571 = vunpack.c.h.b16 %v2393
    %v2572 = vunpack.c.l.b16 %v2394
    %v2573 = vunpack.c.h.b16 %v2394
    %v2574 = vunpack.c.l.b16 %v2395
    %v2575 = vunpack.c.h.b16 %v2395
    %v2576 = vunpack.c.l.b16 %v2396
    %v2577 = vunpack.c.h.b16 %v2396
    %v2578 = vunpack.c.l.b16 %v2397
    %v2579 = vunpack.c.h.b16 %v2397
    %v2580 = vunpack.c.l.b16 %v2398
    %v2581 = vunpack.c.h.b16 %v2398
    %v2582 = vunpack.c.l.b16 %v2399
    %v2583 = vunpack.c.h.b16 %v2399
    %v2584 = vunpack.c.l.b16 %v2400
    %v2585 = vunpack.c.h.b16 %v2400
    %v2586 = vunpack.c.l.b16 %v2401
    %v2587 = vunpack.c.h.b16 %v2401
    %v2588 = vunpack.c.l.b16 %v2402
    %v2589 = vunpack.c.h.b16 %v2402
    %v2590 = vunpack.c.l.b16 %v2403
    %v2591 = vunpack.c.h.b16 %v2403
    %v2592 = vunpack.c.l.b16 %v2404
    %v2593 = vunpack.c.h.b16 %v2404
    %v2594 = vunpack.c.l.b16 %v2405
    %v2595 = vunpack.c.h.b16 %v2405
    %v2596 = vunpack.c.l.b16 %v2406
    %v2597 = vunpack.c.h.b16 %v2406
    %v2598 = vunpack.c.l.b16 %v2407
    %v2599 = vunpack.c.h.b16 %v2407
    %v2600 = vunpack.c.l.b16 %v2408
    %v2601 = vunpack.c.h.b16 %v2408
    %v2602 = vunpack.c.l.b16 %v2409
    %v2603 = vunpack.c.h.b16 %v2409
    %v2604 = vunpack.c.l.b16 %v2410
    %v2605 = vunpack.c.h.b16 %v2410
    %v2606 = vunpack.c.l.b16 %v2411
    %v2607 = vunpack.c.h.b16 %v2411
    %v2608 = vunpack.c.l.b16 %v2412
    %v2609 = vunpack.c.h.b16 %v2412
    %v2610 = vunpack.c.l.b16 %v2413
    %v2611 = vunpack.c.h.b16 %v2413
    %v2612 = vpack.c.b16 %v2486, %v2484
    %v2613 = vpack.c.b16 %v2487, %v2485
    %v2614 = vpack.c.b16 %v2490, %v2488
    %v2615 = vpack.c.b16 %v2491, %v2489
    %v2616 = vpack.c.b16 %v2494, %v2492
    %v2617 = vpack.c.b16 %v2495, %v2493
    %v2618 = vpack.c.b16 %v2498, %v2496
    %v2619 = vpack.c.b16 %v2499, %v2497
    %v2620 = vpack.c.b16 %v2502, %v2500
    %v2621 = vpack.c.b16 %v2503, %v2501
    %v2622 = vpack.c.b16 %v2506, %v2504
    %v2623 = vpack.c.b16 %v2507, %v2505
    %v2624 = vpack.c.b16 %v2510, %v2508
    %v2625 = vpack.c.b16 %v2511, %v2509
    %v2626 = vpack.c.b16 %v2514, %v2512
    %v2627 = vpack.c.b16 %v2515, %v2513
    %v2628 = vpack.c.b16 %v2518, %v2516
    %v2629 = vpack.c.b16 %v2519, %v2517
    %v2630 = vpack.c.b16 %v2522, %v2520
    %v2631 = vpack.c.b16 %v2523, %v2521
    %v2632 = vpack.c.b16 %v2526, %v2524
    %v2633 = vpack.c.b16 %v2527, %v2525
    %v2634 = vpack.c.b16 %v2530, %v2528
    %v2635 = vpack.c.b16 %v2531, %v2529
    %v2636 = vpack.c.b16 %v2534, %v2532
    %v2637 = vpack.c.b16 %v2535, %v2533
    %v2638 = vpack.c.b16 %v2538, %v2536
    %v2639 = vpack.c.b16 %v2539, %v2537
    %v2640 = vpack.c.b16 %v2542, %v2540
    %v2641 = vpack.c.b16 %v2543, %v2541
    %v2642 = vpack.c.b16 %v2546, %v2544
    %v2643 = vpack.c.b16 %v2547, %v2545
    %v2644 = vpack.c.b16 %v2550, %v2548
    %v2645 = vpack.c.b16 %v2551, %v2549
    %v2646 = vpack.c.b16 %v2554, %v2552
    %v2647 = vpack.c.b16 %v2555, %v2553
    %v2648 = vpack.c.b16 %v2558, %v2556
    %v2649 = vpack.c.b16 %v2559, %v2557
    %v2650 = vpack.c.b16 %v2562, %v2560
    %v2651 = vpack.c.b16 %v2563, %v2561
    %v2652 = vpack.c.b16 %v2566, %v2564
    %v2653 = vpack.c.b16 %v2567, %v2565
    %v2654 = vpack.c.b16 %v2570, %v2568
    %v2655 = vpack.c.b16 %v2571, %v2569
    %v2656 = vpack.c.b16 %v2574, %v2572
    %v2657 = vpack.c.b16 %v2575, %v2573
    %v2658 = vpack.c.b16 %v2578, %v2576
    %v2659 = vpack.c.b16 %v2579, %v2577
    %v2660 = vpack.c.b16 %v2582, %v2580
    %v2661 = vpack.c.b16 %v2583, %v2581
    %v2662 = vpack.c.b16 %v2586, %v2584
    %v2663 = vpack.c.b16 %v2587, %v2585
    %v2664 = vpack.c.b16 %v2590, %v2588
    %v2665 = vpack.c.b16 %v2591, %v2589
    %v2666 = vpack.c.b16 %v2594, %v2592
    %v2667 = vpack.c.b16 %v2595, %v2593
    %v2668 = vpack.c.b16 %v2598, %v2596
    %v2669 = vpack.c.b16 %v2599, %v2597
    %v2670 = vpack.c.b16 %v2602, %v2600
    %v2671 = vpack.c.b16 %v2603, %v2601
    %v2672 = vpack.c.b16 %v2606, %v2604
    %v2673 = vpack.c.b16 %v2607, %v2605
    %v2674 = vpack.c.b16 %v2610, %v2608
    %v2675 = vpack.c.b16 %v2611, %v2609
    %2740 = vmatpush.bf16.msra.mxu0 %v2626
    %2741 = vmatpush.bf16.msra.mxu0 %v2624
    %2742 = vmatpush.bf16.msra.mxu0 %v2622
    %2743 = vmatpush.bf16.msra.mxu0 %v2620
    %2744 = vmatpush.bf16.msra.mxu0 %v2618
    %2745 = vmatpush.bf16.msra.mxu0 %v2616
    %2746 = vmatpush.bf16.msra.mxu0 %v2614
    %2747 = vmatpush.bf16.msra.mxu0 %v2612
    %2748 = vmatmul.bf16.gmra.mxu0 %v2346
    %v2749 = vpop.f32.mrf.mxu0
    %v2750 = vadd.f32 %v2416, %v2749
    %v2751 = vpop.f32.mrf.mxu0
    %2752 = vdwg.mxu0
    %2753 = vmatpush.bf16.msra.mxu0 %v2642
    %2754 = vmatpush.bf16.msra.mxu0 %v2640
    %2755 = vmatpush.bf16.msra.mxu0 %v2638
    %2756 = vmatpush.bf16.msra.mxu0 %v2636
    %2757 = vmatpush.bf16.msra.mxu0 %v2634
    %2758 = vmatpush.bf16.msra.mxu0 %v2632
    %2759 = vmatpush.bf16.msra.mxu0 %v2630
    %2760 = vmatpush.bf16.msra.mxu0 %v2628
    %2761 = vmatmul.bf16.gmra.mxu0 %v2347
    %v2762 = vpop.f32.mrf.mxu0
    %v2763 = vadd.f32 %v2750, %v2762
    %v2764 = vpop.f32.mrf.mxu0
    %2765 = vdwg.mxu0
    %2766 = vmatpush.bf16.msra.mxu0 %v2658
    %2767 = vmatpush.bf16.msra.mxu0 %v2656
    %2768 = vmatpush.bf16.msra.mxu0 %v2654
    %2769 = vmatpush.bf16.msra.mxu0 %v2652
    %2770 = vmatpush.bf16.msra.mxu0 %v2650
    %2771 = vmatpush.bf16.msra.mxu0 %v2648
    %2772 = vmatpush.bf16.msra.mxu0 %v2646
    %2773 = vmatpush.bf16.msra.mxu0 %v2644
    %2774 = vmatmul.bf16.gmra.mxu0 %v2348
    %v2775 = vpop.f32.mrf.mxu0
    %v2776 = vadd.f32 %v2763, %v2775
    %v2777 = vpop.f32.mrf.mxu0
    %2778 = vdwg.mxu0
    %2779 = vmatpush.bf16.msra.mxu0 %v2674
    %2780 = vmatpush.bf16.msra.mxu0 %v2672
    %2781 = vmatpush.bf16.msra.mxu0 %v2670
    %2782 = vmatpush.bf16.msra.mxu0 %v2668
    %2783 = vmatpush.bf16.msra.mxu0 %v2666
    %2784 = vmatpush.bf16.msra.mxu0 %v2664
    %2785 = vmatpush.bf16.msra.mxu0 %v2662
    %2786 = vmatpush.bf16.msra.mxu0 %v2660
    %2787 = vmatmul.bf16.gmra.mxu0 %v2349
    %v2788 = vpop.f32.mrf.mxu0
    %v2789 = vadd.f32 %v2776, %v2788
    %v2790 = vpop.f32.mrf.mxu0
    %2791 = vdwg.mxu0
    %2792 = vmatpush.bf16.msra.mxu0 %v2627
    %2793 = vmatpush.bf16.msra.mxu0 %v2625
    %2794 = vmatpush.bf16.msra.mxu0 %v2623
    %2795 = vmatpush.bf16.msra.mxu0 %v2621
    %2796 = vmatpush.bf16.msra.mxu0 %v2619
    %2797 = vmatpush.bf16.msra.mxu0 %v2617
    %2798 = vmatpush.bf16.msra.mxu0 %v2615
    %2799 = vmatpush.bf16.msra.mxu0 %v2613
    %2800 = vmatmul.bf16.gmra.mxu0 %v2346
    %v2801 = vpop.f32.mrf.mxu0
    %v2802 = vadd.f32 %v2417, %v2801
    %v2803 = vpop.f32.mrf.mxu0
    %2804 = vdwg.mxu0
    %2805 = vmatpush.bf16.msra.mxu0 %v2643
    %2806 = vmatpush.bf16.msra.mxu0 %v2641
    %2807 = vmatpush.bf16.msra.mxu0 %v2639
    %2808 = vmatpush.bf16.msra.mxu0 %v2637
    %2809 = vmatpush.bf16.msra.mxu0 %v2635
    %2810 = vmatpush.bf16.msra.mxu0 %v2633
    %2811 = vmatpush.bf16.msra.mxu0 %v2631
    %2812 = vmatpush.bf16.msra.mxu0 %v2629
    %2813 = vmatmul.bf16.gmra.mxu0 %v2347
    %v2814 = vpop.f32.mrf.mxu0
    %v2815 = vadd.f32 %v2802, %v2814
    %v2816 = vpop.f32.mrf.mxu0
    %2817 = vdwg.mxu0
    %2818 = vmatpush.bf16.msra.mxu0 %v2659
    %2819 = vmatpush.bf16.msra.mxu0 %v2657
    %2820 = vmatpush.bf16.msra.mxu0 %v2655
    %2821 = vmatpush.bf16.msra.mxu0 %v2653
    %2822 = vmatpush.bf16.msra.mxu0 %v2651
    %2823 = vmatpush.bf16.msra.mxu0 %v2649
    %2824 = vmatpush.bf16.msra.mxu0 %v2647
    %2825 = vmatpush.bf16.msra.mxu0 %v2645
    %2826 = vmatmul.bf16.gmra.mxu0 %v2348
    %v2827 = vpop.f32.mrf.mxu0
    %v2828 = vadd.f32 %v2815, %v2827
    %v2829 = vpop.f32.mrf.mxu0
    %2830 = vdwg.mxu0
    %2831 = vmatpush.bf16.msra.mxu0 %v2675
    %2832 = vmatpush.bf16.msra.mxu0 %v2673
    %2833 = vmatpush.bf16.msra.mxu0 %v2671
    %2834 = vmatpush.bf16.msra.mxu0 %v2669
    %2835 = vmatpush.bf16.msra.mxu0 %v2667
    %2836 = vmatpush.bf16.msra.mxu0 %v2665
    %2837 = vmatpush.bf16.msra.mxu0 %v2663
    %2838 = vmatpush.bf16.msra.mxu0 %v2661
    %2839 = vmatmul.bf16.gmra.mxu0 %v2349
    %v2840 = vpop.f32.mrf.mxu0
    %v2841 = vadd.f32 %v2828, %v2840
    %v2842 = vpop.f32.mrf.mxu0
    %2843 = vdwg.mxu0
    %vm2844 = vcmp.gt.f32.partialorder %v2789, 0.0
    %vm2845 = vcmp.gt.f32.partialorder %v2841, 0.0
    %v2846 = vmul.f32 %v2789, 0.01
    %v2847 = vmul.f32 %v2841, 0.01
    %v2848 = vsel %vm2844, %v2789, %v2846
    %v2849 = vsel %vm2845, %v2841, %v2847
    %v2850 = vpack.c.bf16 %v2848, %v2848
    %v2851 = vpack.c.bf16 %v2849, %v2849
    %v2852 = vld [vmem:[#allocation7] sm:$0xf]
    %v2853 = vld [vmem:[#allocation7 + $0x4] sm:$0xf]
    %v2854 = vld [vmem:[#allocation7 + $0x8] sm:$0xf]
    %v2855 = vld [vmem:[#allocation7 + $0xc] sm:$0xf]
    %v2856 = vld [vmem:[#allocation7 + $0x10] sm:$0xf]
    %v2857 = vld [vmem:[#allocation7 + $0x14] sm:$0xf]
    %v2858 = vld [vmem:[#allocation7 + $0x18] sm:$0xf]
    %v2859 = vld [vmem:[#allocation7 + $0x1c] sm:$0xf]
    %v2860 = vld [vmem:[#allocation7 + $0x20] sm:$0xf]
    %v2861 = vld [vmem:[#allocation7 + $0x24] sm:$0xf]
    %v2862 = vld [vmem:[#allocation7 + $0x28] sm:$0xf]
    %v2863 = vld [vmem:[#allocation7 + $0x2c] sm:$0xf]
    %v2864 = vld [vmem:[#allocation7 + $0x30] sm:$0xf]
    %v2865 = vld [vmem:[#allocation7 + $0x34] sm:$0xf]
    %v2866 = vld [vmem:[#allocation7 + $0x38] sm:$0xf]
    %v2867 = vld [vmem:[#allocation7 + $0x3c] sm:$0xf]
    %v2868 = vld [vmem:[#allocation7 + $0x40] sm:$0xf]
    %v2869 = vld [vmem:[#allocation7 + $0x44] sm:$0xf]
    %v2870 = vld [vmem:[#allocation7 + $0x48] sm:$0xf]
    %v2871 = vld [vmem:[#allocation7 + $0x4c] sm:$0xf]
    %v2872 = vld [vmem:[#allocation7 + $0x50] sm:$0xf]
    %v2873 = vld [vmem:[#allocation7 + $0x54] sm:$0xf]
    %v2874 = vld [vmem:[#allocation7 + $0x58] sm:$0xf]
    %v2875 = vld [vmem:[#allocation7 + $0x5c] sm:$0xf]
    %v2876 = vld [vmem:[#allocation7 + $0x60] sm:$0xf]
    %v2877 = vld [vmem:[#allocation7 + $0x64] sm:$0xf]
    %v2878 = vld [vmem:[#allocation7 + $0x68] sm:$0xf]
    %v2879 = vld [vmem:[#allocation7 + $0x6c] sm:$0xf]
    %v2880 = vld [vmem:[#allocation7 + $0x70] sm:$0xf]
    %v2881 = vld [vmem:[#allocation7 + $0x74] sm:$0xf]
    %v2882 = vld [vmem:[#allocation7 + $0x78] sm:$0xf]
    %v2883 = vld [vmem:[#allocation7 + $0x7c] sm:$0xf]
    %v2884 = vld [vmem:[%s8] sm:$0x1]
    %v2886 = vperm.slane %v2884, 0
    %v2920 = vunpack.c.l.b16 %v2852
    %v2921 = vunpack.c.l.b16 %v2853
    %v2922 = vunpack.c.l.b16 %v2854
    %v2923 = vunpack.c.l.b16 %v2855
    %v2924 = vunpack.c.l.b16 %v2856
    %v2925 = vunpack.c.l.b16 %v2857
    %v2926 = vunpack.c.l.b16 %v2858
    %v2927 = vunpack.c.l.b16 %v2859
    %v2928 = vunpack.c.l.b16 %v2860
    %v2929 = vunpack.c.l.b16 %v2861
    %v2930 = vunpack.c.l.b16 %v2862
    %v2931 = vunpack.c.l.b16 %v2863
    %v2932 = vunpack.c.l.b16 %v2864
    %v2933 = vunpack.c.l.b16 %v2865
    %v2934 = vunpack.c.l.b16 %v2866
    %v2935 = vunpack.c.l.b16 %v2867
    %v2936 = vunpack.c.l.b16 %v2868
    %v2937 = vunpack.c.l.b16 %v2869
    %v2938 = vunpack.c.l.b16 %v2870
    %v2939 = vunpack.c.l.b16 %v2871
    %v2940 = vunpack.c.l.b16 %v2872
    %v2941 = vunpack.c.l.b16 %v2873
    %v2942 = vunpack.c.l.b16 %v2874
    %v2943 = vunpack.c.l.b16 %v2875
    %v2944 = vunpack.c.l.b16 %v2876
    %v2945 = vunpack.c.l.b16 %v2877
    %v2946 = vunpack.c.l.b16 %v2878
    %v2947 = vunpack.c.l.b16 %v2879
    %v2948 = vunpack.c.l.b16 %v2880
    %v2949 = vunpack.c.l.b16 %v2881
    %v2950 = vunpack.c.l.b16 %v2882
    %v2951 = vunpack.c.l.b16 %v2883
    %v2952 = vpack.c.b16 %v2921, %v2920
    %v2953 = vpack.c.b16 %v2923, %v2922
    %v2954 = vpack.c.b16 %v2925, %v2924
    %v2955 = vpack.c.b16 %v2927, %v2926
    %v2956 = vpack.c.b16 %v2929, %v2928
    %v2957 = vpack.c.b16 %v2931, %v2930
    %v2958 = vpack.c.b16 %v2933, %v2932
    %v2959 = vpack.c.b16 %v2935, %v2934
    %v2960 = vpack.c.b16 %v2937, %v2936
    %v2961 = vpack.c.b16 %v2939, %v2938
    %v2962 = vpack.c.b16 %v2941, %v2940
    %v2963 = vpack.c.b16 %v2943, %v2942
    %v2964 = vpack.c.b16 %v2945, %v2944
    %v2965 = vpack.c.b16 %v2947, %v2946
    %v2966 = vpack.c.b16 %v2949, %v2948
    %v2967 = vpack.c.b16 %v2951, %v2950
    %2984 = vmatpush.bf16.msra.mxu0 %v2959
    %2985 = vmatpush.bf16.msra.mxu0 %v2958
    %2986 = vmatpush.bf16.msra.mxu0 %v2957
    %2987 = vmatpush.bf16.msra.mxu0 %v2956
    %2988 = vmatpush.bf16.msra.mxu0 %v2955
    %2989 = vmatpush.bf16.msra.mxu0 %v2954
    %2990 = vmatpush.bf16.msra.mxu0 %v2953
    %2991 = vmatpush.bf16.msra.mxu0 %v2952
    %2992 = vmatmul.bf16.gmra.mxu0 %v2850
    %v2993 = vpop.f32.mrf.mxu0
    %v2994 = vadd.f32 %v2886, %v2993
    %v2995 = vpop.f32.mrf.mxu0
    %2996 = vdwg.mxu0
    %2997 = vmatpush.bf16.msra.mxu0 %v2967
    %2998 = vmatpush.bf16.msra.mxu0 %v2966
    %2999 = vmatpush.bf16.msra.mxu0 %v2965
    %3000 = vmatpush.bf16.msra.mxu0 %v2964
    %3001 = vmatpush.bf16.msra.mxu0 %v2963
    %3002 = vmatpush.bf16.msra.mxu0 %v2962
    %3003 = vmatpush.bf16.msra.mxu0 %v2961
    %3004 = vmatpush.bf16.msra.mxu0 %v2960
    %3005 = vmatmul.bf16.gmra.mxu0 %v2851
    %v3006 = vpop.f32.mrf.mxu0
    %v3007 = vadd.f32 %v2994, %v3006
    %v3008 = vpop.f32.mrf.mxu0
    %3009 = vdwg.mxu0
    %vm3010 = vcmp.gt.f32.partialorder %v3007, 0.0
    %v3011 = vmul.f32 %v3007, 0.01
    %v3012 = vsel %vm3010, %v3007, %v3011
    %v3013 = vpack.c.bf16 %v3012, %v3012
    %v3014 = vld [vmem:[#allocation9] sm:$0xf]
    %v3015 = vld [vmem:[#allocation9 + $0x4] sm:$0xf]
    %v3016 = vld [vmem:[#allocation9 + $0x8] sm:$0xf]
    %v3017 = vld [vmem:[#allocation9 + $0xc] sm:$0xf]
    %v3018 = vld [vmem:[#allocation9 + $0x10] sm:$0xf]
    %v3019 = vld [vmem:[#allocation9 + $0x14] sm:$0xf]
    %v3020 = vld [vmem:[#allocation9 + $0x18] sm:$0xf]
    %v3021 = vld [vmem:[#allocation9 + $0x1c] sm:$0xf]
    %v3022 = vld [vmem:[#allocation9 + $0x20] sm:$0xf]
    %v3023 = vld [vmem:[#allocation9 + $0x24] sm:$0xf]
    %v3024 = vld [vmem:[#allocation9 + $0x28] sm:$0xf]
    %v3025 = vld [vmem:[#allocation9 + $0x2c] sm:$0xf]
    %v3026 = vld [vmem:[#allocation9 + $0x30] sm:$0xf]
    %v3027 = vld [vmem:[#allocation9 + $0x34] sm:$0xf]
    %v3028 = vld [vmem:[#allocation9 + $0x38] sm:$0xf]
    %v3029 = vld [vmem:[#allocation9 + $0x3c] sm:$0xf]
    %v3030 = vld [vmem:[%s10] sm:$0x1]
    %v3032 = vperm.slane %v3030, 0
    %v3050 = vunpack.c.l.b16 %v3014
    %v3051 = vunpack.c.l.b16 %v3015
    %v3052 = vunpack.c.l.b16 %v3016
    %v3053 = vunpack.c.l.b16 %v3017
    %v3054 = vunpack.c.l.b16 %v3018
    %v3055 = vunpack.c.l.b16 %v3019
    %v3056 = vunpack.c.l.b16 %v3020
    %v3057 = vunpack.c.l.b16 %v3021
    %v3058 = vunpack.c.l.b16 %v3022
    %v3059 = vunpack.c.l.b16 %v3023
    %v3060 = vunpack.c.l.b16 %v3024
    %v3061 = vunpack.c.l.b16 %v3025
    %v3062 = vunpack.c.l.b16 %v3026
    %v3063 = vunpack.c.l.b16 %v3027
    %v3064 = vunpack.c.l.b16 %v3028
    %v3065 = vunpack.c.l.b16 %v3029
    %v3066 = vpack.c.b16 %v3051, %v3050
    %v3067 = vpack.c.b16 %v3053, %v3052
    %v3068 = vpack.c.b16 %v3055, %v3054
    %v3069 = vpack.c.b16 %v3057, %v3056
    %v3070 = vpack.c.b16 %v3059, %v3058
    %v3071 = vpack.c.b16 %v3061, %v3060
    %v3072 = vpack.c.b16 %v3063, %v3062
    %v3073 = vpack.c.b16 %v3065, %v3064
    %3082 = vmatpush.bf16.msra.mxu0 %v3073
    %3083 = vmatpush.bf16.msra.mxu0 %v3072
    %3084 = vmatpush.bf16.msra.mxu0 %v3071
    %3085 = vmatpush.bf16.msra.mxu0 %v3070
    %3086 = vmatpush.bf16.msra.mxu0 %v3069
    %3087 = vmatpush.bf16.msra.mxu0 %v3068
    %3088 = vmatpush.bf16.msra.mxu0 %v3067
    %3089 = vmatpush.bf16.msra.mxu0 %v3066
    %3090 = vmatmul.bf16.gmra.mxu0 %v3013
    %v3091 = vpop.f32.mrf.mxu0
    %v3092 = vadd.f32 %v3032, %v3091
    %v3093 = vpop.f32.mrf.mxu0
    %3094 = vdwg.mxu0
    %3095 = vst [vmem:[%s11] sm:$0xff] %v3092
    // Predicated region
    $region66: #{actor_forward.1} parent=1 // pred_check
      _
    $region67: #{actor_forward.1} parent=1 // pred_check_branch
      %3097 = sbr.rel (0) target = $region69
    $region68: #{actor_forward.1} parent=1 // pred_region
      _
    $region69: #{actor_forward.1} parent=1 // pred_fallthru
      _
    // Predicated region
    $region70: #{actor_forward.1} parent=1 // pred_check
      _
    $region71: #{actor_forward.1} parent=1 // pred_check_branch
      %3099 = sbr.rel (0) target = $region73
    $region72: #{actor_forward.1} parent=1 // pred_region
      _
    $region73: #{actor_forward.1} parent=1 // pred_fallthru
      _
    %3100 = vsyncpa [#allocation3], 1
    %3101 = vsyncpa [#allocation5], 1
    %3102 = vsyncpa [#allocation8], 1

</llo_original>
